<compile_context>
chip_gen: v6e
topology: v6e:2x2x1
jax: 0.10.0
libtpu: 0.0.40
codegen_flags: <defaults>
</compile_context>

<pallas_src>
import jax
import jax.numpy as jnp
from jax.experimental import pallas as pl
from jax.experimental.pallas import tpu as pltpu

HIDDEN_LAYER = 16
LAYER1_SIZE = 10
OUTPUT_SIZE = 1
VECTOR_DIM = 20


def lstm_mlp_kernel(emb_ref, wih_ref, whh_ref, bias_ref,
                    w1_ref, b1_ref, w2_ref, b2_ref, out_ref):
    # emb_ref : (D, T*B)   embedded tokens, column index = t*B + b (batch on lanes)
    # wih_ref : (4H, D)    input->gates weights   (PyTorch orientation, gate order i,f,g,o)
    # whh_ref : (4H, H)    hidden->gates weights  (PyTorch orientation)
    # bias_ref: (4H, 1)    b_ih + b_hh (column vector, broadcast over batch lanes)
    # w1_ref  : (L1, H), b1_ref: (L1, 1)
    # w2_ref  : (1, L1),  b2_ref: (1, 1)
    # out_ref : (T, B)     y_pred[t, b] (wrapper transposes to (B, T))
    T, B = out_ref.shape
    H = whh_ref.shape[1]

    whh = whh_ref[...]
    w1 = w1_ref[...]
    b1 = b1_ref[...]
    w2 = w2_ref[...]
    b2 = b2_ref[...]

    # --- Hoisted input projection: ONE well-shaped MXU matmul for all T steps.
    gx = (jnp.dot(wih_ref[...], emb_ref[...],
                  preferred_element_type=jnp.float32)
          + bias_ref[...])                                    # (4H, T*B)

    h = jnp.zeros((H, B), jnp.float32)
    c = jnp.zeros((H, B), jnp.float32)

    # --- Fully unrolled recurrence (T is static).  Batch sits on the lane
    # axis, so gate splits below are sublane slices at multiples of 16.
    for t in range(T):
        gates = (jnp.dot(whh, h, preferred_element_type=jnp.float32)
                 + gx[:, t * B:(t + 1) * B])                  # (4H, B)
        i = jax.nn.sigmoid(gates[0 * H:1 * H, :])
        f = jax.nn.sigmoid(gates[1 * H:2 * H, :])
        g = jnp.tanh(gates[2 * H:3 * H, :])
        o = jax.nn.sigmoid(gates[3 * H:4 * H, :])
        c = f * c + i * g
        h = o * jnp.tanh(c)

        # --- Fused MLP head (layer1 + sigmoid, layer2, final sigmoid).
        a = jax.nn.sigmoid(
            jnp.dot(w1, h, preferred_element_type=jnp.float32) + b1)   # (L1, B)
        y = jax.nn.sigmoid(
            jnp.dot(w2, a, preferred_element_type=jnp.float32) + b2)   # (1, B)
        out_ref[t:t + 1, :] = y


def init_params(key, vocab_size,
                vector_dim=VECTOR_DIM, hidden_layer=HIDDEN_LAYER,
                layer1_size=LAYER1_SIZE, output_size=OUTPUT_SIZE):
    ks = jax.random.split(key, 9)
    emb = jax.random.normal(ks[0], (vocab_size, vector_dim), jnp.float32)
    emb = emb.at[0].set(0.0)                                  # padding_idx=0 (inference)

    s = 1.0 / jnp.sqrt(jnp.float32(hidden_layer))
    wih = jax.random.uniform(ks[1], (4 * hidden_layer, vector_dim), minval=-s, maxval=s)
    whh = jax.random.uniform(ks[2], (4 * hidden_layer, hidden_layer), minval=-s, maxval=s)
    bih = jax.random.uniform(ks[3], (4 * hidden_layer,), minval=-s, maxval=s)
    bhh = jax.random.uniform(ks[4], (4 * hidden_layer,), minval=-s, maxval=s)

    s1 = 1.0 / jnp.sqrt(jnp.float32(hidden_layer))
    w1 = jax.random.uniform(ks[5], (layer1_size, hidden_layer), minval=-s1, maxval=s1)
    b1 = jax.random.uniform(ks[6], (layer1_size,), minval=-s1, maxval=s1)
    s2 = 1.0 / jnp.sqrt(jnp.float32(layer1_size))
    w2 = jax.random.uniform(ks[7], (output_size, layer1_size), minval=-s2, maxval=s2)
    b2 = jax.random.uniform(ks[8], (output_size,), minval=-s2, maxval=s2)

    # Pack for the batch-on-lanes kernel: weights keep their native PyTorch
    # orientation; biases become column vectors; the embedding table is
    # pre-transposed once so the per-call gather lands directly in (D, T*B).
    return {
        "embedding_t": emb.T.astype(jnp.float32),             # (D, V), col 0 is zero
        "wih": wih.astype(jnp.float32),                       # (4H, D)
        "whh": whh.astype(jnp.float32),                       # (4H, H)
        "bias": (bih + bhh).reshape(-1, 1).astype(jnp.float32),   # (4H, 1)
        "w1": w1.astype(jnp.float32),                         # (L1, H)
        "b1": b1.reshape(-1, 1).astype(jnp.float32),          # (L1, 1)
        "w2": w2.astype(jnp.float32),                         # (1, L1)
        "b2": b2.reshape(-1, 1).astype(jnp.float32),          # (1, 1)
    }


def model_forward(params, x_tokens):
    """x_tokens: (B, T) int32 token ids.  Returns sigmoid(y_pred) of shape (B, T)."""
    B, T = x_tokens.shape

    # Gather the embedding directly in the kernel layout (D, T*B) with
    # column index = t*B + b — no activation-sized transpose in the glue.
    ids = x_tokens.T.reshape(-1)                              # (T*B,)
    emb = params["embedding_t"][:, ids]                       # (D, T*B) f32

    vmem = pl.BlockSpec(memory_space=pltpu.MemorySpace.VMEM)
    out = pl.pallas_call(
        lstm_mlp_kernel,
        out_shape=jax.ShapeDtypeStruct((T, B), jnp.float32),
        in_specs=[vmem] * 8,
        out_specs=vmem,
    )(emb, params["wih"], params["whh"], params["bias"],
      params["w1"], params["b1"], params["w2"], params["b2"])

    return out.T                                              # (B, T), matches torch squeeze(-1)


if __name__ == "__main__":
    key = jax.random.PRNGKey(0)
    vocab_size = 30
    B, T = 2, 8

    params = init_params(key, vocab_size)
    kx = jax.random.fold_in(key, 123)
    x = jax.random.randint(kx, (B, T), 0, vocab_size, dtype=jnp.int32)

    y_pred = model_forward(params, x)
    jax.block_until_ready(y_pred)
    assert y_pred.shape == (B, T)
    assert bool(jnp.all((y_pred >= 0.0) & (y_pred <= 1.0)))
    print("KERNEL_OK")
</pallas_src>

<mosaic_0001>
module attributes {stable_mosaic.version = 11 : i64} {
  func.func @lstm_mlp_kernel(%arg0: memref<20x16xf32, #tpu.memory_space<vmem>>, %arg1: memref<64x20xf32, #tpu.memory_space<vmem>>, %arg2: memref<64x16xf32, #tpu.memory_space<vmem>>, %arg3: memref<64x1xf32, #tpu.memory_space<vmem>>, %arg4: memref<10x16xf32, #tpu.memory_space<vmem>>, %arg5: memref<10x1xf32, #tpu.memory_space<vmem>>, %arg6: memref<1x10xf32, #tpu.memory_space<vmem>>, %arg7: memref<1x1xf32, #tpu.memory_space<vmem>>, %arg8: memref<8x2xf32, #tpu.memory_space<vmem>>) attributes {dimension_semantics = [], scalar_prefetch = 0 : i64, scratch_operands = 0 : i64, tpu.core_type = #tpu.core_type<tc>} {
    %c0 = arith.constant 0 : index
    %c0_0 = arith.constant 0 : index
    %0 = vector.load %arg2[%c0, %c0_0] : memref<64x16xf32, #tpu.memory_space<vmem>>, vector<64x16xf32>
    %c0_1 = arith.constant 0 : index
    %c0_2 = arith.constant 0 : index
    %1 = vector.load %arg4[%c0_1, %c0_2] : memref<10x16xf32, #tpu.memory_space<vmem>>, vector<10x16xf32>
    %c0_3 = arith.constant 0 : index
    %c0_4 = arith.constant 0 : index
    %2 = vector.load %arg5[%c0_3, %c0_4] : memref<10x1xf32, #tpu.memory_space<vmem>>, vector<10x1xf32>
    %c0_5 = arith.constant 0 : index
    %c0_6 = arith.constant 0 : index
    %3 = vector.load %arg6[%c0_5, %c0_6] : memref<1x10xf32, #tpu.memory_space<vmem>>, vector<1x10xf32>
    %c0_7 = arith.constant 0 : index
    %c0_8 = arith.constant 0 : index
    %4 = vector.load %arg7[%c0_7, %c0_8] : memref<1x1xf32, #tpu.memory_space<vmem>>, vector<1x1xf32>
    %c0_9 = arith.constant 0 : index
    %c0_10 = arith.constant 0 : index
    %5 = vector.load %arg1[%c0_9, %c0_10] : memref<64x20xf32, #tpu.memory_space<vmem>>, vector<64x20xf32>
    %c0_11 = arith.constant 0 : index
    %c0_12 = arith.constant 0 : index
    %6 = vector.load %arg0[%c0_11, %c0_12] : memref<20x16xf32, #tpu.memory_space<vmem>>, vector<20x16xf32>
    %cst = arith.constant dense<0.000000e+00> : vector<64x16xf32>
    %7 = tpu.matmul %5, %6, %cst {dimension_numbers = #tpu.dot_dimension_numbers<[1], [0], [0], [1], [0, 0, 1, 1], [], []>} : vector<64x20xf32>, vector<20x16xf32>, vector<64x16xf32> -> vector<64x16xf32>
    %c0_13 = arith.constant 0 : index
    %c0_14 = arith.constant 0 : index
    %8 = vector.load %arg3[%c0_13, %c0_14] : memref<64x1xf32, #tpu.memory_space<vmem>>, vector<64x1xf32>
    %9 = vector.broadcast %8 : vector<64x1xf32> to vector<64x16xf32>
    %10 = arith.addf %7, %9 : vector<64x16xf32>
    %cst_15 = arith.constant 0.000000e+00 : f32
    %11 = vector.broadcast %cst_15 : f32 to vector<16x2xf32>
    %cst_16 = arith.constant 0.000000e+00 : f32
    %12 = vector.broadcast %cst_16 : f32 to vector<16x2xf32>
    %cst_17 = arith.constant dense<0.000000e+00> : vector<64x2xf32>
    %13 = tpu.matmul %0, %11, %cst_17 {dimension_numbers = #tpu.dot_dimension_numbers<[1], [0], [0], [1], [0, 0, 1, 1], [], []>} : vector<64x16xf32>, vector<16x2xf32>, vector<64x2xf32> -> vector<64x2xf32>
    %14 = vector.extract_strided_slice %10 {offsets = [0, 0], sizes = [64, 2], strides = [1, 1]} : vector<64x16xf32> to vector<64x2xf32>
    %15 = arith.addf %13, %14 : vector<64x2xf32>
    %16 = vector.extract_strided_slice %15 {offsets = [0, 0], sizes = [16, 2], strides = [1, 1]} : vector<64x2xf32> to vector<16x2xf32>
    %17 = arith.negf %16 : vector<16x2xf32>
    %18 = math.exp %17 : vector<16x2xf32>
    %cst_18 = arith.constant 1.000000e+00 : f32
    %19 = vector.broadcast %cst_18 : f32 to vector<16x2xf32>
    %20 = arith.addf %19, %18 : vector<16x2xf32>
    %21 = arith.divf %19, %20 : vector<16x2xf32>
    %22 = vector.extract_strided_slice %15 {offsets = [16, 0], sizes = [16, 2], strides = [1, 1]} : vector<64x2xf32> to vector<16x2xf32>
    %23 = arith.negf %22 : vector<16x2xf32>
    %24 = math.exp %23 : vector<16x2xf32>
    %cst_19 = arith.constant 1.000000e+00 : f32
    %25 = vector.broadcast %cst_19 : f32 to vector<16x2xf32>
    %26 = arith.addf %25, %24 : vector<16x2xf32>
    %27 = arith.divf %25, %26 : vector<16x2xf32>
    %28 = vector.extract_strided_slice %15 {offsets = [32, 0], sizes = [16, 2], strides = [1, 1]} : vector<64x2xf32> to vector<16x2xf32>
    %29 = math.tanh %28 : vector<16x2xf32>
    %30 = vector.extract_strided_slice %15 {offsets = [48, 0], sizes = [16, 2], strides = [1, 1]} : vector<64x2xf32> to vector<16x2xf32>
    %31 = arith.negf %30 : vector<16x2xf32>
    %32 = math.exp %31 : vector<16x2xf32>
    %cst_20 = arith.constant 1.000000e+00 : f32
    %33 = vector.broadcast %cst_20 : f32 to vector<16x2xf32>
    %34 = arith.addf %33, %32 : vector<16x2xf32>
    %35 = arith.divf %33, %34 : vector<16x2xf32>
    %36 = arith.mulf %27, %12 : vector<16x2xf32>
    %37 = arith.mulf %21, %29 : vector<16x2xf32>
    %38 = arith.addf %36, %37 : vector<16x2xf32>
    %39 = math.tanh %38 : vector<16x2xf32>
    %40 = arith.mulf %35, %39 : vector<16x2xf32>
    %cst_21 = arith.constant dense<0.000000e+00> : vector<10x2xf32>
    %41 = tpu.matmul %1, %40, %cst_21 {dimension_numbers = #tpu.dot_dimension_numbers<[1], [0], [0], [1], [0, 0, 1, 1], [], []>} : vector<10x16xf32>, vector<16x2xf32>, vector<10x2xf32> -> vector<10x2xf32>
    %42 = vector.broadcast %2 : vector<10x1xf32> to vector<10x2xf32>
    %43 = arith.addf %41, %42 : vector<10x2xf32>
    %44 = arith.negf %43 : vector<10x2xf32>
    %45 = math.exp %44 : vector<10x2xf32>
    %cst_22 = arith.constant 1.000000e+00 : f32
    %46 = vector.broadcast %cst_22 : f32 to vector<10x2xf32>
    %47 = arith.addf %46, %45 : vector<10x2xf32>
    %48 = arith.divf %46, %47 : vector<10x2xf32>
    %cst_23 = arith.constant dense<0.000000e+00> : vector<1x2xf32>
    %49 = tpu.matmul %3, %48, %cst_23 {dimension_numbers = #tpu.dot_dimension_numbers<[1], [0], [0], [1], [0, 0, 1, 1], [], []>} : vector<1x10xf32>, vector<10x2xf32>, vector<1x2xf32> -> vector<1x2xf32>
    %50 = vector.broadcast %4 : vector<1x1xf32> to vector<1x2xf32>
    %51 = arith.addf %49, %50 : vector<1x2xf32>
    %52 = arith.negf %51 : vector<1x2xf32>
    %53 = math.exp %52 : vector<1x2xf32>
    %cst_24 = arith.constant 1.000000e+00 : f32
    %54 = vector.broadcast %cst_24 : f32 to vector<1x2xf32>
    %55 = arith.addf %54, %53 : vector<1x2xf32>
    %56 = arith.divf %54, %55 : vector<1x2xf32>
    %c0_25 = arith.constant 0 : index
    %c0_26 = arith.constant 0 : index
    %57 = vector.load %arg8[%c0_25, %c0_26] : memref<8x2xf32, #tpu.memory_space<vmem>>, vector<1x2xf32>
    tpu.vector_store %arg8[%c0_25, %c0_26], %56 {strides = array<i32>} : memref<8x2xf32, #tpu.memory_space<vmem>>, vector<1x2xf32>,
    %cst_27 = arith.constant dense<0.000000e+00> : vector<64x2xf32>
    %58 = tpu.matmul %0, %40, %cst_27 {dimension_numbers = #tpu.dot_dimension_numbers<[1], [0], [0], [1], [0, 0, 1, 1], [], []>} : vector<64x16xf32>, vector<16x2xf32>, vector<64x2xf32> -> vector<64x2xf32>
    %59 = vector.extract_strided_slice %10 {offsets = [0, 2], sizes = [64, 2], strides = [1, 1]} : vector<64x16xf32> to vector<64x2xf32>
    %60 = arith.addf %58, %59 : vector<64x2xf32>
    %61 = vector.extract_strided_slice %60 {offsets = [0, 0], sizes = [16, 2], strides = [1, 1]} : vector<64x2xf32> to vector<16x2xf32>
    %62 = arith.negf %61 : vector<16x2xf32>
    %63 = math.exp %62 : vector<16x2xf32>
    %cst_28 = arith.constant 1.000000e+00 : f32
    %64 = vector.broadcast %cst_28 : f32 to vector<16x2xf32>
    %65 = arith.addf %64, %63 : vector<16x2xf32>
    %66 = arith.divf %64, %65 : vector<16x2xf32>
    %67 = vector.extract_strided_slice %60 {offsets = [16, 0], sizes = [16, 2], strides = [1, 1]} : vector<64x2xf32> to vector<16x2xf32>
    %68 = arith.negf %67 : vector<16x2xf32>
    %69 = math.exp %68 : vector<16x2xf32>
    %cst_29 = arith.constant 1.000000e+00 : f32
    %70 = vector.broadcast %cst_29 : f32 to vector<16x2xf32>
    %71 = arith.addf %70, %69 : vector<16x2xf32>
    %72 = arith.divf %70, %71 : vector<16x2xf32>
    %73 = vector.extract_strided_slice %60 {offsets = [32, 0], sizes = [16, 2], strides = [1, 1]} : vector<64x2xf32> to vector<16x2xf32>
    %74 = math.tanh %73 : vector<16x2xf32>
    %75 = vector.extract_strided_slice %60 {offsets = [48, 0], sizes = [16, 2], strides = [1, 1]} : vector<64x2xf32> to vector<16x2xf32>
    %76 = arith.negf %75 : vector<16x2xf32>
    %77 = math.exp %76 : vector<16x2xf32>
    %cst_30 = arith.constant 1.000000e+00 : f32
    %78 = vector.broadcast %cst_30 : f32 to vector<16x2xf32>
    %79 = arith.addf %78, %77 : vector<16x2xf32>
    %80 = arith.divf %78, %79 : vector<16x2xf32>
    %81 = arith.mulf %72, %38 : vector<16x2xf32>
    %82 = arith.mulf %66, %74 : vector<16x2xf32>
    %83 = arith.addf %81, %82 : vector<16x2xf32>
    %84 = math.tanh %83 : vector<16x2xf32>
    %85 = arith.mulf %80, %84 : vector<16x2xf32>
    %cst_31 = arith.constant dense<0.000000e+00> : vector<10x2xf32>
    %86 = tpu.matmul %1, %85, %cst_31 {dimension_numbers = #tpu.dot_dimension_numbers<[1], [0], [0], [1], [0, 0, 1, 1], [], []>} : vector<10x16xf32>, vector<16x2xf32>, vector<10x2xf32> -> vector<10x2xf32>
    %87 = vector.broadcast %2 : vector<10x1xf32> to vector<10x2xf32>
    %88 = arith.addf %86, %87 : vector<10x2xf32>
    %89 = arith.negf %88 : vector<10x2xf32>
    %90 = math.exp %89 : vector<10x2xf32>
    %cst_32 = arith.constant 1.000000e+00 : f32
    %91 = vector.broadcast %cst_32 : f32 to vector<10x2xf32>
    %92 = arith.addf %91, %90 : vector<10x2xf32>
    %93 = arith.divf %91, %92 : vector<10x2xf32>
    %cst_33 = arith.constant dense<0.000000e+00> : vector<1x2xf32>
    %94 = tpu.matmul %3, %93, %cst_33 {dimension_numbers = #tpu.dot_dimension_numbers<[1], [0], [0], [1], [0, 0, 1, 1], [], []>} : vector<1x10xf32>, vector<10x2xf32>, vector<1x2xf32> -> vector<1x2xf32>
    %95 = vector.broadcast %4 : vector<1x1xf32> to vector<1x2xf32>
    %96 = arith.addf %94, %95 : vector<1x2xf32>
    %97 = arith.negf %96 : vector<1x2xf32>
    %98 = math.exp %97 : vector<1x2xf32>
    %cst_34 = arith.constant 1.000000e+00 : f32
    %99 = vector.broadcast %cst_34 : f32 to vector<1x2xf32>
    %100 = arith.addf %99, %98 : vector<1x2xf32>
    %101 = arith.divf %99, %100 : vector<1x2xf32>
    %c1 = arith.constant 1 : index
    %c0_35 = arith.constant 0 : index
    %102 = vector.load %arg8[%c1, %c0_35] : memref<8x2xf32, #tpu.memory_space<vmem>>, vector<1x2xf32>
    tpu.vector_store %arg8[%c1, %c0_35], %101 {strides = array<i32>} : memref<8x2xf32, #tpu.memory_space<vmem>>, vector<1x2xf32>,
    %cst_36 = arith.constant dense<0.000000e+00> : vector<64x2xf32>
    %103 = tpu.matmul %0, %85, %cst_36 {dimension_numbers = #tpu.dot_dimension_numbers<[1], [0], [0], [1], [0, 0, 1, 1], [], []>} : vector<64x16xf32>, vector<16x2xf32>, vector<64x2xf32> -> vector<64x2xf32>
    %104 = vector.extract_strided_slice %10 {offsets = [0, 4], sizes = [64, 2], strides = [1, 1]} : vector<64x16xf32> to vector<64x2xf32>
    %105 = arith.addf %103, %104 : vector<64x2xf32>
    %106 = vector.extract_strided_slice %105 {offsets = [0, 0], sizes = [16, 2], strides = [1, 1]} : vector<64x2xf32> to vector<16x2xf32>
    %107 = arith.negf %106 : vector<16x2xf32>
    %108 = math.exp %107 : vector<16x2xf32>
    %cst_37 = arith.constant 1.000000e+00 : f32
    %109 = vector.broadcast %cst_37 : f32 to vector<16x2xf32>
    %110 = arith.addf %109, %108 : vector<16x2xf32>
    %111 = arith.divf %109, %110 : vector<16x2xf32>
    %112 = vector.extract_strided_slice %105 {offsets = [16, 0], sizes = [16, 2], strides = [1, 1]} : vector<64x2xf32> to vector<16x2xf32>
    %113 = arith.negf %112 : vector<16x2xf32>
    %114 = math.exp %113 : vector<16x2xf32>
    %cst_38 = arith.constant 1.000000e+00 : f32
    %115 = vector.broadcast %cst_38 : f32 to vector<16x2xf32>
    %116 = arith.addf %115, %114 : vector<16x2xf32>
    %117 = arith.divf %115, %116 : vector<16x2xf32>
    %118 = vector.extract_strided_slice %105 {offsets = [32, 0], sizes = [16, 2], strides = [1, 1]} : vector<64x2xf32> to vector<16x2xf32>
    %119 = math.tanh %118 : vector<16x2xf32>
    %120 = vector.extract_strided_slice %105 {offsets = [48, 0], sizes = [16, 2], strides = [1, 1]} : vector<64x2xf32> to vector<16x2xf32>
    %121 = arith.negf %120 : vector<16x2xf32>
    %122 = math.exp %121 : vector<16x2xf32>
    %cst_39 = arith.constant 1.000000e+00 : f32
    %123 = vector.broadcast %cst_39 : f32 to vector<16x2xf32>
    %124 = arith.addf %123, %122 : vector<16x2xf32>
    %125 = arith.divf %123, %124 : vector<16x2xf32>
    %126 = arith.mulf %117, %83 : vector<16x2xf32>
    %127 = arith.mulf %111, %119 : vector<16x2xf32>
    %128 = arith.addf %126, %127 : vector<16x2xf32>
    %129 = math.tanh %128 : vector<16x2xf32>
    %130 = arith.mulf %125, %129 : vector<16x2xf32>
    %cst_40 = arith.constant dense<0.000000e+00> : vector<10x2xf32>
    %131 = tpu.matmul %1, %130, %cst_40 {dimension_numbers = #tpu.dot_dimension_numbers<[1], [0], [0], [1], [0, 0, 1, 1], [], []>} : vector<10x16xf32>, vector<16x2xf32>, vector<10x2xf32> -> vector<10x2xf32>
    %132 = vector.broadcast %2 : vector<10x1xf32> to vector<10x2xf32>
    %133 = arith.addf %131, %132 : vector<10x2xf32>
    %134 = arith.negf %133 : vector<10x2xf32>
    %135 = math.exp %134 : vector<10x2xf32>
    %cst_41 = arith.constant 1.000000e+00 : f32
    %136 = vector.broadcast %cst_41 : f32 to vector<10x2xf32>
    %137 = arith.addf %136, %135 : vector<10x2xf32>
    %138 = arith.divf %136, %137 : vector<10x2xf32>
    %cst_42 = arith.constant dense<0.000000e+00> : vector<1x2xf32>
    %139 = tpu.matmul %3, %138, %cst_42 {dimension_numbers = #tpu.dot_dimension_numbers<[1], [0], [0], [1], [0, 0, 1, 1], [], []>} : vector<1x10xf32>, vector<10x2xf32>, vector<1x2xf32> -> vector<1x2xf32>
    %140 = vector.broadcast %4 : vector<1x1xf32> to vector<1x2xf32>
    %141 = arith.addf %139, %140 : vector<1x2xf32>
    %142 = arith.negf %141 : vector<1x2xf32>
    %143 = math.exp %142 : vector<1x2xf32>
    %cst_43 = arith.constant 1.000000e+00 : f32
    %144 = vector.broadcast %cst_43 : f32 to vector<1x2xf32>
    %145 = arith.addf %144, %143 : vector<1x2xf32>
    %146 = arith.divf %144, %145 : vector<1x2xf32>
    %c2 = arith.constant 2 : index
    %c0_44 = arith.constant 0 : index
    %147 = vector.load %arg8[%c2, %c0_44] : memref<8x2xf32, #tpu.memory_space<vmem>>, vector<1x2xf32>
    tpu.vector_store %arg8[%c2, %c0_44], %146 {strides = array<i32>} : memref<8x2xf32, #tpu.memory_space<vmem>>, vector<1x2xf32>,
    %cst_45 = arith.constant dense<0.000000e+00> : vector<64x2xf32>
    %148 = tpu.matmul %0, %130, %cst_45 {dimension_numbers = #tpu.dot_dimension_numbers<[1], [0], [0], [1], [0, 0, 1, 1], [], []>} : vector<64x16xf32>, vector<16x2xf32>, vector<64x2xf32> -> vector<64x2xf32>
    %149 = vector.extract_strided_slice %10 {offsets = [0, 6], sizes = [64, 2], strides = [1, 1]} : vector<64x16xf32> to vector<64x2xf32>
    %150 = arith.addf %148, %149 : vector<64x2xf32>
    %151 = vector.extract_strided_slice %150 {offsets = [0, 0], sizes = [16, 2], strides = [1, 1]} : vector<64x2xf32> to vector<16x2xf32>
    %152 = arith.negf %151 : vector<16x2xf32>
    %153 = math.exp %152 : vector<16x2xf32>
    %cst_46 = arith.constant 1.000000e+00 : f32
    %154 = vector.broadcast %cst_46 : f32 to vector<16x2xf32>
    %155 = arith.addf %154, %153 : vector<16x2xf32>
    %156 = arith.divf %154, %155 : vector<16x2xf32>
    %157 = vector.extract_strided_slice %150 {offsets = [16, 0], sizes = [16, 2], strides = [1, 1]} : vector<64x2xf32> to vector<16x2xf32>
    %158 = arith.negf %157 : vector<16x2xf32>
    %159 = math.exp %158 : vector<16x2xf32>
    %cst_47 = arith.constant 1.000000e+00 : f32
    %160 = vector.broadcast %cst_47 : f32 to vector<16x2xf32>
    %161 = arith.addf %160, %159 : vector<16x2xf32>
    %162 = arith.divf %160, %161 : vector<16x2xf32>
    %163 = vector.extract_strided_slice %150 {offsets = [32, 0], sizes = [16, 2], strides = [1, 1]} : vector<64x2xf32> to vector<16x2xf32>
    %164 = math.tanh %163 : vector<16x2xf32>
    %165 = vector.extract_strided_slice %150 {offsets = [48, 0], sizes = [16, 2], strides = [1, 1]} : vector<64x2xf32> to vector<16x2xf32>
    %166 = arith.negf %165 : vector<16x2xf32>
    %167 = math.exp %166 : vector<16x2xf32>
    %cst_48 = arith.constant 1.000000e+00 : f32
    %168 = vector.broadcast %cst_48 : f32 to vector<16x2xf32>
    %169 = arith.addf %168, %167 : vector<16x2xf32>
    %170 = arith.divf %168, %169 : vector<16x2xf32>
    %171 = arith.mulf %162, %128 : vector<16x2xf32>
    %172 = arith.mulf %156, %164 : vector<16x2xf32>
    %173 = arith.addf %171, %172 : vector<16x2xf32>
    %174 = math.tanh %173 : vector<16x2xf32>
    %175 = arith.mulf %170, %174 : vector<16x2xf32>
    %cst_49 = arith.constant dense<0.000000e+00> : vector<10x2xf32>
    %176 = tpu.matmul %1, %175, %cst_49 {dimension_numbers = #tpu.dot_dimension_numbers<[1], [0], [0], [1], [0, 0, 1, 1], [], []>} : vector<10x16xf32>, vector<16x2xf32>, vector<10x2xf32> -> vector<10x2xf32>
    %177 = vector.broadcast %2 : vector<10x1xf32> to vector<10x2xf32>
    %178 = arith.addf %176, %177 : vector<10x2xf32>
    %179 = arith.negf %178 : vector<10x2xf32>
    %180 = math.exp %179 : vector<10x2xf32>
    %cst_50 = arith.constant 1.000000e+00 : f32
    %181 = vector.broadcast %cst_50 : f32 to vector<10x2xf32>
    %182 = arith.addf %181, %180 : vector<10x2xf32>
    %183 = arith.divf %181, %182 : vector<10x2xf32>
    %cst_51 = arith.constant dense<0.000000e+00> : vector<1x2xf32>
    %184 = tpu.matmul %3, %183, %cst_51 {dimension_numbers = #tpu.dot_dimension_numbers<[1], [0], [0], [1], [0, 0, 1, 1], [], []>} : vector<1x10xf32>, vector<10x2xf32>, vector<1x2xf32> -> vector<1x2xf32>
    %185 = vector.broadcast %4 : vector<1x1xf32> to vector<1x2xf32>
    %186 = arith.addf %184, %185 : vector<1x2xf32>
    %187 = arith.negf %186 : vector<1x2xf32>
    %188 = math.exp %187 : vector<1x2xf32>
    %cst_52 = arith.constant 1.000000e+00 : f32
    %189 = vector.broadcast %cst_52 : f32 to vector<1x2xf32>
    %190 = arith.addf %189, %188 : vector<1x2xf32>
    %191 = arith.divf %189, %190 : vector<1x2xf32>
    %c3 = arith.constant 3 : index
    %c0_53 = arith.constant 0 : index
    %192 = vector.load %arg8[%c3, %c0_53] : memref<8x2xf32, #tpu.memory_space<vmem>>, vector<1x2xf32>
    tpu.vector_store %arg8[%c3, %c0_53], %191 {strides = array<i32>} : memref<8x2xf32, #tpu.memory_space<vmem>>, vector<1x2xf32>,
    %cst_54 = arith.constant dense<0.000000e+00> : vector<64x2xf32>
    %193 = tpu.matmul %0, %175, %cst_54 {dimension_numbers = #tpu.dot_dimension_numbers<[1], [0], [0], [1], [0, 0, 1, 1], [], []>} : vector<64x16xf32>, vector<16x2xf32>, vector<64x2xf32> -> vector<64x2xf32>
    %194 = vector.extract_strided_slice %10 {offsets = [0, 8], sizes = [64, 2], strides = [1, 1]} : vector<64x16xf32> to vector<64x2xf32>
    %195 = arith.addf %193, %194 : vector<64x2xf32>
    %196 = vector.extract_strided_slice %195 {offsets = [0, 0], sizes = [16, 2], strides = [1, 1]} : vector<64x2xf32> to vector<16x2xf32>
    %197 = arith.negf %196 : vector<16x2xf32>
    %198 = math.exp %197 : vector<16x2xf32>
    %cst_55 = arith.constant 1.000000e+00 : f32
    %199 = vector.broadcast %cst_55 : f32 to vector<16x2xf32>
    %200 = arith.addf %199, %198 : vector<16x2xf32>
    %201 = arith.divf %199, %200 : vector<16x2xf32>
    %202 = vector.extract_strided_slice %195 {offsets = [16, 0], sizes = [16, 2], strides = [1, 1]} : vector<64x2xf32> to vector<16x2xf32>
    %203 = arith.negf %202 : vector<16x2xf32>
    %204 = math.exp %203 : vector<16x2xf32>
    %cst_56 = arith.constant 1.000000e+00 : f32
    %205 = vector.broadcast %cst_56 : f32 to vector<16x2xf32>
    %206 = arith.addf %205, %204 : vector<16x2xf32>
    %207 = arith.divf %205, %206 : vector<16x2xf32>
    %208 = vector.extract_strided_slice %195 {offsets = [32, 0], sizes = [16, 2], strides = [1, 1]} : vector<64x2xf32> to vector<16x2xf32>
    %209 = math.tanh %208 : vector<16x2xf32>
    %210 = vector.extract_strided_slice %195 {offsets = [48, 0], sizes = [16, 2], strides = [1, 1]} : vector<64x2xf32> to vector<16x2xf32>
    %211 = arith.negf %210 : vector<16x2xf32>
    %212 = math.exp %211 : vector<16x2xf32>
    %cst_57 = arith.constant 1.000000e+00 : f32
    %213 = vector.broadcast %cst_57 : f32 to vector<16x2xf32>
    %214 = arith.addf %213, %212 : vector<16x2xf32>
    %215 = arith.divf %213, %214 : vector<16x2xf32>
    %216 = arith.mulf %207, %173 : vector<16x2xf32>
    %217 = arith.mulf %201, %209 : vector<16x2xf32>
    %218 = arith.addf %216, %217 : vector<16x2xf32>
    %219 = math.tanh %218 : vector<16x2xf32>
    %220 = arith.mulf %215, %219 : vector<16x2xf32>
    %cst_58 = arith.constant dense<0.000000e+00> : vector<10x2xf32>
    %221 = tpu.matmul %1, %220, %cst_58 {dimension_numbers = #tpu.dot_dimension_numbers<[1], [0], [0], [1], [0, 0, 1, 1], [], []>} : vector<10x16xf32>, vector<16x2xf32>, vector<10x2xf32> -> vector<10x2xf32>
    %222 = vector.broadcast %2 : vector<10x1xf32> to vector<10x2xf32>
    %223 = arith.addf %221, %222 : vector<10x2xf32>
    %224 = arith.negf %223 : vector<10x2xf32>
    %225 = math.exp %224 : vector<10x2xf32>
    %cst_59 = arith.constant 1.000000e+00 : f32
    %226 = vector.broadcast %cst_59 : f32 to vector<10x2xf32>
    %227 = arith.addf %226, %225 : vector<10x2xf32>
    %228 = arith.divf %226, %227 : vector<10x2xf32>
    %cst_60 = arith.constant dense<0.000000e+00> : vector<1x2xf32>
    %229 = tpu.matmul %3, %228, %cst_60 {dimension_numbers = #tpu.dot_dimension_numbers<[1], [0], [0], [1], [0, 0, 1, 1], [], []>} : vector<1x10xf32>, vector<10x2xf32>, vector<1x2xf32> -> vector<1x2xf32>
    %230 = vector.broadcast %4 : vector<1x1xf32> to vector<1x2xf32>
    %231 = arith.addf %229, %230 : vector<1x2xf32>
    %232 = arith.negf %231 : vector<1x2xf32>
    %233 = math.exp %232 : vector<1x2xf32>
    %cst_61 = arith.constant 1.000000e+00 : f32
    %234 = vector.broadcast %cst_61 : f32 to vector<1x2xf32>
    %235 = arith.addf %234, %233 : vector<1x2xf32>
    %236 = arith.divf %234, %235 : vector<1x2xf32>
    %c4 = arith.constant 4 : index
    %c0_62 = arith.constant 0 : index
    %237 = vector.load %arg8[%c4, %c0_62] : memref<8x2xf32, #tpu.memory_space<vmem>>, vector<1x2xf32>
    tpu.vector_store %arg8[%c4, %c0_62], %236 {strides = array<i32>} : memref<8x2xf32, #tpu.memory_space<vmem>>, vector<1x2xf32>,
    %cst_63 = arith.constant dense<0.000000e+00> : vector<64x2xf32>
    %238 = tpu.matmul %0, %220, %cst_63 {dimension_numbers = #tpu.dot_dimension_numbers<[1], [0], [0], [1], [0, 0, 1, 1], [], []>} : vector<64x16xf32>, vector<16x2xf32>, vector<64x2xf32> -> vector<64x2xf32>
    %239 = vector.extract_strided_slice %10 {offsets = [0, 10], sizes = [64, 2], strides = [1, 1]} : vector<64x16xf32> to vector<64x2xf32>
    %240 = arith.addf %238, %239 : vector<64x2xf32>
    %241 = vector.extract_strided_slice %240 {offsets = [0, 0], sizes = [16, 2], strides = [1, 1]} : vector<64x2xf32> to vector<16x2xf32>
    %242 = arith.negf %241 : vector<16x2xf32>
    %243 = math.exp %242 : vector<16x2xf32>
    %cst_64 = arith.constant 1.000000e+00 : f32
    %244 = vector.broadcast %cst_64 : f32 to vector<16x2xf32>
    %245 = arith.addf %244, %243 : vector<16x2xf32>
    %246 = arith.divf %244, %245 : vector<16x2xf32>
    %247 = vector.extract_strided_slice %240 {offsets = [16, 0], sizes = [16, 2], strides = [1, 1]} : vector<64x2xf32> to vector<16x2xf32>
    %248 = arith.negf %247 : vector<16x2xf32>
    %249 = math.exp %248 : vector<16x2xf32>
    %cst_65 = arith.constant 1.000000e+00 : f32
    %250 = vector.broadcast %cst_65 : f32 to vector<16x2xf32>
    %251 = arith.addf %250, %249 : vector<16x2xf32>
    %252 = arith.divf %250, %251 : vector<16x2xf32>
    %253 = vector.extract_strided_slice %240 {offsets = [32, 0], sizes = [16, 2], strides = [1, 1]} : vector<64x2xf32> to vector<16x2xf32>
    %254 = math.tanh %253 : vector<16x2xf32>
    %255 = vector.extract_strided_slice %240 {offsets = [48, 0], sizes = [16, 2], strides = [1, 1]} : vector<64x2xf32> to vector<16x2xf32>
    %256 = arith.negf %255 : vector<16x2xf32>
    %257 = math.exp %256 : vector<16x2xf32>
    %cst_66 = arith.constant 1.000000e+00 : f32
    %258 = vector.broadcast %cst_66 : f32 to vector<16x2xf32>
    %259 = arith.addf %258, %257 : vector<16x2xf32>
    %260 = arith.divf %258, %259 : vector<16x2xf32>
    %261 = arith.mulf %252, %218 : vector<16x2xf32>
    %262 = arith.mulf %246, %254 : vector<16x2xf32>
    %263 = arith.addf %261, %262 : vector<16x2xf32>
    %264 = math.tanh %263 : vector<16x2xf32>
    %265 = arith.mulf %260, %264 : vector<16x2xf32>
    %cst_67 = arith.constant dense<0.000000e+00> : vector<10x2xf32>
    %266 = tpu.matmul %1, %265, %cst_67 {dimension_numbers = #tpu.dot_dimension_numbers<[1], [0], [0], [1], [0, 0, 1, 1], [], []>} : vector<10x16xf32>, vector<16x2xf32>, vector<10x2xf32> -> vector<10x2xf32>
    %267 = vector.broadcast %2 : vector<10x1xf32> to vector<10x2xf32>
    %268 = arith.addf %266, %267 : vector<10x2xf32>
    %269 = arith.negf %268 : vector<10x2xf32>
    %270 = math.exp %269 : vector<10x2xf32>
    %cst_68 = arith.constant 1.000000e+00 : f32
    %271 = vector.broadcast %cst_68 : f32 to vector<10x2xf32>
    %272 = arith.addf %271, %270 : vector<10x2xf32>
    %273 = arith.divf %271, %272 : vector<10x2xf32>
    %cst_69 = arith.constant dense<0.000000e+00> : vector<1x2xf32>
    %274 = tpu.matmul %3, %273, %cst_69 {dimension_numbers = #tpu.dot_dimension_numbers<[1], [0], [0], [1], [0, 0, 1, 1], [], []>} : vector<1x10xf32>, vector<10x2xf32>, vector<1x2xf32> -> vector<1x2xf32>
    %275 = vector.broadcast %4 : vector<1x1xf32> to vector<1x2xf32>
    %276 = arith.addf %274, %275 : vector<1x2xf32>
    %277 = arith.negf %276 : vector<1x2xf32>
    %278 = math.exp %277 : vector<1x2xf32>
    %cst_70 = arith.constant 1.000000e+00 : f32
    %279 = vector.broadcast %cst_70 : f32 to vector<1x2xf32>
    %280 = arith.addf %279, %278 : vector<1x2xf32>
    %281 = arith.divf %279, %280 : vector<1x2xf32>
    %c5 = arith.constant 5 : index
    %c0_71 = arith.constant 0 : index
    %282 = vector.load %arg8[%c5, %c0_71] : memref<8x2xf32, #tpu.memory_space<vmem>>, vector<1x2xf32>
    tpu.vector_store %arg8[%c5, %c0_71], %281 {strides = array<i32>} : memref<8x2xf32, #tpu.memory_space<vmem>>, vector<1x2xf32>,
    %cst_72 = arith.constant dense<0.000000e+00> : vector<64x2xf32>
    %283 = tpu.matmul %0, %265, %cst_72 {dimension_numbers = #tpu.dot_dimension_numbers<[1], [0], [0], [1], [0, 0, 1, 1], [], []>} : vector<64x16xf32>, vector<16x2xf32>, vector<64x2xf32> -> vector<64x2xf32>
    %284 = vector.extract_strided_slice %10 {offsets = [0, 12], sizes = [64, 2], strides = [1, 1]} : vector<64x16xf32> to vector<64x2xf32>
    %285 = arith.addf %283, %284 : vector<64x2xf32>
    %286 = vector.extract_strided_slice %285 {offsets = [0, 0], sizes = [16, 2], strides = [1, 1]} : vector<64x2xf32> to vector<16x2xf32>
    %287 = arith.negf %286 : vector<16x2xf32>
    %288 = math.exp %287 : vector<16x2xf32>
    %cst_73 = arith.constant 1.000000e+00 : f32
    %289 = vector.broadcast %cst_73 : f32 to vector<16x2xf32>
    %290 = arith.addf %289, %288 : vector<16x2xf32>
    %291 = arith.divf %289, %290 : vector<16x2xf32>
    %292 = vector.extract_strided_slice %285 {offsets = [16, 0], sizes = [16, 2], strides = [1, 1]} : vector<64x2xf32> to vector<16x2xf32>
    %293 = arith.negf %292 : vector<16x2xf32>
    %294 = math.exp %293 : vector<16x2xf32>
    %cst_74 = arith.constant 1.000000e+00 : f32
    %295 = vector.broadcast %cst_74 : f32 to vector<16x2xf32>
    %296 = arith.addf %295, %294 : vector<16x2xf32>
    %297 = arith.divf %295, %296 : vector<16x2xf32>
    %298 = vector.extract_strided_slice %285 {offsets = [32, 0], sizes = [16, 2], strides = [1, 1]} : vector<64x2xf32> to vector<16x2xf32>
    %299 = math.tanh %298 : vector<16x2xf32>
    %300 = vector.extract_strided_slice %285 {offsets = [48, 0], sizes = [16, 2], strides = [1, 1]} : vector<64x2xf32> to vector<16x2xf32>
    %301 = arith.negf %300 : vector<16x2xf32>
    %302 = math.exp %301 : vector<16x2xf32>
    %cst_75 = arith.constant 1.000000e+00 : f32
    %303 = vector.broadcast %cst_75 : f32 to vector<16x2xf32>
    %304 = arith.addf %303, %302 : vector<16x2xf32>
    %305 = arith.divf %303, %304 : vector<16x2xf32>
    %306 = arith.mulf %297, %263 : vector<16x2xf32>
    %307 = arith.mulf %291, %299 : vector<16x2xf32>
    %308 = arith.addf %306, %307 : vector<16x2xf32>
    %309 = math.tanh %308 : vector<16x2xf32>
    %310 = arith.mulf %305, %309 : vector<16x2xf32>
    %cst_76 = arith.constant dense<0.000000e+00> : vector<10x2xf32>
    %311 = tpu.matmul %1, %310, %cst_76 {dimension_numbers = #tpu.dot_dimension_numbers<[1], [0], [0], [1], [0, 0, 1, 1], [], []>} : vector<10x16xf32>, vector<16x2xf32>, vector<10x2xf32> -> vector<10x2xf32>
    %312 = vector.broadcast %2 : vector<10x1xf32> to vector<10x2xf32>
    %313 = arith.addf %311, %312 : vector<10x2xf32>
    %314 = arith.negf %313 : vector<10x2xf32>
    %315 = math.exp %314 : vector<10x2xf32>
    %cst_77 = arith.constant 1.000000e+00 : f32
    %316 = vector.broadcast %cst_77 : f32 to vector<10x2xf32>
    %317 = arith.addf %316, %315 : vector<10x2xf32>
    %318 = arith.divf %316, %317 : vector<10x2xf32>
    %cst_78 = arith.constant dense<0.000000e+00> : vector<1x2xf32>
    %319 = tpu.matmul %3, %318, %cst_78 {dimension_numbers = #tpu.dot_dimension_numbers<[1], [0], [0], [1], [0, 0, 1, 1], [], []>} : vector<1x10xf32>, vector<10x2xf32>, vector<1x2xf32> -> vector<1x2xf32>
    %320 = vector.broadcast %4 : vector<1x1xf32> to vector<1x2xf32>
    %321 = arith.addf %319, %320 : vector<1x2xf32>
    %322 = arith.negf %321 : vector<1x2xf32>
    %323 = math.exp %322 : vector<1x2xf32>
    %cst_79 = arith.constant 1.000000e+00 : f32
    %324 = vector.broadcast %cst_79 : f32 to vector<1x2xf32>
    %325 = arith.addf %324, %323 : vector<1x2xf32>
    %326 = arith.divf %324, %325 : vector<1x2xf32>
    %c6 = arith.constant 6 : index
    %c0_80 = arith.constant 0 : index
    %327 = vector.load %arg8[%c6, %c0_80] : memref<8x2xf32, #tpu.memory_space<vmem>>, vector<1x2xf32>
    tpu.vector_store %arg8[%c6, %c0_80], %326 {strides = array<i32>} : memref<8x2xf32, #tpu.memory_space<vmem>>, vector<1x2xf32>,
    %cst_81 = arith.constant dense<0.000000e+00> : vector<64x2xf32>
    %328 = tpu.matmul %0, %310, %cst_81 {dimension_numbers = #tpu.dot_dimension_numbers<[1], [0], [0], [1], [0, 0, 1, 1], [], []>} : vector<64x16xf32>, vector<16x2xf32>, vector<64x2xf32> -> vector<64x2xf32>
    %329 = vector.extract_strided_slice %10 {offsets = [0, 14], sizes = [64, 2], strides = [1, 1]} : vector<64x16xf32> to vector<64x2xf32>
    %330 = arith.addf %328, %329 : vector<64x2xf32>
    %331 = vector.extract_strided_slice %330 {offsets = [0, 0], sizes = [16, 2], strides = [1, 1]} : vector<64x2xf32> to vector<16x2xf32>
    %332 = arith.negf %331 : vector<16x2xf32>
    %333 = math.exp %332 : vector<16x2xf32>
    %cst_82 = arith.constant 1.000000e+00 : f32
    %334 = vector.broadcast %cst_82 : f32 to vector<16x2xf32>
    %335 = arith.addf %334, %333 : vector<16x2xf32>
    %336 = arith.divf %334, %335 : vector<16x2xf32>
    %337 = vector.extract_strided_slice %330 {offsets = [16, 0], sizes = [16, 2], strides = [1, 1]} : vector<64x2xf32> to vector<16x2xf32>
    %338 = arith.negf %337 : vector<16x2xf32>
    %339 = math.exp %338 : vector<16x2xf32>
    %cst_83 = arith.constant 1.000000e+00 : f32
    %340 = vector.broadcast %cst_83 : f32 to vector<16x2xf32>
    %341 = arith.addf %340, %339 : vector<16x2xf32>
    %342 = arith.divf %340, %341 : vector<16x2xf32>
    %343 = vector.extract_strided_slice %330 {offsets = [32, 0], sizes = [16, 2], strides = [1, 1]} : vector<64x2xf32> to vector<16x2xf32>
    %344 = math.tanh %343 : vector<16x2xf32>
    %345 = vector.extract_strided_slice %330 {offsets = [48, 0], sizes = [16, 2], strides = [1, 1]} : vector<64x2xf32> to vector<16x2xf32>
    %346 = arith.negf %345 : vector<16x2xf32>
    %347 = math.exp %346 : vector<16x2xf32>
    %cst_84 = arith.constant 1.000000e+00 : f32
    %348 = vector.broadcast %cst_84 : f32 to vector<16x2xf32>
    %349 = arith.addf %348, %347 : vector<16x2xf32>
    %350 = arith.divf %348, %349 : vector<16x2xf32>
    %351 = arith.mulf %342, %308 : vector<16x2xf32>
    %352 = arith.mulf %336, %344 : vector<16x2xf32>
    %353 = arith.addf %351, %352 : vector<16x2xf32>
    %354 = math.tanh %353 : vector<16x2xf32>
    %355 = arith.mulf %350, %354 : vector<16x2xf32>
    %cst_85 = arith.constant dense<0.000000e+00> : vector<10x2xf32>
    %356 = tpu.matmul %1, %355, %cst_85 {dimension_numbers = #tpu.dot_dimension_numbers<[1], [0], [0], [1], [0, 0, 1, 1], [], []>} : vector<10x16xf32>, vector<16x2xf32>, vector<10x2xf32> -> vector<10x2xf32>
    %357 = vector.broadcast %2 : vector<10x1xf32> to vector<10x2xf32>
    %358 = arith.addf %356, %357 : vector<10x2xf32>
    %359 = arith.negf %358 : vector<10x2xf32>
    %360 = math.exp %359 : vector<10x2xf32>
    %cst_86 = arith.constant 1.000000e+00 : f32
    %361 = vector.broadcast %cst_86 : f32 to vector<10x2xf32>
    %362 = arith.addf %361, %360 : vector<10x2xf32>
    %363 = arith.divf %361, %362 : vector<10x2xf32>
    %cst_87 = arith.constant dense<0.000000e+00> : vector<1x2xf32>
    %364 = tpu.matmul %3, %363, %cst_87 {dimension_numbers = #tpu.dot_dimension_numbers<[1], [0], [0], [1], [0, 0, 1, 1], [], []>} : vector<1x10xf32>, vector<10x2xf32>, vector<1x2xf32> -> vector<1x2xf32>
    %365 = vector.broadcast %4 : vector<1x1xf32> to vector<1x2xf32>
    %366 = arith.addf %364, %365 : vector<1x2xf32>
    %367 = arith.negf %366 : vector<1x2xf32>
    %368 = math.exp %367 : vector<1x2xf32>
    %cst_88 = arith.constant 1.000000e+00 : f32
    %369 = vector.broadcast %cst_88 : f32 to vector<1x2xf32>
    %370 = arith.addf %369, %368 : vector<1x2xf32>
    %371 = arith.divf %369, %370 : vector<1x2xf32>
    %c7 = arith.constant 7 : index
    %c0_89 = arith.constant 0 : index
    %372 = vector.load %arg8[%c7, %c0_89] : memref<8x2xf32, #tpu.memory_space<vmem>>, vector<1x2xf32>
    tpu.vector_store %arg8[%c7, %c0_89], %371 {strides = array<i32>} : memref<8x2xf32, #tpu.memory_space<vmem>>, vector<1x2xf32>,
    return
  }
}

</mosaic_0001>

<llo_original>
// kernel: tpu_custom_call.1
$region0: #{tpu_custom_call.1}
  #allocation0 [shape = 'u32[]', space=smem, size = 0x4, offset = 0x4, fixed_abs, tag = 'smem constant byte address 0x4 - core index']
  #allocation1 [shape = 'u32[144,128]{1,0:T(1,128)}', space=vmem, size = 0x12000, scoped, tag = 'internal scratch']
  #allocation2 [shape = 'f32[1,1]{1,0:T(1,128)S(1)}', space=vmem, size = 0x200, scoped, tag = 'scoped memory for tpu_custom_call.1']
  %s0 = inlined_call_operand.vmem [shape: f32[20,16], index: 0, kind: input, shape index: {}]
  %s1 = inlined_call_operand.vmem [shape: f32[64,20], index: 1, kind: input, shape index: {}]
  %s2 = inlined_call_operand.vmem [shape: f32[64,16], index: 2, kind: input, shape index: {}]
  %s3 = inlined_call_operand.vmem [shape: f32[64,1], index: 3, kind: input, shape index: {}]
  %s4 = inlined_call_operand.vmem [shape: f32[10,16], index: 4, kind: input, shape index: {}]
  %s5 = inlined_call_operand.vmem [shape: f32[10,1], index: 5, kind: input, shape index: {}]
  %s6 = inlined_call_operand.vmem [shape: f32[1,10], index: 6, kind: input, shape index: {}]
  %s7 = inlined_call_operand.<no memory space> [shape: f32[1,1], index: 7, kind: input, shape index: {}]
  %s8 = inlined_call_operand.vmem [shape: f32[8,2], index: 8, kind: output, shape index: {}]
  %s9 = sld [smem:[#allocation0]]
  $region42: #{tpu_custom_call.1} parent=0
    _
  %s11 = ssub.s32 1, %s9
  %s12 = scalar_select 0, %s11, %s9
  %v13 = vstv %s7
  %14 = vst [vmem:[#allocation2] sm:$0x1] %v13
  // Predicated region
  $region2: #{tpu_custom_call.1} parent=0 // pred_check
    _
  $region3: #{tpu_custom_call.1} parent=0 // pred_check_branch
    %16 = sbr.rel (0) target = $region5
  $region4: #{tpu_custom_call.1} parent=0 // pred_region
    _
  $region5: #{tpu_custom_call.1} parent=0 // pred_fallthru
    _
  // Predicated region
  $region6: #{tpu_custom_call.1} parent=0 // pred_check
    _
  $region7: #{tpu_custom_call.1} parent=0 // pred_check_branch
    %18 = sbr.rel (0) target = $region9
  $region8: #{tpu_custom_call.1} parent=0 // pred_region
    _
  $region9: #{tpu_custom_call.1} parent=0 // pred_fallthru
    _
  // Predicated region
  $region10: #{tpu_custom_call.1} parent=0 // pred_check
    _
  $region11: #{tpu_custom_call.1} parent=0 // pred_check_branch
    %20 = sbr.rel (0) target = $region13
  $region12: #{tpu_custom_call.1} parent=0 // pred_region
    _
  $region13: #{tpu_custom_call.1} parent=0 // pred_fallthru
    _
  // Predicated region
  $region14: #{tpu_custom_call.1} parent=0 // pred_check
    _
  $region15: #{tpu_custom_call.1} parent=0 // pred_check_branch
    %22 = sbr.rel (0) target = $region17
  $region16: #{tpu_custom_call.1} parent=0 // pred_region
    _
  $region17: #{tpu_custom_call.1} parent=0 // pred_fallthru
    _
  // Predicated region
  $region18: #{tpu_custom_call.1} parent=0 // pred_check
    _
  $region19: #{tpu_custom_call.1} parent=0 // pred_check_branch
    %24 = sbr.rel (0) target = $region21
  $region20: #{tpu_custom_call.1} parent=0 // pred_region
    _
  $region21: #{tpu_custom_call.1} parent=0 // pred_fallthru
    _
  // Predicated region
  $region22: #{tpu_custom_call.1} parent=0 // pred_check
    _
  $region23: #{tpu_custom_call.1} parent=0 // pred_check_branch
    %26 = sbr.rel (0) target = $region25
  $region24: #{tpu_custom_call.1} parent=0 // pred_region
    _
  $region25: #{tpu_custom_call.1} parent=0 // pred_fallthru
    _
  // Predicated region
  $region26: #{tpu_custom_call.1} parent=0 // pred_check
    _
  $region27: #{tpu_custom_call.1} parent=0 // pred_check_branch
    %28 = sbr.rel (0) target = $region29
  $region28: #{tpu_custom_call.1} parent=0 // pred_region
    _
  $region29: #{tpu_custom_call.1} parent=0 // pred_fallthru
    _
  // Predicated region
  $region30: #{tpu_custom_call.1} parent=0 // pred_check
    _
  $region31: #{tpu_custom_call.1} parent=0 // pred_check_branch
    %30 = sbr.rel (0) target = $region33
  $region32: #{tpu_custom_call.1} parent=0 // pred_region
    _
  $region33: #{tpu_custom_call.1} parent=0 // pred_fallthru
    _
  %v31 = vld [vmem:[%s2] sm:$0xff]
  %v32 = vld [vmem:[%s2 + $0x8] sm:$0xff]
  %v33 = vld [vmem:[%s2 + $0x10] sm:$0xff]
  %v34 = vld [vmem:[%s2 + $0x18] sm:$0xff]
  %v35 = vld [vmem:[%s2 + $0x20] sm:$0xff]
  %v36 = vld [vmem:[%s2 + $0x28] sm:$0xff]
  %v37 = vld [vmem:[%s2 + $0x30] sm:$0xff]
  %v38 = vld [vmem:[%s2 + $0x38] sm:$0xff]
  %v39 = vld [vmem:[%s4] sm:$0xff]
  %v40 = vld [vmem:[%s4 + $0x8] sm:$0x3]
  %v41 = vld [vmem:[%s5] sm:$0xff]
  %v42 = vld [vmem:[%s5 + $0x8] sm:$0x3]
  %v43 = vld [vmem:[%s6] sm:$0x1]
  %v44 = vld [vmem:[#allocation2] sm:$0x1]
  %v45 = vld [vmem:[%s1] sm:$0xff]
  %v46 = vld [vmem:[%s1 + $0x8] sm:$0xff]
  %v47 = vld [vmem:[%s1 + $0x10] sm:$0xff]
  %v48 = vld [vmem:[%s1 + $0x18] sm:$0xff]
  %v49 = vld [vmem:[%s1 + $0x20] sm:$0xff]
  %v50 = vld [vmem:[%s1 + $0x28] sm:$0xff]
  %v51 = vld [vmem:[%s1 + $0x30] sm:$0xff]
  %v52 = vld [vmem:[%s1 + $0x38] sm:$0xff]
  %v53 = vld [vmem:[%s0] sm:$0xff]
  %v54 = vld [vmem:[%s0 + $0x8] sm:$0xff]
  %v55 = vld [vmem:[%s0 + $0x10] sm:$0xf]
  %v56 = vld [vmem:[%s3] sm:$0xff]
  %v57 = vld [vmem:[%s3 + $0x8] sm:$0xff]
  %v58 = vld [vmem:[%s3 + $0x10] sm:$0xff]
  %v59 = vld [vmem:[%s3 + $0x18] sm:$0xff]
  %v60 = vld [vmem:[%s3 + $0x20] sm:$0xff]
  %v61 = vld [vmem:[%s3 + $0x28] sm:$0xff]
  %v62 = vld [vmem:[%s3 + $0x30] sm:$0xff]
  %v63 = vld [vmem:[%s3 + $0x38] sm:$0xff]
  %65 = vset.pattern.permute.xlu0 0
  %66 = vperm.xlu0 %65, %v56
  %v67 = vpop.permute.xlu0 %66
  %70 = vset.pattern.permute.xlu0 0
  %71 = vperm.xlu0 %70, %v57
  %v72 = vpop.permute.xlu0 %71
  %75 = vset.pattern.permute.xlu0 0
  %76 = vperm.xlu0 %75, %v58
  %v77 = vpop.permute.xlu0 %76
  %80 = vset.pattern.permute.xlu0 0
  %81 = vperm.xlu0 %80, %v59
  %v82 = vpop.permute.xlu0 %81
  %85 = vset.pattern.permute.xlu0 0
  %86 = vperm.xlu0 %85, %v60
  %v87 = vpop.permute.xlu0 %86
  %90 = vset.pattern.permute.xlu0 0
  %91 = vperm.xlu0 %90, %v61
  %v92 = vpop.permute.xlu0 %91
  %95 = vset.pattern.permute.xlu0 0
  %96 = vperm.xlu0 %95, %v62
  %v97 = vpop.permute.xlu0 %96
  %100 = vset.pattern.permute.xlu0 0
  %101 = vperm.xlu0 %100, %v63
  %v102 = vpop.permute.xlu0 %101
  %vm104 = vcmask 162816
  %v106 = vsel %vm104, %v45, 0
  %v109 = vsel %vm104, %v46, 0
  %v112 = vsel %vm104, %v47, 0
  %v115 = vsel %vm104, %v48, 0
  %v118 = vsel %vm104, %v49, 0
  %v121 = vsel %vm104, %v50, 0
  %v124 = vsel %vm104, %v51, 0
  %v127 = vsel %vm104, %v52, 0
  %vm129 = vcmask 1043456
  %v131 = vsel %vm129, %v55, 0
  %133 = vmatprep.subr.mxu0 0.0
  %134 = vmatpush1.msra.mxu0 0.0
  %135 = vmatprep.subr.mxu0 0.0
  %136 = vmatpush1.msra.mxu0 0.0
  %137 = vmatprep.subr.mxu0 0.0
  %138 = vmatpush1.msra.mxu0 0.0
  %139 = vmatprep.subr.mxu0 0.0
  %140 = vmatpush1.msra.mxu0 0.0
  %141 = vmatprep.subr.mxu0 0.0
  %142 = vmatpush1.msra.mxu0 0.0
  %143 = vmatprep.subr.mxu0 0.0
  %144 = vmatpush1.msra.mxu0 0.0
  %145 = vmatprep.subr.mxu0 0.0
  %146 = vmatpush1.msra.mxu0 0.0
  %147 = vmatprep.subr.mxu0 0.0
  %148 = vmatpush1.msra.mxu0 0.0
  %149 = vmatprep.subr.mxu0 0.0
  %150 = vmatpush1.msra.mxu0 0.0
  %151 = vmatprep.subr.mxu0 0.0
  %152 = vmatpush1.msra.mxu0 0.0
  %153 = vmatprep.subr.mxu0 0.0
  %154 = vmatpush1.msra.mxu0 0.0
  %155 = vmatprep.subr.mxu0 0.0
  %156 = vmatpush1.msra.mxu0 0.0
  %157 = vmatprep.subr.mxu0 0.0
  %158 = vmatpush1.msra.mxu0 0.0
  %159 = vmatprep.subr.mxu0 0.0
  %160 = vmatpush1.msra.mxu0 %v131
  %161 = vmatprep.subr.mxu0 0.0
  %162 = vmatpush1.msra.mxu0 %v54
  %163 = vmatprep.subr.mxu0 0.0
  %164 = vmatpush1.msra.mxu0 %v53
  %165 = vmatprep.subr.mxu0 0.0
  %166 = vmatpush2.msra.mxu0 0.0
  %167 = vmatprep.subr.mxu0 0.0
  %168 = vmatpush2.msra.mxu0 0.0
  %169 = vmatprep.subr.mxu0 0.0
  %170 = vmatpush2.msra.mxu0 0.0
  %171 = vmatprep.subr.mxu0 0.0
  %172 = vmatpush2.msra.mxu0 0.0
  %173 = vmatprep.subr.mxu0 0.0
  %174 = vmatpush2.msra.mxu0 0.0
  %175 = vmatprep.subr.mxu0 0.0
  %176 = vmatpush2.msra.mxu0 0.0
  %177 = vmatprep.subr.mxu0 0.0
  %178 = vmatpush2.msra.mxu0 0.0
  %179 = vmatprep.subr.mxu0 0.0
  %180 = vmatpush2.msra.mxu0 0.0
  %181 = vmatprep.subr.mxu0 0.0
  %182 = vmatpush2.msra.mxu0 0.0
  %183 = vmatprep.subr.mxu0 0.0
  %184 = vmatpush2.msra.mxu0 0.0
  %185 = vmatprep.subr.mxu0 0.0
  %186 = vmatpush2.msra.mxu0 0.0
  %187 = vmatprep.subr.mxu0 0.0
  %188 = vmatpush2.msra.mxu0 0.0
  %189 = vmatprep.subr.mxu0 0.0
  %190 = vmatpush2.msra.mxu0 0.0
  %191 = vmatprep.subr.mxu0 0.0
  %192 = vmatpush2.msra.mxu0 0.0
  %193 = vmatprep.subr.mxu0 0.0
  %194 = vmatpush2.msra.mxu0 0.0
  %195 = vmatprep.subr.mxu0 0.0
  %196 = vmatpush2.msra.mxu0 0.0
  %197 = vmatprep.mubr.f32.mxu0 0.0
  %198 = vmatmul.mubr.f32.gmra.mxu0 %v106
  %v199 = vpop.f32.mrf.mxu0
  %v200 = vadd.f32 %v67, %v199
  %v201 = vpop.f32.mrf.mxu0
  %202 = vmatprep.mubr.f32.mxu0 0.0
  %203 = vmatmul.mubr.f32.gmra.mxu0 %v109
  %v204 = vpop.f32.mrf.mxu0
  %v205 = vadd.f32 %v72, %v204
  %v206 = vpop.f32.mrf.mxu0
  %207 = vmatprep.mubr.f32.mxu0 0.0
  %208 = vmatmul.mubr.f32.gmra.mxu0 %v112
  %v209 = vpop.f32.mrf.mxu0
  %v210 = vadd.f32 %v77, %v209
  %v211 = vpop.f32.mrf.mxu0
  %212 = vmatprep.mubr.f32.mxu0 0.0
  %213 = vmatmul.mubr.f32.gmra.mxu0 %v115
  %v214 = vpop.f32.mrf.mxu0
  %v215 = vadd.f32 %v82, %v214
  %v216 = vpop.f32.mrf.mxu0
  %217 = vmatprep.mubr.f32.mxu0 0.0
  %218 = vmatmul.mubr.f32.gmra.mxu0 %v118
  %v219 = vpop.f32.mrf.mxu0
  %v220 = vadd.f32 %v87, %v219
  %v221 = vpop.f32.mrf.mxu0
  %222 = vmatprep.mubr.f32.mxu0 0.0
  %223 = vmatmul.mubr.f32.gmra.mxu0 %v121
  %v224 = vpop.f32.mrf.mxu0
  %v225 = vadd.f32 %v92, %v224
  %v226 = vpop.f32.mrf.mxu0
  %227 = vmatprep.mubr.f32.mxu0 0.0
  %228 = vmatmul.mubr.f32.gmra.mxu0 %v124
  %v229 = vpop.f32.mrf.mxu0
  %v230 = vadd.f32 %v97, %v229
  %v231 = vpop.f32.mrf.mxu0
  %232 = vmatprep.mubr.f32.mxu0 0.0
  %233 = vmatmul.mubr.f32.gmra.mxu0 %v127
  %v234 = vpop.f32.mrf.mxu0
  %v235 = vadd.f32 %v102, %v234
  %v236 = vpop.f32.mrf.mxu0
  %237 = vdwg.mxu0
  %vm238 = vcmask 130048
  %v240 = vsel %vm238, %v31, 0
  %v243 = vsel %vm238, %v32, 0
  %v246 = vsel %vm238, %v33, 0
  %v249 = vsel %vm238, %v34, 0
  %v252 = vsel %vm238, %v35, 0
  %v255 = vsel %vm238, %v36, 0
  %v258 = vsel %vm238, %v37, 0
  %v261 = vsel %vm238, %v38, 0
  %263 = vmatprep.subr.mxu0 0.0
  %264 = vmatpush1.msra.mxu0 0.0
  %265 = vmatprep.subr.mxu0 0.0
  %266 = vmatpush1.msra.mxu0 0.0
  %267 = vmatprep.subr.mxu0 0.0
  %268 = vmatpush1.msra.mxu0 0.0
  %269 = vmatprep.subr.mxu0 0.0
  %270 = vmatpush1.msra.mxu0 0.0
  %271 = vmatprep.subr.mxu0 0.0
  %272 = vmatpush1.msra.mxu0 0.0
  %273 = vmatprep.subr.mxu0 0.0
  %274 = vmatpush1.msra.mxu0 0.0
  %275 = vmatprep.subr.mxu0 0.0
  %276 = vmatpush1.msra.mxu0 0.0
  %277 = vmatprep.subr.mxu0 0.0
  %278 = vmatpush1.msra.mxu0 0.0
  %279 = vmatprep.subr.mxu0 0.0
  %280 = vmatpush1.msra.mxu0 0.0
  %281 = vmatprep.subr.mxu0 0.0
  %282 = vmatpush1.msra.mxu0 0.0
  %283 = vmatprep.subr.mxu0 0.0
  %284 = vmatpush1.msra.mxu0 0.0
  %285 = vmatprep.subr.mxu0 0.0
  %286 = vmatpush1.msra.mxu0 0.0
  %287 = vmatprep.subr.mxu0 0.0
  %288 = vmatpush1.msra.mxu0 0.0
  %289 = vmatprep.subr.mxu0 0.0
  %290 = vmatpush1.msra.mxu0 0.0
  %291 = vmatprep.subr.mxu0 0.0
  %292 = vmatpush1.msra.mxu0 0.0
  %293 = vmatprep.subr.mxu0 0.0
  %294 = vmatpush1.msra.mxu0 0.0
  %295 = vmatprep.subr.mxu0 0.0
  %296 = vmatpush2.msra.mxu0 0.0
  %297 = vmatprep.subr.mxu0 0.0
  %298 = vmatpush2.msra.mxu0 0.0
  %299 = vmatprep.subr.mxu0 0.0
  %300 = vmatpush2.msra.mxu0 0.0
  %301 = vmatprep.subr.mxu0 0.0
  %302 = vmatpush2.msra.mxu0 0.0
  %303 = vmatprep.subr.mxu0 0.0
  %304 = vmatpush2.msra.mxu0 0.0
  %305 = vmatprep.subr.mxu0 0.0
  %306 = vmatpush2.msra.mxu0 0.0
  %307 = vmatprep.subr.mxu0 0.0
  %308 = vmatpush2.msra.mxu0 0.0
  %309 = vmatprep.subr.mxu0 0.0
  %310 = vmatpush2.msra.mxu0 0.0
  %311 = vmatprep.subr.mxu0 0.0
  %312 = vmatpush2.msra.mxu0 0.0
  %313 = vmatprep.subr.mxu0 0.0
  %314 = vmatpush2.msra.mxu0 0.0
  %315 = vmatprep.subr.mxu0 0.0
  %316 = vmatpush2.msra.mxu0 0.0
  %317 = vmatprep.subr.mxu0 0.0
  %318 = vmatpush2.msra.mxu0 0.0
  %319 = vmatprep.subr.mxu0 0.0
  %320 = vmatpush2.msra.mxu0 0.0
  %321 = vmatprep.subr.mxu0 0.0
  %322 = vmatpush2.msra.mxu0 0.0
  %323 = vmatprep.subr.mxu0 0.0
  %324 = vmatpush2.msra.mxu0 0.0
  %325 = vmatprep.subr.mxu0 0.0
  %326 = vmatpush2.msra.mxu0 0.0
  %327 = vmatprep.mubr.f32.mxu0 0.0
  %328 = vmatmul.mubr.f32.gmra.mxu0 %v240
  %v329 = vpop.f32.mrf.mxu0
  %v330 = vadd.f32 %v200, %v329
  %v331 = vpop.f32.mrf.mxu0
  %332 = vmatprep.mubr.f32.mxu0 0.0
  %333 = vmatmul.mubr.f32.gmra.mxu0 %v243
  %v334 = vpop.f32.mrf.mxu0
  %v335 = vadd.f32 %v205, %v334
  %v336 = vpop.f32.mrf.mxu0
  %337 = vmatprep.mubr.f32.mxu0 0.0
  %338 = vmatmul.mubr.f32.gmra.mxu0 %v246
  %v339 = vpop.f32.mrf.mxu0
  %v340 = vadd.f32 %v210, %v339
  %v341 = vpop.f32.mrf.mxu0
  %342 = vmatprep.mubr.f32.mxu0 0.0
  %343 = vmatmul.mubr.f32.gmra.mxu0 %v249
  %v344 = vpop.f32.mrf.mxu0
  %v345 = vadd.f32 %v215, %v344
  %v346 = vpop.f32.mrf.mxu0
  %347 = vmatprep.mubr.f32.mxu0 0.0
  %348 = vmatmul.mubr.f32.gmra.mxu0 %v252
  %v349 = vpop.f32.mrf.mxu0
  %v350 = vadd.f32 %v220, %v349
  %v351 = vpop.f32.mrf.mxu0
  %352 = vmatprep.mubr.f32.mxu0 0.0
  %353 = vmatmul.mubr.f32.gmra.mxu0 %v255
  %v354 = vpop.f32.mrf.mxu0
  %v355 = vadd.f32 %v225, %v354
  %v356 = vpop.f32.mrf.mxu0
  %357 = vmatprep.mubr.f32.mxu0 0.0
  %358 = vmatmul.mubr.f32.gmra.mxu0 %v258
  %v359 = vpop.f32.mrf.mxu0
  %v360 = vadd.f32 %v230, %v359
  %v361 = vpop.f32.mrf.mxu0
  %362 = vmatprep.mubr.f32.mxu0 0.0
  %363 = vmatmul.mubr.f32.gmra.mxu0 %v261
  %v364 = vpop.f32.mrf.mxu0
  %v365 = vadd.f32 %v235, %v364
  %v366 = vpop.f32.mrf.mxu0
  %367 = vdwg.mxu0
  %v368 = vxor.u32 %v330, 2147483648
  %v369 = vxor.u32 %v335, 2147483648
  %v370 = vmul.f32 %v368, 1.442695
  %v371 = vpow.pop %v370
  %v372 = vmul.f32 %v369, 1.442695
  %v373 = vpow.pop %v372
  %v374 = vadd.f32 %v371, 1.0
  %v375 = vadd.f32 %v373, 1.0
  %v376 = vrcp.pop %v374
  %v377 = vmul.f32 1.0, %v376
  %v378 = vrcp.pop %v375
  %v379 = vmul.f32 1.0, %v378
  %v380 = vxor.u32 %v340, 2147483648
  %v381 = vxor.u32 %v345, 2147483648
  %v382 = vmul.f32 %v380, 1.442695
  %v383 = vpow.pop %v382
  %v384 = vmul.f32 %v381, 1.442695
  %v385 = vpow.pop %v384
  %v386 = vadd.f32 %v383, 1.0
  %v387 = vadd.f32 %v385, 1.0
  %v388 = vrcp.pop %v386
  %v389 = vmul.f32 1.0, %v388
  %v390 = vrcp.pop %v387
  %v391 = vmul.f32 1.0, %v390
  %v392 = vtanh.pop %v350
  %v393 = vtanh.pop %v355
  %v394 = vxor.u32 %v360, 2147483648
  %v395 = vxor.u32 %v365, 2147483648
  %v396 = vmul.f32 %v394, 1.442695
  %v397 = vpow.pop %v396
  %v398 = vmul.f32 %v395, 1.442695
  %v399 = vpow.pop %v398
  %v400 = vadd.f32 %v397, 1.0
  %v401 = vadd.f32 %v399, 1.0
  %v402 = vrcp.pop %v400
  %v403 = vmul.f32 1.0, %v402
  %v404 = vrcp.pop %v401
  %v405 = vmul.f32 1.0, %v404
  %v406 = vmul.f32 %v389, 0.0
  %v407 = vmul.f32 %v391, 0.0
  %v408 = vmul.f32 %v377, %v392
  %v409 = vmul.f32 %v379, %v393
  %v410 = vadd.f32 %v406, %v408
  %v411 = vadd.f32 %v407, %v409
  %v412 = vtanh.pop %v410
  %v413 = vtanh.pop %v411
  %v414 = vmul.f32 %v403, %v412
  %v415 = vmul.f32 %v405, %v413
  %417 = vset.pattern.permute.xlu0 0
  %418 = vperm.xlu0 %417, %v41
  %v419 = vpop.permute.xlu0 %418
  %422 = vset.pattern.permute.xlu0 0
  %423 = vperm.xlu0 %422, %v42
  %v424 = vpop.permute.xlu0 %423
  %v427 = vsel %vm238, %v39, 0
  %v430 = vsel %vm238, %v40, 0
  %432 = vmatprep.subr.mxu0 0.0
  %433 = vmatpush1.msra.mxu0 0.0
  %434 = vmatprep.subr.mxu0 0.0
  %435 = vmatpush1.msra.mxu0 0.0
  %436 = vmatprep.subr.mxu0 0.0
  %437 = vmatpush1.msra.mxu0 0.0
  %438 = vmatprep.subr.mxu0 0.0
  %439 = vmatpush1.msra.mxu0 0.0
  %440 = vmatprep.subr.mxu0 0.0
  %441 = vmatpush1.msra.mxu0 0.0
  %442 = vmatprep.subr.mxu0 0.0
  %443 = vmatpush1.msra.mxu0 0.0
  %444 = vmatprep.subr.mxu0 0.0
  %445 = vmatpush1.msra.mxu0 0.0
  %446 = vmatprep.subr.mxu0 0.0
  %447 = vmatpush1.msra.mxu0 0.0
  %448 = vmatprep.subr.mxu0 0.0
  %449 = vmatpush1.msra.mxu0 0.0
  %450 = vmatprep.subr.mxu0 0.0
  %451 = vmatpush1.msra.mxu0 0.0
  %452 = vmatprep.subr.mxu0 0.0
  %453 = vmatpush1.msra.mxu0 0.0
  %454 = vmatprep.subr.mxu0 0.0
  %455 = vmatpush1.msra.mxu0 0.0
  %456 = vmatprep.subr.mxu0 0.0
  %457 = vmatpush1.msra.mxu0 0.0
  %458 = vmatprep.subr.mxu0 0.0
  %459 = vmatpush1.msra.mxu0 0.0
  %460 = vmatprep.subr.mxu0 0.0
  %461 = vmatpush1.msra.mxu0 %v415
  %462 = vmatprep.subr.mxu0 0.0
  %463 = vmatpush1.msra.mxu0 %v414
  %464 = vmatprep.subr.mxu0 0.0
  %465 = vmatpush2.msra.mxu0 0.0
  %466 = vmatprep.subr.mxu0 0.0
  %467 = vmatpush2.msra.mxu0 0.0
  %468 = vmatprep.subr.mxu0 0.0
  %469 = vmatpush2.msra.mxu0 0.0
  %470 = vmatprep.subr.mxu0 0.0
  %471 = vmatpush2.msra.mxu0 0.0
  %472 = vmatprep.subr.mxu0 0.0
  %473 = vmatpush2.msra.mxu0 0.0
  %474 = vmatprep.subr.mxu0 0.0
  %475 = vmatpush2.msra.mxu0 0.0
  %476 = vmatprep.subr.mxu0 0.0
  %477 = vmatpush2.msra.mxu0 0.0
  %478 = vmatprep.subr.mxu0 0.0
  %479 = vmatpush2.msra.mxu0 0.0
  %480 = vmatprep.subr.mxu0 0.0
  %481 = vmatpush2.msra.mxu0 0.0
  %482 = vmatprep.subr.mxu0 0.0
  %483 = vmatpush2.msra.mxu0 0.0
  %484 = vmatprep.subr.mxu0 0.0
  %485 = vmatpush2.msra.mxu0 0.0
  %486 = vmatprep.subr.mxu0 0.0
  %487 = vmatpush2.msra.mxu0 0.0
  %488 = vmatprep.subr.mxu0 0.0
  %489 = vmatpush2.msra.mxu0 0.0
  %490 = vmatprep.subr.mxu0 0.0
  %491 = vmatpush2.msra.mxu0 0.0
  %492 = vmatprep.subr.mxu0 0.0
  %493 = vmatpush2.msra.mxu0 0.0
  %494 = vmatprep.subr.mxu0 0.0
  %495 = vmatpush2.msra.mxu0 0.0
  %496 = vmatprep.mubr.f32.mxu0 0.0
  %497 = vmatmul.mubr.f32.gmra.mxu0 %v427
  %v498 = vpop.f32.mrf.mxu0
  %v499 = vadd.f32 %v419, %v498
  %v500 = vpop.f32.mrf.mxu0
  %501 = vmatprep.mubr.f32.mxu0 0.0
  %502 = vmatmul.mubr.f32.gmra.mxu0 %v430
  %v503 = vpop.f32.mrf.mxu0
  %v504 = vadd.f32 %v424, %v503
  %v505 = vpop.f32.mrf.mxu0
  %506 = vdwg.mxu0
  %v507 = vxor.u32 %v499, 2147483648
  %v508 = vxor.u32 %v504, 2147483648
  %v509 = vmul.f32 %v507, 1.442695
  %v510 = vpow.pop %v509
  %v511 = vmul.f32 %v508, 1.442695
  %v512 = vpow.pop %v511
  %v513 = vadd.f32 %v510, 1.0
  %v514 = vadd.f32 %v512, 1.0
  %v515 = vrcp.pop %v513
  %v516 = vmul.f32 1.0, %v515
  %v517 = vrcp.pop %v514
  %v518 = vmul.f32 1.0, %v517
  %520 = vset.pattern.permute.xlu0 0
  %521 = vperm.xlu0 %520, %v44
  %v522 = vpop.permute.xlu0 %521
  %v524 = vlaneseq
  %v525 = vshrl.u32 %v524, 7
  %v526 = vsub.s32 0, %v525
  %v527 = vrot.slane %v522, %v526
  %vm528 = vcmask 80896
  %v530 = vsel %vm528, %v43, 0
  %vm532 = vcmask 1041408
  %v534 = vsel %vm532, %v518, 0
  %536 = vmatprep.subr.mxu0 0.0
  %537 = vmatpush1.msra.mxu0 0.0
  %538 = vmatprep.subr.mxu0 0.0
  %539 = vmatpush1.msra.mxu0 0.0
  %540 = vmatprep.subr.mxu0 0.0
  %541 = vmatpush1.msra.mxu0 0.0
  %542 = vmatprep.subr.mxu0 0.0
  %543 = vmatpush1.msra.mxu0 0.0
  %544 = vmatprep.subr.mxu0 0.0
  %545 = vmatpush1.msra.mxu0 0.0
  %546 = vmatprep.subr.mxu0 0.0
  %547 = vmatpush1.msra.mxu0 0.0
  %548 = vmatprep.subr.mxu0 0.0
  %549 = vmatpush1.msra.mxu0 0.0
  %550 = vmatprep.subr.mxu0 0.0
  %551 = vmatpush1.msra.mxu0 0.0
  %552 = vmatprep.subr.mxu0 0.0
  %553 = vmatpush1.msra.mxu0 0.0
  %554 = vmatprep.subr.mxu0 0.0
  %555 = vmatpush1.msra.mxu0 0.0
  %556 = vmatprep.subr.mxu0 0.0
  %557 = vmatpush1.msra.mxu0 0.0
  %558 = vmatprep.subr.mxu0 0.0
  %559 = vmatpush1.msra.mxu0 0.0
  %560 = vmatprep.subr.mxu0 0.0
  %561 = vmatpush1.msra.mxu0 0.0
  %562 = vmatprep.subr.mxu0 0.0
  %563 = vmatpush1.msra.mxu0 0.0
  %564 = vmatprep.subr.mxu0 0.0
  %565 = vmatpush1.msra.mxu0 %v534
  %566 = vmatprep.subr.mxu0 0.0
  %567 = vmatpush1.msra.mxu0 %v516
  %568 = vmatprep.subr.mxu0 0.0
  %569 = vmatpush2.msra.mxu0 0.0
  %570 = vmatprep.subr.mxu0 0.0
  %571 = vmatpush2.msra.mxu0 0.0
  %572 = vmatprep.subr.mxu0 0.0
  %573 = vmatpush2.msra.mxu0 0.0
  %574 = vmatprep.subr.mxu0 0.0
  %575 = vmatpush2.msra.mxu0 0.0
  %576 = vmatprep.subr.mxu0 0.0
  %577 = vmatpush2.msra.mxu0 0.0
  %578 = vmatprep.subr.mxu0 0.0
  %579 = vmatpush2.msra.mxu0 0.0
  %580 = vmatprep.subr.mxu0 0.0
  %581 = vmatpush2.msra.mxu0 0.0
  %582 = vmatprep.subr.mxu0 0.0
  %583 = vmatpush2.msra.mxu0 0.0
  %584 = vmatprep.subr.mxu0 0.0
  %585 = vmatpush2.msra.mxu0 0.0
  %586 = vmatprep.subr.mxu0 0.0
  %587 = vmatpush2.msra.mxu0 0.0
  %588 = vmatprep.subr.mxu0 0.0
  %589 = vmatpush2.msra.mxu0 0.0
  %590 = vmatprep.subr.mxu0 0.0
  %591 = vmatpush2.msra.mxu0 0.0
  %592 = vmatprep.subr.mxu0 0.0
  %593 = vmatpush2.msra.mxu0 0.0
  %594 = vmatprep.subr.mxu0 0.0
  %595 = vmatpush2.msra.mxu0 0.0
  %596 = vmatprep.subr.mxu0 0.0
  %597 = vmatpush2.msra.mxu0 0.0
  %598 = vmatprep.subr.mxu0 0.0
  %599 = vmatpush2.msra.mxu0 0.0
  %600 = vmatprep.mubr.f32.mxu0 0.0
  %601 = vmatmul.mubr.f32.gmra.mxu0 %v530
  %v602 = vpop.f32.mrf.mxu0
  %v603 = vadd.f32 %v527, %v602
  %v604 = vpop.f32.mrf.mxu0
  %605 = vdwg.mxu0
  %v606 = vxor.u32 %v603, 2147483648
  %v607 = vmul.f32 %v606, 1.442695
  %v608 = vpow.pop %v607
  %v609 = vadd.f32 %v608, 1.0
  %v610 = vrcp.pop %v609
  %v611 = vmul.f32 1.0, %v610
  %vm612 = vcmask 8192
  %613 = vst.msk [vmem:[%s8] sm:$0x1] %vm612, %v611
  %622 = vrot.lane.b32.xlu0 %v200, 126
  %v623 = vpop.permute.xlu0 %622
  %624 = vrot.lane.b32.xlu0 %v205, 126
  %v625 = vpop.permute.xlu0 %624
  %626 = vrot.lane.b32.xlu0 %v210, 126
  %v627 = vpop.permute.xlu0 %626
  %628 = vrot.lane.b32.xlu0 %v215, 126
  %v629 = vpop.permute.xlu0 %628
  %630 = vrot.lane.b32.xlu0 %v220, 126
  %v631 = vpop.permute.xlu0 %630
  %632 = vrot.lane.b32.xlu0 %v225, 126
  %v633 = vpop.permute.xlu0 %632
  %634 = vrot.lane.b32.xlu0 %v230, 126
  %v635 = vpop.permute.xlu0 %634
  %636 = vrot.lane.b32.xlu0 %v235, 126
  %v637 = vpop.permute.xlu0 %636
  %646 = vmatprep.subr.mxu0 0.0
  %647 = vmatpush1.msra.mxu0 0.0
  %648 = vmatprep.subr.mxu0 0.0
  %649 = vmatpush1.msra.mxu0 0.0
  %650 = vmatprep.subr.mxu0 0.0
  %651 = vmatpush1.msra.mxu0 0.0
  %652 = vmatprep.subr.mxu0 0.0
  %653 = vmatpush1.msra.mxu0 0.0
  %654 = vmatprep.subr.mxu0 0.0
  %655 = vmatpush1.msra.mxu0 0.0
  %656 = vmatprep.subr.mxu0 0.0
  %657 = vmatpush1.msra.mxu0 0.0
  %658 = vmatprep.subr.mxu0 0.0
  %659 = vmatpush1.msra.mxu0 0.0
  %660 = vmatprep.subr.mxu0 0.0
  %661 = vmatpush1.msra.mxu0 0.0
  %662 = vmatprep.subr.mxu0 0.0
  %663 = vmatpush1.msra.mxu0 0.0
  %664 = vmatprep.subr.mxu0 0.0
  %665 = vmatpush1.msra.mxu0 0.0
  %666 = vmatprep.subr.mxu0 0.0
  %667 = vmatpush1.msra.mxu0 0.0
  %668 = vmatprep.subr.mxu0 0.0
  %669 = vmatpush1.msra.mxu0 0.0
  %670 = vmatprep.subr.mxu0 0.0
  %671 = vmatpush1.msra.mxu0 0.0
  %672 = vmatprep.subr.mxu0 0.0
  %673 = vmatpush1.msra.mxu0 0.0
  %674 = vmatprep.subr.mxu0 0.0
  %675 = vmatpush1.msra.mxu0 %v415
  %676 = vmatprep.subr.mxu0 0.0
  %677 = vmatpush1.msra.mxu0 %v414
  %678 = vmatprep.subr.mxu0 0.0
  %679 = vmatpush2.msra.mxu0 0.0
  %680 = vmatprep.subr.mxu0 0.0
  %681 = vmatpush2.msra.mxu0 0.0
  %682 = vmatprep.subr.mxu0 0.0
  %683 = vmatpush2.msra.mxu0 0.0
  %684 = vmatprep.subr.mxu0 0.0
  %685 = vmatpush2.msra.mxu0 0.0
  %686 = vmatprep.subr.mxu0 0.0
  %687 = vmatpush2.msra.mxu0 0.0
  %688 = vmatprep.subr.mxu0 0.0
  %689 = vmatpush2.msra.mxu0 0.0
  %690 = vmatprep.subr.mxu0 0.0
  %691 = vmatpush2.msra.mxu0 0.0
  %692 = vmatprep.subr.mxu0 0.0
  %693 = vmatpush2.msra.mxu0 0.0
  %694 = vmatprep.subr.mxu0 0.0
  %695 = vmatpush2.msra.mxu0 0.0
  %696 = vmatprep.subr.mxu0 0.0
  %697 = vmatpush2.msra.mxu0 0.0
  %698 = vmatprep.subr.mxu0 0.0
  %699 = vmatpush2.msra.mxu0 0.0
  %700 = vmatprep.subr.mxu0 0.0
  %701 = vmatpush2.msra.mxu0 0.0
  %702 = vmatprep.subr.mxu0 0.0
  %703 = vmatpush2.msra.mxu0 0.0
  %704 = vmatprep.subr.mxu0 0.0
  %705 = vmatpush2.msra.mxu0 0.0
  %706 = vmatprep.subr.mxu0 0.0
  %707 = vmatpush2.msra.mxu0 0.0
  %708 = vmatprep.subr.mxu0 0.0
  %709 = vmatpush2.msra.mxu0 0.0
  %710 = vmatprep.mubr.f32.mxu0 0.0
  %711 = vmatmul.mubr.f32.gmra.mxu0 %v240
  %v712 = vpop.f32.mrf.mxu0
  %v713 = vadd.f32 %v623, %v712
  %v714 = vpop.f32.mrf.mxu0
  %715 = vmatprep.mubr.f32.mxu0 0.0
  %716 = vmatmul.mubr.f32.gmra.mxu0 %v243
  %v717 = vpop.f32.mrf.mxu0
  %v718 = vadd.f32 %v625, %v717
  %v719 = vpop.f32.mrf.mxu0
  %720 = vmatprep.mubr.f32.mxu0 0.0
  %721 = vmatmul.mubr.f32.gmra.mxu0 %v246
  %v722 = vpop.f32.mrf.mxu0
  %v723 = vadd.f32 %v627, %v722
  %v724 = vpop.f32.mrf.mxu0
  %725 = vmatprep.mubr.f32.mxu0 0.0
  %726 = vmatmul.mubr.f32.gmra.mxu0 %v249
  %v727 = vpop.f32.mrf.mxu0
  %v728 = vadd.f32 %v629, %v727
  %v729 = vpop.f32.mrf.mxu0
  %730 = vmatprep.mubr.f32.mxu0 0.0
  %731 = vmatmul.mubr.f32.gmra.mxu0 %v252
  %v732 = vpop.f32.mrf.mxu0
  %v733 = vadd.f32 %v631, %v732
  %v734 = vpop.f32.mrf.mxu0
  %735 = vmatprep.mubr.f32.mxu0 0.0
  %736 = vmatmul.mubr.f32.gmra.mxu0 %v255
  %v737 = vpop.f32.mrf.mxu0
  %v738 = vadd.f32 %v633, %v737
  %v739 = vpop.f32.mrf.mxu0
  %740 = vmatprep.mubr.f32.mxu0 0.0
  %741 = vmatmul.mubr.f32.gmra.mxu0 %v258
  %v742 = vpop.f32.mrf.mxu0
  %v743 = vadd.f32 %v635, %v742
  %v744 = vpop.f32.mrf.mxu0
  %745 = vmatprep.mubr.f32.mxu0 0.0
  %746 = vmatmul.mubr.f32.gmra.mxu0 %v261
  %v747 = vpop.f32.mrf.mxu0
  %v748 = vadd.f32 %v637, %v747
  %v749 = vpop.f32.mrf.mxu0
  %750 = vdwg.mxu0
  %v751 = vxor.u32 %v713, 2147483648
  %v752 = vxor.u32 %v718, 2147483648
  %v753 = vmul.f32 %v751, 1.442695
  %v754 = vpow.pop %v753
  %v755 = vmul.f32 %v752, 1.442695
  %v756 = vpow.pop %v755
  %v757 = vadd.f32 %v754, 1.0
  %v758 = vadd.f32 %v756, 1.0
  %v759 = vrcp.pop %v757
  %v760 = vmul.f32 1.0, %v759
  %v761 = vrcp.pop %v758
  %v762 = vmul.f32 1.0, %v761
  %v763 = vxor.u32 %v723, 2147483648
  %v764 = vxor.u32 %v728, 2147483648
  %v765 = vmul.f32 %v763, 1.442695
  %v766 = vpow.pop %v765
  %v767 = vmul.f32 %v764, 1.442695
  %v768 = vpow.pop %v767
  %v769 = vadd.f32 %v766, 1.0
  %v770 = vadd.f32 %v768, 1.0
  %v771 = vrcp.pop %v769
  %v772 = vmul.f32 1.0, %v771
  %v773 = vrcp.pop %v770
  %v774 = vmul.f32 1.0, %v773
  %v775 = vtanh.pop %v733
  %v776 = vtanh.pop %v738
  %v777 = vxor.u32 %v743, 2147483648
  %v778 = vxor.u32 %v748, 2147483648
  %v779 = vmul.f32 %v777, 1.442695
  %v780 = vpow.pop %v779
  %v781 = vmul.f32 %v778, 1.442695
  %v782 = vpow.pop %v781
  %v783 = vadd.f32 %v780, 1.0
  %v784 = vadd.f32 %v782, 1.0
  %v785 = vrcp.pop %v783
  %v786 = vmul.f32 1.0, %v785
  %v787 = vrcp.pop %v784
  %v788 = vmul.f32 1.0, %v787
  %v789 = vmul.f32 %v772, %v410
  %v790 = vmul.f32 %v774, %v411
  %v791 = vmul.f32 %v760, %v775
  %v792 = vmul.f32 %v762, %v776
  %v793 = vadd.f32 %v789, %v791
  %v794 = vadd.f32 %v790, %v792
  %v795 = vtanh.pop %v793
  %v796 = vtanh.pop %v794
  %v797 = vmul.f32 %v786, %v795
  %v798 = vmul.f32 %v788, %v796
  %799 = vmatprep.subr.mxu0 0.0
  %800 = vmatpush1.msra.mxu0 0.0
  %801 = vmatprep.subr.mxu0 0.0
  %802 = vmatpush1.msra.mxu0 0.0
  %803 = vmatprep.subr.mxu0 0.0
  %804 = vmatpush1.msra.mxu0 0.0
  %805 = vmatprep.subr.mxu0 0.0
  %806 = vmatpush1.msra.mxu0 0.0
  %807 = vmatprep.subr.mxu0 0.0
  %808 = vmatpush1.msra.mxu0 0.0
  %809 = vmatprep.subr.mxu0 0.0
  %810 = vmatpush1.msra.mxu0 0.0
  %811 = vmatprep.subr.mxu0 0.0
  %812 = vmatpush1.msra.mxu0 0.0
  %813 = vmatprep.subr.mxu0 0.0
  %814 = vmatpush1.msra.mxu0 0.0
  %815 = vmatprep.subr.mxu0 0.0
  %816 = vmatpush1.msra.mxu0 0.0
  %817 = vmatprep.subr.mxu0 0.0
  %818 = vmatpush1.msra.mxu0 0.0
  %819 = vmatprep.subr.mxu0 0.0
  %820 = vmatpush1.msra.mxu0 0.0
  %821 = vmatprep.subr.mxu0 0.0
  %822 = vmatpush1.msra.mxu0 0.0
  %823 = vmatprep.subr.mxu0 0.0
  %824 = vmatpush1.msra.mxu0 0.0
  %825 = vmatprep.subr.mxu0 0.0
  %826 = vmatpush1.msra.mxu0 0.0
  %827 = vmatprep.subr.mxu0 0.0
  %828 = vmatpush1.msra.mxu0 %v798
  %829 = vmatprep.subr.mxu0 0.0
  %830 = vmatpush1.msra.mxu0 %v797
  %831 = vmatprep.subr.mxu0 0.0
  %832 = vmatpush2.msra.mxu0 0.0
  %833 = vmatprep.subr.mxu0 0.0
  %834 = vmatpush2.msra.mxu0 0.0
  %835 = vmatprep.subr.mxu0 0.0
  %836 = vmatpush2.msra.mxu0 0.0
  %837 = vmatprep.subr.mxu0 0.0
  %838 = vmatpush2.msra.mxu0 0.0
  %839 = vmatprep.subr.mxu0 0.0
  %840 = vmatpush2.msra.mxu0 0.0
  %841 = vmatprep.subr.mxu0 0.0
  %842 = vmatpush2.msra.mxu0 0.0
  %843 = vmatprep.subr.mxu0 0.0
  %844 = vmatpush2.msra.mxu0 0.0
  %845 = vmatprep.subr.mxu0 0.0
  %846 = vmatpush2.msra.mxu0 0.0
  %847 = vmatprep.subr.mxu0 0.0
  %848 = vmatpush2.msra.mxu0 0.0
  %849 = vmatprep.subr.mxu0 0.0
  %850 = vmatpush2.msra.mxu0 0.0
  %851 = vmatprep.subr.mxu0 0.0
  %852 = vmatpush2.msra.mxu0 0.0
  %853 = vmatprep.subr.mxu0 0.0
  %854 = vmatpush2.msra.mxu0 0.0
  %855 = vmatprep.subr.mxu0 0.0
  %856 = vmatpush2.msra.mxu0 0.0
  %857 = vmatprep.subr.mxu0 0.0
  %858 = vmatpush2.msra.mxu0 0.0
  %859 = vmatprep.subr.mxu0 0.0
  %860 = vmatpush2.msra.mxu0 0.0
  %861 = vmatprep.subr.mxu0 0.0
  %862 = vmatpush2.msra.mxu0 0.0
  %863 = vmatprep.mubr.f32.mxu0 0.0
  %864 = vmatmul.mubr.f32.gmra.mxu0 %v427
  %v865 = vpop.f32.mrf.mxu0
  %v866 = vadd.f32 %v419, %v865
  %v867 = vpop.f32.mrf.mxu0
  %868 = vmatprep.mubr.f32.mxu0 0.0
  %869 = vmatmul.mubr.f32.gmra.mxu0 %v430
  %v870 = vpop.f32.mrf.mxu0
  %v871 = vadd.f32 %v424, %v870
  %v872 = vpop.f32.mrf.mxu0
  %873 = vdwg.mxu0
  %v874 = vxor.u32 %v866, 2147483648
  %v875 = vxor.u32 %v871, 2147483648
  %v876 = vmul.f32 %v874, 1.442695
  %v877 = vpow.pop %v876
  %v878 = vmul.f32 %v875, 1.442695
  %v879 = vpow.pop %v878
  %v880 = vadd.f32 %v877, 1.0
  %v881 = vadd.f32 %v879, 1.0
  %v882 = vrcp.pop %v880
  %v883 = vmul.f32 1.0, %v882
  %v884 = vrcp.pop %v881
  %v885 = vmul.f32 1.0, %v884
  %v887 = vsel %vm532, %v885, 0
  %889 = vmatprep.subr.mxu0 0.0
  %890 = vmatpush1.msra.mxu0 0.0
  %891 = vmatprep.subr.mxu0 0.0
  %892 = vmatpush1.msra.mxu0 0.0
  %893 = vmatprep.subr.mxu0 0.0
  %894 = vmatpush1.msra.mxu0 0.0
  %895 = vmatprep.subr.mxu0 0.0
  %896 = vmatpush1.msra.mxu0 0.0
  %897 = vmatprep.subr.mxu0 0.0
  %898 = vmatpush1.msra.mxu0 0.0
  %899 = vmatprep.subr.mxu0 0.0
  %900 = vmatpush1.msra.mxu0 0.0
  %901 = vmatprep.subr.mxu0 0.0
  %902 = vmatpush1.msra.mxu0 0.0
  %903 = vmatprep.subr.mxu0 0.0
  %904 = vmatpush1.msra.mxu0 0.0
  %905 = vmatprep.subr.mxu0 0.0
  %906 = vmatpush1.msra.mxu0 0.0
  %907 = vmatprep.subr.mxu0 0.0
  %908 = vmatpush1.msra.mxu0 0.0
  %909 = vmatprep.subr.mxu0 0.0
  %910 = vmatpush1.msra.mxu0 0.0
  %911 = vmatprep.subr.mxu0 0.0
  %912 = vmatpush1.msra.mxu0 0.0
  %913 = vmatprep.subr.mxu0 0.0
  %914 = vmatpush1.msra.mxu0 0.0
  %915 = vmatprep.subr.mxu0 0.0
  %916 = vmatpush1.msra.mxu0 0.0
  %917 = vmatprep.subr.mxu0 0.0
  %918 = vmatpush1.msra.mxu0 %v887
  %919 = vmatprep.subr.mxu0 0.0
  %920 = vmatpush1.msra.mxu0 %v883
  %921 = vmatprep.subr.mxu0 0.0
  %922 = vmatpush2.msra.mxu0 0.0
  %923 = vmatprep.subr.mxu0 0.0
  %924 = vmatpush2.msra.mxu0 0.0
  %925 = vmatprep.subr.mxu0 0.0
  %926 = vmatpush2.msra.mxu0 0.0
  %927 = vmatprep.subr.mxu0 0.0
  %928 = vmatpush2.msra.mxu0 0.0
  %929 = vmatprep.subr.mxu0 0.0
  %930 = vmatpush2.msra.mxu0 0.0
  %931 = vmatprep.subr.mxu0 0.0
  %932 = vmatpush2.msra.mxu0 0.0
  %933 = vmatprep.subr.mxu0 0.0
  %934 = vmatpush2.msra.mxu0 0.0
  %935 = vmatprep.subr.mxu0 0.0
  %936 = vmatpush2.msra.mxu0 0.0
  %937 = vmatprep.subr.mxu0 0.0
  %938 = vmatpush2.msra.mxu0 0.0
  %939 = vmatprep.subr.mxu0 0.0
  %940 = vmatpush2.msra.mxu0 0.0
  %941 = vmatprep.subr.mxu0 0.0
  %942 = vmatpush2.msra.mxu0 0.0
  %943 = vmatprep.subr.mxu0 0.0
  %944 = vmatpush2.msra.mxu0 0.0
  %945 = vmatprep.subr.mxu0 0.0
  %946 = vmatpush2.msra.mxu0 0.0
  %947 = vmatprep.subr.mxu0 0.0
  %948 = vmatpush2.msra.mxu0 0.0
  %949 = vmatprep.subr.mxu0 0.0
  %950 = vmatpush2.msra.mxu0 0.0
  %951 = vmatprep.subr.mxu0 0.0
  %952 = vmatpush2.msra.mxu0 0.0
  %953 = vmatprep.mubr.f32.mxu0 0.0
  %954 = vmatmul.mubr.f32.gmra.mxu0 %v530
  %v955 = vpop.f32.mrf.mxu0
  %v956 = vadd.f32 %v527, %v955
  %v957 = vpop.f32.mrf.mxu0
  %958 = vdwg.mxu0
  %v959 = vxor.u32 %v956, 2147483648
  %v960 = vmul.f32 %v959, 1.442695
  %v961 = vpow.pop %v960
  %v962 = vadd.f32 %v961, 1.0
  %v963 = vrcp.pop %v962
  %v964 = vmul.f32 1.0, %v963
  %965 = vst.msk [vmem:[%s8 + $0x1] sm:$0x1] %vm612, %v964
  %966 = vrot.lane.b32.xlu0 %v200, 124
  %v967 = vpop.permute.xlu0 %966
  %968 = vrot.lane.b32.xlu0 %v205, 124
  %v969 = vpop.permute.xlu0 %968
  %970 = vrot.lane.b32.xlu0 %v210, 124
  %v971 = vpop.permute.xlu0 %970
  %972 = vrot.lane.b32.xlu0 %v215, 124
  %v973 = vpop.permute.xlu0 %972
  %974 = vrot.lane.b32.xlu0 %v220, 124
  %v975 = vpop.permute.xlu0 %974
  %976 = vrot.lane.b32.xlu0 %v225, 124
  %v977 = vpop.permute.xlu0 %976
  %978 = vrot.lane.b32.xlu0 %v230, 124
  %v979 = vpop.permute.xlu0 %978
  %980 = vrot.lane.b32.xlu0 %v235, 124
  %v981 = vpop.permute.xlu0 %980
  %990 = vmatprep.subr.mxu0 0.0
  %991 = vmatpush1.msra.mxu0 0.0
  %992 = vmatprep.subr.mxu0 0.0
  %993 = vmatpush1.msra.mxu0 0.0
  %994 = vmatprep.subr.mxu0 0.0
  %995 = vmatpush1.msra.mxu0 0.0
  %996 = vmatprep.subr.mxu0 0.0
  %997 = vmatpush1.msra.mxu0 0.0
  %998 = vmatprep.subr.mxu0 0.0
  %999 = vmatpush1.msra.mxu0 0.0
  %1000 = vmatprep.subr.mxu0 0.0
  %1001 = vmatpush1.msra.mxu0 0.0
  %1002 = vmatprep.subr.mxu0 0.0
  %1003 = vmatpush1.msra.mxu0 0.0
  %1004 = vmatprep.subr.mxu0 0.0
  %1005 = vmatpush1.msra.mxu0 0.0
  %1006 = vmatprep.subr.mxu0 0.0
  %1007 = vmatpush1.msra.mxu0 0.0
  %1008 = vmatprep.subr.mxu0 0.0
  %1009 = vmatpush1.msra.mxu0 0.0
  %1010 = vmatprep.subr.mxu0 0.0
  %1011 = vmatpush1.msra.mxu0 0.0
  %1012 = vmatprep.subr.mxu0 0.0
  %1013 = vmatpush1.msra.mxu0 0.0
  %1014 = vmatprep.subr.mxu0 0.0
  %1015 = vmatpush1.msra.mxu0 0.0
  %1016 = vmatprep.subr.mxu0 0.0
  %1017 = vmatpush1.msra.mxu0 0.0
  %1018 = vmatprep.subr.mxu0 0.0
  %1019 = vmatpush1.msra.mxu0 %v798
  %1020 = vmatprep.subr.mxu0 0.0
  %1021 = vmatpush1.msra.mxu0 %v797
  %1022 = vmatprep.subr.mxu0 0.0
  %1023 = vmatpush2.msra.mxu0 0.0
  %1024 = vmatprep.subr.mxu0 0.0
  %1025 = vmatpush2.msra.mxu0 0.0
  %1026 = vmatprep.subr.mxu0 0.0
  %1027 = vmatpush2.msra.mxu0 0.0
  %1028 = vmatprep.subr.mxu0 0.0
  %1029 = vmatpush2.msra.mxu0 0.0
  %1030 = vmatprep.subr.mxu0 0.0
  %1031 = vmatpush2.msra.mxu0 0.0
  %1032 = vmatprep.subr.mxu0 0.0
  %1033 = vmatpush2.msra.mxu0 0.0
  %1034 = vmatprep.subr.mxu0 0.0
  %1035 = vmatpush2.msra.mxu0 0.0
  %1036 = vmatprep.subr.mxu0 0.0
  %1037 = vmatpush2.msra.mxu0 0.0
  %1038 = vmatprep.subr.mxu0 0.0
  %1039 = vmatpush2.msra.mxu0 0.0
  %1040 = vmatprep.subr.mxu0 0.0
  %1041 = vmatpush2.msra.mxu0 0.0
  %1042 = vmatprep.subr.mxu0 0.0
  %1043 = vmatpush2.msra.mxu0 0.0
  %1044 = vmatprep.subr.mxu0 0.0
  %1045 = vmatpush2.msra.mxu0 0.0
  %1046 = vmatprep.subr.mxu0 0.0
  %1047 = vmatpush2.msra.mxu0 0.0
  %1048 = vmatprep.subr.mxu0 0.0
  %1049 = vmatpush2.msra.mxu0 0.0
  %1050 = vmatprep.subr.mxu0 0.0
  %1051 = vmatpush2.msra.mxu0 0.0
  %1052 = vmatprep.subr.mxu0 0.0
  %1053 = vmatpush2.msra.mxu0 0.0
  %1054 = vmatprep.mubr.f32.mxu0 0.0
  %1055 = vmatmul.mubr.f32.gmra.mxu0 %v240
  %v1056 = vpop.f32.mrf.mxu0
  %v1057 = vadd.f32 %v967, %v1056
  %v1058 = vpop.f32.mrf.mxu0
  %1059 = vmatprep.mubr.f32.mxu0 0.0
  %1060 = vmatmul.mubr.f32.gmra.mxu0 %v243
  %v1061 = vpop.f32.mrf.mxu0
  %v1062 = vadd.f32 %v969, %v1061
  %v1063 = vpop.f32.mrf.mxu0
  %1064 = vmatprep.mubr.f32.mxu0 0.0
  %1065 = vmatmul.mubr.f32.gmra.mxu0 %v246
  %v1066 = vpop.f32.mrf.mxu0
  %v1067 = vadd.f32 %v971, %v1066
  %v1068 = vpop.f32.mrf.mxu0
  %1069 = vmatprep.mubr.f32.mxu0 0.0
  %1070 = vmatmul.mubr.f32.gmra.mxu0 %v249
  %v1071 = vpop.f32.mrf.mxu0
  %v1072 = vadd.f32 %v973, %v1071
  %v1073 = vpop.f32.mrf.mxu0
  %1074 = vmatprep.mubr.f32.mxu0 0.0
  %1075 = vmatmul.mubr.f32.gmra.mxu0 %v252
  %v1076 = vpop.f32.mrf.mxu0
  %v1077 = vadd.f32 %v975, %v1076
  %v1078 = vpop.f32.mrf.mxu0
  %1079 = vmatprep.mubr.f32.mxu0 0.0
  %1080 = vmatmul.mubr.f32.gmra.mxu0 %v255
  %v1081 = vpop.f32.mrf.mxu0
  %v1082 = vadd.f32 %v977, %v1081
  %v1083 = vpop.f32.mrf.mxu0
  %1084 = vmatprep.mubr.f32.mxu0 0.0
  %1085 = vmatmul.mubr.f32.gmra.mxu0 %v258
  %v1086 = vpop.f32.mrf.mxu0
  %v1087 = vadd.f32 %v979, %v1086
  %v1088 = vpop.f32.mrf.mxu0
  %1089 = vmatprep.mubr.f32.mxu0 0.0
  %1090 = vmatmul.mubr.f32.gmra.mxu0 %v261
  %v1091 = vpop.f32.mrf.mxu0
  %v1092 = vadd.f32 %v981, %v1091
  %v1093 = vpop.f32.mrf.mxu0
  %1094 = vdwg.mxu0
  %v1095 = vxor.u32 %v1057, 2147483648
  %v1096 = vxor.u32 %v1062, 2147483648
  %v1097 = vmul.f32 %v1095, 1.442695
  %v1098 = vpow.pop %v1097
  %v1099 = vmul.f32 %v1096, 1.442695
  %v1100 = vpow.pop %v1099
  %v1101 = vadd.f32 %v1098, 1.0
  %v1102 = vadd.f32 %v1100, 1.0
  %v1103 = vrcp.pop %v1101
  %v1104 = vmul.f32 1.0, %v1103
  %v1105 = vrcp.pop %v1102
  %v1106 = vmul.f32 1.0, %v1105
  %v1107 = vxor.u32 %v1067, 2147483648
  %v1108 = vxor.u32 %v1072, 2147483648
  %v1109 = vmul.f32 %v1107, 1.442695
  %v1110 = vpow.pop %v1109
  %v1111 = vmul.f32 %v1108, 1.442695
  %v1112 = vpow.pop %v1111
  %v1113 = vadd.f32 %v1110, 1.0
  %v1114 = vadd.f32 %v1112, 1.0
  %v1115 = vrcp.pop %v1113
  %v1116 = vmul.f32 1.0, %v1115
  %v1117 = vrcp.pop %v1114
  %v1118 = vmul.f32 1.0, %v1117
  %v1119 = vtanh.pop %v1077
  %v1120 = vtanh.pop %v1082
  %v1121 = vxor.u32 %v1087, 2147483648
  %v1122 = vxor.u32 %v1092, 2147483648
  %v1123 = vmul.f32 %v1121, 1.442695
  %v1124 = vpow.pop %v1123
  %v1125 = vmul.f32 %v1122, 1.442695
  %v1126 = vpow.pop %v1125
  %v1127 = vadd.f32 %v1124, 1.0
  %v1128 = vadd.f32 %v1126, 1.0
  %v1129 = vrcp.pop %v1127
  %v1130 = vmul.f32 1.0, %v1129
  %v1131 = vrcp.pop %v1128
  %v1132 = vmul.f32 1.0, %v1131
  %v1133 = vmul.f32 %v1116, %v793
  %v1134 = vmul.f32 %v1118, %v794
  %v1135 = vmul.f32 %v1104, %v1119
  %v1136 = vmul.f32 %v1106, %v1120
  %v1137 = vadd.f32 %v1133, %v1135
  %v1138 = vadd.f32 %v1134, %v1136
  %v1139 = vtanh.pop %v1137
  %v1140 = vtanh.pop %v1138
  %v1141 = vmul.f32 %v1130, %v1139
  %v1142 = vmul.f32 %v1132, %v1140
  %1143 = vmatprep.subr.mxu0 0.0
  %1144 = vmatpush1.msra.mxu0 0.0
  %1145 = vmatprep.subr.mxu0 0.0
  %1146 = vmatpush1.msra.mxu0 0.0
  %1147 = vmatprep.subr.mxu0 0.0
  %1148 = vmatpush1.msra.mxu0 0.0
  %1149 = vmatprep.subr.mxu0 0.0
  %1150 = vmatpush1.msra.mxu0 0.0
  %1151 = vmatprep.subr.mxu0 0.0
  %1152 = vmatpush1.msra.mxu0 0.0
  %1153 = vmatprep.subr.mxu0 0.0
  %1154 = vmatpush1.msra.mxu0 0.0
  %1155 = vmatprep.subr.mxu0 0.0
  %1156 = vmatpush1.msra.mxu0 0.0
  %1157 = vmatprep.subr.mxu0 0.0
  %1158 = vmatpush1.msra.mxu0 0.0
  %1159 = vmatprep.subr.mxu0 0.0
  %1160 = vmatpush1.msra.mxu0 0.0
  %1161 = vmatprep.subr.mxu0 0.0
  %1162 = vmatpush1.msra.mxu0 0.0
  %1163 = vmatprep.subr.mxu0 0.0
  %1164 = vmatpush1.msra.mxu0 0.0
  %1165 = vmatprep.subr.mxu0 0.0
  %1166 = vmatpush1.msra.mxu0 0.0
  %1167 = vmatprep.subr.mxu0 0.0
  %1168 = vmatpush1.msra.mxu0 0.0
  %1169 = vmatprep.subr.mxu0 0.0
  %1170 = vmatpush1.msra.mxu0 0.0
  %1171 = vmatprep.subr.mxu0 0.0
  %1172 = vmatpush1.msra.mxu0 %v1142
  %1173 = vmatprep.subr.mxu0 0.0
  %1174 = vmatpush1.msra.mxu0 %v1141
  %1175 = vmatprep.subr.mxu0 0.0
  %1176 = vmatpush2.msra.mxu0 0.0
  %1177 = vmatprep.subr.mxu0 0.0
  %1178 = vmatpush2.msra.mxu0 0.0
  %1179 = vmatprep.subr.mxu0 0.0
  %1180 = vmatpush2.msra.mxu0 0.0
  %1181 = vmatprep.subr.mxu0 0.0
  %1182 = vmatpush2.msra.mxu0 0.0
  %1183 = vmatprep.subr.mxu0 0.0
  %1184 = vmatpush2.msra.mxu0 0.0
  %1185 = vmatprep.subr.mxu0 0.0
  %1186 = vmatpush2.msra.mxu0 0.0
  %1187 = vmatprep.subr.mxu0 0.0
  %1188 = vmatpush2.msra.mxu0 0.0
  %1189 = vmatprep.subr.mxu0 0.0
  %1190 = vmatpush2.msra.mxu0 0.0
  %1191 = vmatprep.subr.mxu0 0.0
  %1192 = vmatpush2.msra.mxu0 0.0
  %1193 = vmatprep.subr.mxu0 0.0
  %1194 = vmatpush2.msra.mxu0 0.0
  %1195 = vmatprep.subr.mxu0 0.0
  %1196 = vmatpush2.msra.mxu0 0.0
  %1197 = vmatprep.subr.mxu0 0.0
  %1198 = vmatpush2.msra.mxu0 0.0
  %1199 = vmatprep.subr.mxu0 0.0
  %1200 = vmatpush2.msra.mxu0 0.0
  %1201 = vmatprep.subr.mxu0 0.0
  %1202 = vmatpush2.msra.mxu0 0.0
  %1203 = vmatprep.subr.mxu0 0.0
  %1204 = vmatpush2.msra.mxu0 0.0
  %1205 = vmatprep.subr.mxu0 0.0
  %1206 = vmatpush2.msra.mxu0 0.0
  %1207 = vmatprep.mubr.f32.mxu0 0.0
  %1208 = vmatmul.mubr.f32.gmra.mxu0 %v427
  %v1209 = vpop.f32.mrf.mxu0
  %v1210 = vadd.f32 %v419, %v1209
  %v1211 = vpop.f32.mrf.mxu0
  %1212 = vmatprep.mubr.f32.mxu0 0.0
  %1213 = vmatmul.mubr.f32.gmra.mxu0 %v430
  %v1214 = vpop.f32.mrf.mxu0
  %v1215 = vadd.f32 %v424, %v1214
  %v1216 = vpop.f32.mrf.mxu0
  %1217 = vdwg.mxu0
  %v1218 = vxor.u32 %v1210, 2147483648
  %v1219 = vxor.u32 %v1215, 2147483648
  %v1220 = vmul.f32 %v1218, 1.442695
  %v1221 = vpow.pop %v1220
  %v1222 = vmul.f32 %v1219, 1.442695
  %v1223 = vpow.pop %v1222
  %v1224 = vadd.f32 %v1221, 1.0
  %v1225 = vadd.f32 %v1223, 1.0
  %v1226 = vrcp.pop %v1224
  %v1227 = vmul.f32 1.0, %v1226
  %v1228 = vrcp.pop %v1225
  %v1229 = vmul.f32 1.0, %v1228
  %v1231 = vsel %vm532, %v1229, 0
  %1233 = vmatprep.subr.mxu0 0.0
  %1234 = vmatpush1.msra.mxu0 0.0
  %1235 = vmatprep.subr.mxu0 0.0
  %1236 = vmatpush1.msra.mxu0 0.0
  %1237 = vmatprep.subr.mxu0 0.0
  %1238 = vmatpush1.msra.mxu0 0.0
  %1239 = vmatprep.subr.mxu0 0.0
  %1240 = vmatpush1.msra.mxu0 0.0
  %1241 = vmatprep.subr.mxu0 0.0
  %1242 = vmatpush1.msra.mxu0 0.0
  %1243 = vmatprep.subr.mxu0 0.0
  %1244 = vmatpush1.msra.mxu0 0.0
  %1245 = vmatprep.subr.mxu0 0.0
  %1246 = vmatpush1.msra.mxu0 0.0
  %1247 = vmatprep.subr.mxu0 0.0
  %1248 = vmatpush1.msra.mxu0 0.0
  %1249 = vmatprep.subr.mxu0 0.0
  %1250 = vmatpush1.msra.mxu0 0.0
  %1251 = vmatprep.subr.mxu0 0.0
  %1252 = vmatpush1.msra.mxu0 0.0
  %1253 = vmatprep.subr.mxu0 0.0
  %1254 = vmatpush1.msra.mxu0 0.0
  %1255 = vmatprep.subr.mxu0 0.0
  %1256 = vmatpush1.msra.mxu0 0.0
  %1257 = vmatprep.subr.mxu0 0.0
  %1258 = vmatpush1.msra.mxu0 0.0
  %1259 = vmatprep.subr.mxu0 0.0
  %1260 = vmatpush1.msra.mxu0 0.0
  %1261 = vmatprep.subr.mxu0 0.0
  %1262 = vmatpush1.msra.mxu0 %v1231
  %1263 = vmatprep.subr.mxu0 0.0
  %1264 = vmatpush1.msra.mxu0 %v1227
  %1265 = vmatprep.subr.mxu0 0.0
  %1266 = vmatpush2.msra.mxu0 0.0
  %1267 = vmatprep.subr.mxu0 0.0
  %1268 = vmatpush2.msra.mxu0 0.0
  %1269 = vmatprep.subr.mxu0 0.0
  %1270 = vmatpush2.msra.mxu0 0.0
  %1271 = vmatprep.subr.mxu0 0.0
  %1272 = vmatpush2.msra.mxu0 0.0
  %1273 = vmatprep.subr.mxu0 0.0
  %1274 = vmatpush2.msra.mxu0 0.0
  %1275 = vmatprep.subr.mxu0 0.0
  %1276 = vmatpush2.msra.mxu0 0.0
  %1277 = vmatprep.subr.mxu0 0.0
  %1278 = vmatpush2.msra.mxu0 0.0
  %1279 = vmatprep.subr.mxu0 0.0
  %1280 = vmatpush2.msra.mxu0 0.0
  %1281 = vmatprep.subr.mxu0 0.0
  %1282 = vmatpush2.msra.mxu0 0.0
  %1283 = vmatprep.subr.mxu0 0.0
  %1284 = vmatpush2.msra.mxu0 0.0
  %1285 = vmatprep.subr.mxu0 0.0
  %1286 = vmatpush2.msra.mxu0 0.0
  %1287 = vmatprep.subr.mxu0 0.0
  %1288 = vmatpush2.msra.mxu0 0.0
  %1289 = vmatprep.subr.mxu0 0.0
  %1290 = vmatpush2.msra.mxu0 0.0
  %1291 = vmatprep.subr.mxu0 0.0
  %1292 = vmatpush2.msra.mxu0 0.0
  %1293 = vmatprep.subr.mxu0 0.0
  %1294 = vmatpush2.msra.mxu0 0.0
  %1295 = vmatprep.subr.mxu0 0.0
  %1296 = vmatpush2.msra.mxu0 0.0
  %1297 = vmatprep.mubr.f32.mxu0 0.0
  %1298 = vmatmul.mubr.f32.gmra.mxu0 %v530
  %v1299 = vpop.f32.mrf.mxu0
  %v1300 = vadd.f32 %v527, %v1299
  %v1301 = vpop.f32.mrf.mxu0
  %1302 = vdwg.mxu0
  %v1303 = vxor.u32 %v1300, 2147483648
  %v1304 = vmul.f32 %v1303, 1.442695
  %v1305 = vpow.pop %v1304
  %v1306 = vadd.f32 %v1305, 1.0
  %v1307 = vrcp.pop %v1306
  %v1308 = vmul.f32 1.0, %v1307
  %1309 = vst.msk [vmem:[%s8 + $0x2] sm:$0x1] %vm612, %v1308
  %1310 = vrot.lane.b32.xlu0 %v200, 122
  %v1311 = vpop.permute.xlu0 %1310
  %1312 = vrot.lane.b32.xlu0 %v205, 122
  %v1313 = vpop.permute.xlu0 %1312
  %1314 = vrot.lane.b32.xlu0 %v210, 122
  %v1315 = vpop.permute.xlu0 %1314
  %1316 = vrot.lane.b32.xlu0 %v215, 122
  %v1317 = vpop.permute.xlu0 %1316
  %1318 = vrot.lane.b32.xlu0 %v220, 122
  %v1319 = vpop.permute.xlu0 %1318
  %1320 = vrot.lane.b32.xlu0 %v225, 122
  %v1321 = vpop.permute.xlu0 %1320
  %1322 = vrot.lane.b32.xlu0 %v230, 122
  %v1323 = vpop.permute.xlu0 %1322
  %1324 = vrot.lane.b32.xlu0 %v235, 122
  %v1325 = vpop.permute.xlu0 %1324
  %1334 = vmatprep.subr.mxu0 0.0
  %1335 = vmatpush1.msra.mxu0 0.0
  %1336 = vmatprep.subr.mxu0 0.0
  %1337 = vmatpush1.msra.mxu0 0.0
  %1338 = vmatprep.subr.mxu0 0.0
  %1339 = vmatpush1.msra.mxu0 0.0
  %1340 = vmatprep.subr.mxu0 0.0
  %1341 = vmatpush1.msra.mxu0 0.0
  %1342 = vmatprep.subr.mxu0 0.0
  %1343 = vmatpush1.msra.mxu0 0.0
  %1344 = vmatprep.subr.mxu0 0.0
  %1345 = vmatpush1.msra.mxu0 0.0
  %1346 = vmatprep.subr.mxu0 0.0
  %1347 = vmatpush1.msra.mxu0 0.0
  %1348 = vmatprep.subr.mxu0 0.0
  %1349 = vmatpush1.msra.mxu0 0.0
  %1350 = vmatprep.subr.mxu0 0.0
  %1351 = vmatpush1.msra.mxu0 0.0
  %1352 = vmatprep.subr.mxu0 0.0
  %1353 = vmatpush1.msra.mxu0 0.0
  %1354 = vmatprep.subr.mxu0 0.0
  %1355 = vmatpush1.msra.mxu0 0.0
  %1356 = vmatprep.subr.mxu0 0.0
  %1357 = vmatpush1.msra.mxu0 0.0
  %1358 = vmatprep.subr.mxu0 0.0
  %1359 = vmatpush1.msra.mxu0 0.0
  %1360 = vmatprep.subr.mxu0 0.0
  %1361 = vmatpush1.msra.mxu0 0.0
  %1362 = vmatprep.subr.mxu0 0.0
  %1363 = vmatpush1.msra.mxu0 %v1142
  %1364 = vmatprep.subr.mxu0 0.0
  %1365 = vmatpush1.msra.mxu0 %v1141
  %1366 = vmatprep.subr.mxu0 0.0
  %1367 = vmatpush2.msra.mxu0 0.0
  %1368 = vmatprep.subr.mxu0 0.0
  %1369 = vmatpush2.msra.mxu0 0.0
  %1370 = vmatprep.subr.mxu0 0.0
  %1371 = vmatpush2.msra.mxu0 0.0
  %1372 = vmatprep.subr.mxu0 0.0
  %1373 = vmatpush2.msra.mxu0 0.0
  %1374 = vmatprep.subr.mxu0 0.0
  %1375 = vmatpush2.msra.mxu0 0.0
  %1376 = vmatprep.subr.mxu0 0.0
  %1377 = vmatpush2.msra.mxu0 0.0
  %1378 = vmatprep.subr.mxu0 0.0
  %1379 = vmatpush2.msra.mxu0 0.0
  %1380 = vmatprep.subr.mxu0 0.0
  %1381 = vmatpush2.msra.mxu0 0.0
  %1382 = vmatprep.subr.mxu0 0.0
  %1383 = vmatpush2.msra.mxu0 0.0
  %1384 = vmatprep.subr.mxu0 0.0
  %1385 = vmatpush2.msra.mxu0 0.0
  %1386 = vmatprep.subr.mxu0 0.0
  %1387 = vmatpush2.msra.mxu0 0.0
  %1388 = vmatprep.subr.mxu0 0.0
  %1389 = vmatpush2.msra.mxu0 0.0
  %1390 = vmatprep.subr.mxu0 0.0
  %1391 = vmatpush2.msra.mxu0 0.0
  %1392 = vmatprep.subr.mxu0 0.0
  %1393 = vmatpush2.msra.mxu0 0.0
  %1394 = vmatprep.subr.mxu0 0.0
  %1395 = vmatpush2.msra.mxu0 0.0
  %1396 = vmatprep.subr.mxu0 0.0
  %1397 = vmatpush2.msra.mxu0 0.0
  %1398 = vmatprep.mubr.f32.mxu0 0.0
  %1399 = vmatmul.mubr.f32.gmra.mxu0 %v240
  %v1400 = vpop.f32.mrf.mxu0
  %v1401 = vadd.f32 %v1311, %v1400
  %v1402 = vpop.f32.mrf.mxu0
  %1403 = vmatprep.mubr.f32.mxu0 0.0
  %1404 = vmatmul.mubr.f32.gmra.mxu0 %v243
  %v1405 = vpop.f32.mrf.mxu0
  %v1406 = vadd.f32 %v1313, %v1405
  %v1407 = vpop.f32.mrf.mxu0
  %1408 = vmatprep.mubr.f32.mxu0 0.0
  %1409 = vmatmul.mubr.f32.gmra.mxu0 %v246
  %v1410 = vpop.f32.mrf.mxu0
  %v1411 = vadd.f32 %v1315, %v1410
  %v1412 = vpop.f32.mrf.mxu0
  %1413 = vmatprep.mubr.f32.mxu0 0.0
  %1414 = vmatmul.mubr.f32.gmra.mxu0 %v249
  %v1415 = vpop.f32.mrf.mxu0
  %v1416 = vadd.f32 %v1317, %v1415
  %v1417 = vpop.f32.mrf.mxu0
  %1418 = vmatprep.mubr.f32.mxu0 0.0
  %1419 = vmatmul.mubr.f32.gmra.mxu0 %v252
  %v1420 = vpop.f32.mrf.mxu0
  %v1421 = vadd.f32 %v1319, %v1420
  %v1422 = vpop.f32.mrf.mxu0
  %1423 = vmatprep.mubr.f32.mxu0 0.0
  %1424 = vmatmul.mubr.f32.gmra.mxu0 %v255
  %v1425 = vpop.f32.mrf.mxu0
  %v1426 = vadd.f32 %v1321, %v1425
  %v1427 = vpop.f32.mrf.mxu0
  %1428 = vmatprep.mubr.f32.mxu0 0.0
  %1429 = vmatmul.mubr.f32.gmra.mxu0 %v258
  %v1430 = vpop.f32.mrf.mxu0
  %v1431 = vadd.f32 %v1323, %v1430
  %v1432 = vpop.f32.mrf.mxu0
  %1433 = vmatprep.mubr.f32.mxu0 0.0
  %1434 = vmatmul.mubr.f32.gmra.mxu0 %v261
  %v1435 = vpop.f32.mrf.mxu0
  %v1436 = vadd.f32 %v1325, %v1435
  %v1437 = vpop.f32.mrf.mxu0
  %1438 = vdwg.mxu0
  %v1439 = vxor.u32 %v1401, 2147483648
  %v1440 = vxor.u32 %v1406, 2147483648
  %v1441 = vmul.f32 %v1439, 1.442695
  %v1442 = vpow.pop %v1441
  %v1443 = vmul.f32 %v1440, 1.442695
  %v1444 = vpow.pop %v1443
  %v1445 = vadd.f32 %v1442, 1.0
  %v1446 = vadd.f32 %v1444, 1.0
  %v1447 = vrcp.pop %v1445
  %v1448 = vmul.f32 1.0, %v1447
  %v1449 = vrcp.pop %v1446
  %v1450 = vmul.f32 1.0, %v1449
  %v1451 = vxor.u32 %v1411, 2147483648
  %v1452 = vxor.u32 %v1416, 2147483648
  %v1453 = vmul.f32 %v1451, 1.442695
  %v1454 = vpow.pop %v1453
  %v1455 = vmul.f32 %v1452, 1.442695
  %v1456 = vpow.pop %v1455
  %v1457 = vadd.f32 %v1454, 1.0
  %v1458 = vadd.f32 %v1456, 1.0
  %v1459 = vrcp.pop %v1457
  %v1460 = vmul.f32 1.0, %v1459
  %v1461 = vrcp.pop %v1458
  %v1462 = vmul.f32 1.0, %v1461
  %v1463 = vtanh.pop %v1421
  %v1464 = vtanh.pop %v1426
  %v1465 = vxor.u32 %v1431, 2147483648
  %v1466 = vxor.u32 %v1436, 2147483648
  %v1467 = vmul.f32 %v1465, 1.442695
  %v1468 = vpow.pop %v1467
  %v1469 = vmul.f32 %v1466, 1.442695
  %v1470 = vpow.pop %v1469
  %v1471 = vadd.f32 %v1468, 1.0
  %v1472 = vadd.f32 %v1470, 1.0
  %v1473 = vrcp.pop %v1471
  %v1474 = vmul.f32 1.0, %v1473
  %v1475 = vrcp.pop %v1472
  %v1476 = vmul.f32 1.0, %v1475
  %v1477 = vmul.f32 %v1460, %v1137
  %v1478 = vmul.f32 %v1462, %v1138
  %v1479 = vmul.f32 %v1448, %v1463
  %v1480 = vmul.f32 %v1450, %v1464
  %v1481 = vadd.f32 %v1477, %v1479
  %v1482 = vadd.f32 %v1478, %v1480
  %v1483 = vtanh.pop %v1481
  %v1484 = vtanh.pop %v1482
  %v1485 = vmul.f32 %v1474, %v1483
  %v1486 = vmul.f32 %v1476, %v1484
  %1487 = vmatprep.subr.mxu0 0.0
  %1488 = vmatpush1.msra.mxu0 0.0
  %1489 = vmatprep.subr.mxu0 0.0
  %1490 = vmatpush1.msra.mxu0 0.0
  %1491 = vmatprep.subr.mxu0 0.0
  %1492 = vmatpush1.msra.mxu0 0.0
  %1493 = vmatprep.subr.mxu0 0.0
  %1494 = vmatpush1.msra.mxu0 0.0
  %1495 = vmatprep.subr.mxu0 0.0
  %1496 = vmatpush1.msra.mxu0 0.0
  %1497 = vmatprep.subr.mxu0 0.0
  %1498 = vmatpush1.msra.mxu0 0.0
  %1499 = vmatprep.subr.mxu0 0.0
  %1500 = vmatpush1.msra.mxu0 0.0
  %1501 = vmatprep.subr.mxu0 0.0
  %1502 = vmatpush1.msra.mxu0 0.0
  %1503 = vmatprep.subr.mxu0 0.0
  %1504 = vmatpush1.msra.mxu0 0.0
  %1505 = vmatprep.subr.mxu0 0.0
  %1506 = vmatpush1.msra.mxu0 0.0
  %1507 = vmatprep.subr.mxu0 0.0
  %1508 = vmatpush1.msra.mxu0 0.0
  %1509 = vmatprep.subr.mxu0 0.0
  %1510 = vmatpush1.msra.mxu0 0.0
  %1511 = vmatprep.subr.mxu0 0.0
  %1512 = vmatpush1.msra.mxu0 0.0
  %1513 = vmatprep.subr.mxu0 0.0
  %1514 = vmatpush1.msra.mxu0 0.0
  %1515 = vmatprep.subr.mxu0 0.0
  %1516 = vmatpush1.msra.mxu0 %v1486
  %1517 = vmatprep.subr.mxu0 0.0
  %1518 = vmatpush1.msra.mxu0 %v1485
  %1519 = vmatprep.subr.mxu0 0.0
  %1520 = vmatpush2.msra.mxu0 0.0
  %1521 = vmatprep.subr.mxu0 0.0
  %1522 = vmatpush2.msra.mxu0 0.0
  %1523 = vmatprep.subr.mxu0 0.0
  %1524 = vmatpush2.msra.mxu0 0.0
  %1525 = vmatprep.subr.mxu0 0.0
  %1526 = vmatpush2.msra.mxu0 0.0
  %1527 = vmatprep.subr.mxu0 0.0
  %1528 = vmatpush2.msra.mxu0 0.0
  %1529 = vmatprep.subr.mxu0 0.0
  %1530 = vmatpush2.msra.mxu0 0.0
  %1531 = vmatprep.subr.mxu0 0.0
  %1532 = vmatpush2.msra.mxu0 0.0
  %1533 = vmatprep.subr.mxu0 0.0
  %1534 = vmatpush2.msra.mxu0 0.0
  %1535 = vmatprep.subr.mxu0 0.0
  %1536 = vmatpush2.msra.mxu0 0.0
  %1537 = vmatprep.subr.mxu0 0.0
  %1538 = vmatpush2.msra.mxu0 0.0
  %1539 = vmatprep.subr.mxu0 0.0
  %1540 = vmatpush2.msra.mxu0 0.0
  %1541 = vmatprep.subr.mxu0 0.0
  %1542 = vmatpush2.msra.mxu0 0.0
  %1543 = vmatprep.subr.mxu0 0.0
  %1544 = vmatpush2.msra.mxu0 0.0
  %1545 = vmatprep.subr.mxu0 0.0
  %1546 = vmatpush2.msra.mxu0 0.0
  %1547 = vmatprep.subr.mxu0 0.0
  %1548 = vmatpush2.msra.mxu0 0.0
  %1549 = vmatprep.subr.mxu0 0.0
  %1550 = vmatpush2.msra.mxu0 0.0
  %1551 = vmatprep.mubr.f32.mxu0 0.0
  %1552 = vmatmul.mubr.f32.gmra.mxu0 %v427
  %v1553 = vpop.f32.mrf.mxu0
  %v1554 = vadd.f32 %v419, %v1553
  %v1555 = vpop.f32.mrf.mxu0
  %1556 = vmatprep.mubr.f32.mxu0 0.0
  %1557 = vmatmul.mubr.f32.gmra.mxu0 %v430
  %v1558 = vpop.f32.mrf.mxu0
  %v1559 = vadd.f32 %v424, %v1558
  %v1560 = vpop.f32.mrf.mxu0
  %1561 = vdwg.mxu0
  %v1562 = vxor.u32 %v1554, 2147483648
  %v1563 = vxor.u32 %v1559, 2147483648
  %v1564 = vmul.f32 %v1562, 1.442695
  %v1565 = vpow.pop %v1564
  %v1566 = vmul.f32 %v1563, 1.442695
  %v1567 = vpow.pop %v1566
  %v1568 = vadd.f32 %v1565, 1.0
  %v1569 = vadd.f32 %v1567, 1.0
  %v1570 = vrcp.pop %v1568
  %v1571 = vmul.f32 1.0, %v1570
  %v1572 = vrcp.pop %v1569
  %v1573 = vmul.f32 1.0, %v1572
  %v1575 = vsel %vm532, %v1573, 0
  %1577 = vmatprep.subr.mxu0 0.0
  %1578 = vmatpush1.msra.mxu0 0.0
  %1579 = vmatprep.subr.mxu0 0.0
  %1580 = vmatpush1.msra.mxu0 0.0
  %1581 = vmatprep.subr.mxu0 0.0
  %1582 = vmatpush1.msra.mxu0 0.0
  %1583 = vmatprep.subr.mxu0 0.0
  %1584 = vmatpush1.msra.mxu0 0.0
  %1585 = vmatprep.subr.mxu0 0.0
  %1586 = vmatpush1.msra.mxu0 0.0
  %1587 = vmatprep.subr.mxu0 0.0
  %1588 = vmatpush1.msra.mxu0 0.0
  %1589 = vmatprep.subr.mxu0 0.0
  %1590 = vmatpush1.msra.mxu0 0.0
  %1591 = vmatprep.subr.mxu0 0.0
  %1592 = vmatpush1.msra.mxu0 0.0
  %1593 = vmatprep.subr.mxu0 0.0
  %1594 = vmatpush1.msra.mxu0 0.0
  %1595 = vmatprep.subr.mxu0 0.0
  %1596 = vmatpush1.msra.mxu0 0.0
  %1597 = vmatprep.subr.mxu0 0.0
  %1598 = vmatpush1.msra.mxu0 0.0
  %1599 = vmatprep.subr.mxu0 0.0
  %1600 = vmatpush1.msra.mxu0 0.0
  %1601 = vmatprep.subr.mxu0 0.0
  %1602 = vmatpush1.msra.mxu0 0.0
  %1603 = vmatprep.subr.mxu0 0.0
  %1604 = vmatpush1.msra.mxu0 0.0
  %1605 = vmatprep.subr.mxu0 0.0
  %1606 = vmatpush1.msra.mxu0 %v1575
  %1607 = vmatprep.subr.mxu0 0.0
  %1608 = vmatpush1.msra.mxu0 %v1571
  %1609 = vmatprep.subr.mxu0 0.0
  %1610 = vmatpush2.msra.mxu0 0.0
  %1611 = vmatprep.subr.mxu0 0.0
  %1612 = vmatpush2.msra.mxu0 0.0
  %1613 = vmatprep.subr.mxu0 0.0
  %1614 = vmatpush2.msra.mxu0 0.0
  %1615 = vmatprep.subr.mxu0 0.0
  %1616 = vmatpush2.msra.mxu0 0.0
  %1617 = vmatprep.subr.mxu0 0.0
  %1618 = vmatpush2.msra.mxu0 0.0
  %1619 = vmatprep.subr.mxu0 0.0
  %1620 = vmatpush2.msra.mxu0 0.0
  %1621 = vmatprep.subr.mxu0 0.0
  %1622 = vmatpush2.msra.mxu0 0.0
  %1623 = vmatprep.subr.mxu0 0.0
  %1624 = vmatpush2.msra.mxu0 0.0
  %1625 = vmatprep.subr.mxu0 0.0
  %1626 = vmatpush2.msra.mxu0 0.0
  %1627 = vmatprep.subr.mxu0 0.0
  %1628 = vmatpush2.msra.mxu0 0.0
  %1629 = vmatprep.subr.mxu0 0.0
  %1630 = vmatpush2.msra.mxu0 0.0
  %1631 = vmatprep.subr.mxu0 0.0
  %1632 = vmatpush2.msra.mxu0 0.0
  %1633 = vmatprep.subr.mxu0 0.0
  %1634 = vmatpush2.msra.mxu0 0.0
  %1635 = vmatprep.subr.mxu0 0.0
  %1636 = vmatpush2.msra.mxu0 0.0
  %1637 = vmatprep.subr.mxu0 0.0
  %1638 = vmatpush2.msra.mxu0 0.0
  %1639 = vmatprep.subr.mxu0 0.0
  %1640 = vmatpush2.msra.mxu0 0.0
  %1641 = vmatprep.mubr.f32.mxu0 0.0
  %1642 = vmatmul.mubr.f32.gmra.mxu0 %v530
  %v1643 = vpop.f32.mrf.mxu0
  %v1644 = vadd.f32 %v527, %v1643
  %v1645 = vpop.f32.mrf.mxu0
  %1646 = vdwg.mxu0
  %v1647 = vxor.u32 %v1644, 2147483648
  %v1648 = vmul.f32 %v1647, 1.442695
  %v1649 = vpow.pop %v1648
  %v1650 = vadd.f32 %v1649, 1.0
  %v1651 = vrcp.pop %v1650
  %v1652 = vmul.f32 1.0, %v1651
  %1653 = vst.msk [vmem:[%s8 + $0x3] sm:$0x1] %vm612, %v1652
  %1654 = vrot.lane.b32.xlu0 %v200, 120
  %v1655 = vpop.permute.xlu0 %1654
  %1656 = vrot.lane.b32.xlu0 %v205, 120
  %v1657 = vpop.permute.xlu0 %1656
  %1658 = vrot.lane.b32.xlu0 %v210, 120
  %v1659 = vpop.permute.xlu0 %1658
  %1660 = vrot.lane.b32.xlu0 %v215, 120
  %v1661 = vpop.permute.xlu0 %1660
  %1662 = vrot.lane.b32.xlu0 %v220, 120
  %v1663 = vpop.permute.xlu0 %1662
  %1664 = vrot.lane.b32.xlu0 %v225, 120
  %v1665 = vpop.permute.xlu0 %1664
  %1666 = vrot.lane.b32.xlu0 %v230, 120
  %v1667 = vpop.permute.xlu0 %1666
  %1668 = vrot.lane.b32.xlu0 %v235, 120
  %v1669 = vpop.permute.xlu0 %1668
  %1678 = vmatprep.subr.mxu0 0.0
  %1679 = vmatpush1.msra.mxu0 0.0
  %1680 = vmatprep.subr.mxu0 0.0
  %1681 = vmatpush1.msra.mxu0 0.0
  %1682 = vmatprep.subr.mxu0 0.0
  %1683 = vmatpush1.msra.mxu0 0.0
  %1684 = vmatprep.subr.mxu0 0.0
  %1685 = vmatpush1.msra.mxu0 0.0
  %1686 = vmatprep.subr.mxu0 0.0
  %1687 = vmatpush1.msra.mxu0 0.0
  %1688 = vmatprep.subr.mxu0 0.0
  %1689 = vmatpush1.msra.mxu0 0.0
  %1690 = vmatprep.subr.mxu0 0.0
  %1691 = vmatpush1.msra.mxu0 0.0
  %1692 = vmatprep.subr.mxu0 0.0
  %1693 = vmatpush1.msra.mxu0 0.0
  %1694 = vmatprep.subr.mxu0 0.0
  %1695 = vmatpush1.msra.mxu0 0.0
  %1696 = vmatprep.subr.mxu0 0.0
  %1697 = vmatpush1.msra.mxu0 0.0
  %1698 = vmatprep.subr.mxu0 0.0
  %1699 = vmatpush1.msra.mxu0 0.0
  %1700 = vmatprep.subr.mxu0 0.0
  %1701 = vmatpush1.msra.mxu0 0.0
  %1702 = vmatprep.subr.mxu0 0.0
  %1703 = vmatpush1.msra.mxu0 0.0
  %1704 = vmatprep.subr.mxu0 0.0
  %1705 = vmatpush1.msra.mxu0 0.0
  %1706 = vmatprep.subr.mxu0 0.0
  %1707 = vmatpush1.msra.mxu0 %v1486
  %1708 = vmatprep.subr.mxu0 0.0
  %1709 = vmatpush1.msra.mxu0 %v1485
  %1710 = vmatprep.subr.mxu0 0.0
  %1711 = vmatpush2.msra.mxu0 0.0
  %1712 = vmatprep.subr.mxu0 0.0
  %1713 = vmatpush2.msra.mxu0 0.0
  %1714 = vmatprep.subr.mxu0 0.0
  %1715 = vmatpush2.msra.mxu0 0.0
  %1716 = vmatprep.subr.mxu0 0.0
  %1717 = vmatpush2.msra.mxu0 0.0
  %1718 = vmatprep.subr.mxu0 0.0
  %1719 = vmatpush2.msra.mxu0 0.0
  %1720 = vmatprep.subr.mxu0 0.0
  %1721 = vmatpush2.msra.mxu0 0.0
  %1722 = vmatprep.subr.mxu0 0.0
  %1723 = vmatpush2.msra.mxu0 0.0
  %1724 = vmatprep.subr.mxu0 0.0
  %1725 = vmatpush2.msra.mxu0 0.0
  %1726 = vmatprep.subr.mxu0 0.0
  %1727 = vmatpush2.msra.mxu0 0.0
  %1728 = vmatprep.subr.mxu0 0.0
  %1729 = vmatpush2.msra.mxu0 0.0
  %1730 = vmatprep.subr.mxu0 0.0
  %1731 = vmatpush2.msra.mxu0 0.0
  %1732 = vmatprep.subr.mxu0 0.0
  %1733 = vmatpush2.msra.mxu0 0.0
  %1734 = vmatprep.subr.mxu0 0.0
  %1735 = vmatpush2.msra.mxu0 0.0
  %1736 = vmatprep.subr.mxu0 0.0
  %1737 = vmatpush2.msra.mxu0 0.0
  %1738 = vmatprep.subr.mxu0 0.0
  %1739 = vmatpush2.msra.mxu0 0.0
  %1740 = vmatprep.subr.mxu0 0.0
  %1741 = vmatpush2.msra.mxu0 0.0
  %1742 = vmatprep.mubr.f32.mxu0 0.0
  %1743 = vmatmul.mubr.f32.gmra.mxu0 %v240
  %v1744 = vpop.f32.mrf.mxu0
  %v1745 = vadd.f32 %v1655, %v1744
  %v1746 = vpop.f32.mrf.mxu0
  %1747 = vmatprep.mubr.f32.mxu0 0.0
  %1748 = vmatmul.mubr.f32.gmra.mxu0 %v243
  %v1749 = vpop.f32.mrf.mxu0
  %v1750 = vadd.f32 %v1657, %v1749
  %v1751 = vpop.f32.mrf.mxu0
  %1752 = vmatprep.mubr.f32.mxu0 0.0
  %1753 = vmatmul.mubr.f32.gmra.mxu0 %v246
  %v1754 = vpop.f32.mrf.mxu0
  %v1755 = vadd.f32 %v1659, %v1754
  %v1756 = vpop.f32.mrf.mxu0
  %1757 = vmatprep.mubr.f32.mxu0 0.0
  %1758 = vmatmul.mubr.f32.gmra.mxu0 %v249
  %v1759 = vpop.f32.mrf.mxu0
  %v1760 = vadd.f32 %v1661, %v1759
  %v1761 = vpop.f32.mrf.mxu0
  %1762 = vmatprep.mubr.f32.mxu0 0.0
  %1763 = vmatmul.mubr.f32.gmra.mxu0 %v252
  %v1764 = vpop.f32.mrf.mxu0
  %v1765 = vadd.f32 %v1663, %v1764
  %v1766 = vpop.f32.mrf.mxu0
  %1767 = vmatprep.mubr.f32.mxu0 0.0
  %1768 = vmatmul.mubr.f32.gmra.mxu0 %v255
  %v1769 = vpop.f32.mrf.mxu0
  %v1770 = vadd.f32 %v1665, %v1769
  %v1771 = vpop.f32.mrf.mxu0
  %1772 = vmatprep.mubr.f32.mxu0 0.0
  %1773 = vmatmul.mubr.f32.gmra.mxu0 %v258
  %v1774 = vpop.f32.mrf.mxu0
  %v1775 = vadd.f32 %v1667, %v1774
  %v1776 = vpop.f32.mrf.mxu0
  %1777 = vmatprep.mubr.f32.mxu0 0.0
  %1778 = vmatmul.mubr.f32.gmra.mxu0 %v261
  %v1779 = vpop.f32.mrf.mxu0
  %v1780 = vadd.f32 %v1669, %v1779
  %v1781 = vpop.f32.mrf.mxu0
  %1782 = vdwg.mxu0
  %v1783 = vxor.u32 %v1745, 2147483648
  %v1784 = vxor.u32 %v1750, 2147483648
  %v1785 = vmul.f32 %v1783, 1.442695
  %v1786 = vpow.pop %v1785
  %v1787 = vmul.f32 %v1784, 1.442695
  %v1788 = vpow.pop %v1787
  %v1789 = vadd.f32 %v1786, 1.0
  %v1790 = vadd.f32 %v1788, 1.0
  %v1791 = vrcp.pop %v1789
  %v1792 = vmul.f32 1.0, %v1791
  %v1793 = vrcp.pop %v1790
  %v1794 = vmul.f32 1.0, %v1793
  %v1795 = vxor.u32 %v1755, 2147483648
  %v1796 = vxor.u32 %v1760, 2147483648
  %v1797 = vmul.f32 %v1795, 1.442695
  %v1798 = vpow.pop %v1797
  %v1799 = vmul.f32 %v1796, 1.442695
  %v1800 = vpow.pop %v1799
  %v1801 = vadd.f32 %v1798, 1.0
  %v1802 = vadd.f32 %v1800, 1.0
  %v1803 = vrcp.pop %v1801
  %v1804 = vmul.f32 1.0, %v1803
  %v1805 = vrcp.pop %v1802
  %v1806 = vmul.f32 1.0, %v1805
  %v1807 = vtanh.pop %v1765
  %v1808 = vtanh.pop %v1770
  %v1809 = vxor.u32 %v1775, 2147483648
  %v1810 = vxor.u32 %v1780, 2147483648
  %v1811 = vmul.f32 %v1809, 1.442695
  %v1812 = vpow.pop %v1811
  %v1813 = vmul.f32 %v1810, 1.442695
  %v1814 = vpow.pop %v1813
  %v1815 = vadd.f32 %v1812, 1.0
  %v1816 = vadd.f32 %v1814, 1.0
  %v1817 = vrcp.pop %v1815
  %v1818 = vmul.f32 1.0, %v1817
  %v1819 = vrcp.pop %v1816
  %v1820 = vmul.f32 1.0, %v1819
  %v1821 = vmul.f32 %v1804, %v1481
  %v1822 = vmul.f32 %v1806, %v1482
  %v1823 = vmul.f32 %v1792, %v1807
  %v1824 = vmul.f32 %v1794, %v1808
  %v1825 = vadd.f32 %v1821, %v1823
  %v1826 = vadd.f32 %v1822, %v1824
  %v1827 = vtanh.pop %v1825
  %v1828 = vtanh.pop %v1826
  %v1829 = vmul.f32 %v1818, %v1827
  %v1830 = vmul.f32 %v1820, %v1828
  %1831 = vmatprep.subr.mxu0 0.0
  %1832 = vmatpush1.msra.mxu0 0.0
  %1833 = vmatprep.subr.mxu0 0.0
  %1834 = vmatpush1.msra.mxu0 0.0
  %1835 = vmatprep.subr.mxu0 0.0
  %1836 = vmatpush1.msra.mxu0 0.0
  %1837 = vmatprep.subr.mxu0 0.0
  %1838 = vmatpush1.msra.mxu0 0.0
  %1839 = vmatprep.subr.mxu0 0.0
  %1840 = vmatpush1.msra.mxu0 0.0
  %1841 = vmatprep.subr.mxu0 0.0
  %1842 = vmatpush1.msra.mxu0 0.0
  %1843 = vmatprep.subr.mxu0 0.0
  %1844 = vmatpush1.msra.mxu0 0.0
  %1845 = vmatprep.subr.mxu0 0.0
  %1846 = vmatpush1.msra.mxu0 0.0
  %1847 = vmatprep.subr.mxu0 0.0
  %1848 = vmatpush1.msra.mxu0 0.0
  %1849 = vmatprep.subr.mxu0 0.0
  %1850 = vmatpush1.msra.mxu0 0.0
  %1851 = vmatprep.subr.mxu0 0.0
  %1852 = vmatpush1.msra.mxu0 0.0
  %1853 = vmatprep.subr.mxu0 0.0
  %1854 = vmatpush1.msra.mxu0 0.0
  %1855 = vmatprep.subr.mxu0 0.0
  %1856 = vmatpush1.msra.mxu0 0.0
  %1857 = vmatprep.subr.mxu0 0.0
  %1858 = vmatpush1.msra.mxu0 0.0
  %1859 = vmatprep.subr.mxu0 0.0
  %1860 = vmatpush1.msra.mxu0 %v1830
  %1861 = vmatprep.subr.mxu0 0.0
  %1862 = vmatpush1.msra.mxu0 %v1829
  %1863 = vmatprep.subr.mxu0 0.0
  %1864 = vmatpush2.msra.mxu0 0.0
  %1865 = vmatprep.subr.mxu0 0.0
  %1866 = vmatpush2.msra.mxu0 0.0
  %1867 = vmatprep.subr.mxu0 0.0
  %1868 = vmatpush2.msra.mxu0 0.0
  %1869 = vmatprep.subr.mxu0 0.0
  %1870 = vmatpush2.msra.mxu0 0.0
  %1871 = vmatprep.subr.mxu0 0.0
  %1872 = vmatpush2.msra.mxu0 0.0
  %1873 = vmatprep.subr.mxu0 0.0
  %1874 = vmatpush2.msra.mxu0 0.0
  %1875 = vmatprep.subr.mxu0 0.0
  %1876 = vmatpush2.msra.mxu0 0.0
  %1877 = vmatprep.subr.mxu0 0.0
  %1878 = vmatpush2.msra.mxu0 0.0
  %1879 = vmatprep.subr.mxu0 0.0
  %1880 = vmatpush2.msra.mxu0 0.0
  %1881 = vmatprep.subr.mxu0 0.0
  %1882 = vmatpush2.msra.mxu0 0.0
  %1883 = vmatprep.subr.mxu0 0.0
  %1884 = vmatpush2.msra.mxu0 0.0
  %1885 = vmatprep.subr.mxu0 0.0
  %1886 = vmatpush2.msra.mxu0 0.0
  %1887 = vmatprep.subr.mxu0 0.0
  %1888 = vmatpush2.msra.mxu0 0.0
  %1889 = vmatprep.subr.mxu0 0.0
  %1890 = vmatpush2.msra.mxu0 0.0
  %1891 = vmatprep.subr.mxu0 0.0
  %1892 = vmatpush2.msra.mxu0 0.0
  %1893 = vmatprep.subr.mxu0 0.0
  %1894 = vmatpush2.msra.mxu0 0.0
  %1895 = vmatprep.mubr.f32.mxu0 0.0
  %1896 = vmatmul.mubr.f32.gmra.mxu0 %v427
  %v1897 = vpop.f32.mrf.mxu0
  %v1898 = vadd.f32 %v419, %v1897
  %v1899 = vpop.f32.mrf.mxu0
  %1900 = vmatprep.mubr.f32.mxu0 0.0
  %1901 = vmatmul.mubr.f32.gmra.mxu0 %v430
  %v1902 = vpop.f32.mrf.mxu0
  %v1903 = vadd.f32 %v424, %v1902
  %v1904 = vpop.f32.mrf.mxu0
  %1905 = vdwg.mxu0
  %v1906 = vxor.u32 %v1898, 2147483648
  %v1907 = vxor.u32 %v1903, 2147483648
  %v1908 = vmul.f32 %v1906, 1.442695
  %v1909 = vpow.pop %v1908
  %v1910 = vmul.f32 %v1907, 1.442695
  %v1911 = vpow.pop %v1910
  %v1912 = vadd.f32 %v1909, 1.0
  %v1913 = vadd.f32 %v1911, 1.0
  %v1914 = vrcp.pop %v1912
  %v1915 = vmul.f32 1.0, %v1914
  %v1916 = vrcp.pop %v1913
  %v1917 = vmul.f32 1.0, %v1916
  %v1919 = vsel %vm532, %v1917, 0
  %1921 = vmatprep.subr.mxu0 0.0
  %1922 = vmatpush1.msra.mxu0 0.0
  %1923 = vmatprep.subr.mxu0 0.0
  %1924 = vmatpush1.msra.mxu0 0.0
  %1925 = vmatprep.subr.mxu0 0.0
  %1926 = vmatpush1.msra.mxu0 0.0
  %1927 = vmatprep.subr.mxu0 0.0
  %1928 = vmatpush1.msra.mxu0 0.0
  %1929 = vmatprep.subr.mxu0 0.0
  %1930 = vmatpush1.msra.mxu0 0.0
  %1931 = vmatprep.subr.mxu0 0.0
  %1932 = vmatpush1.msra.mxu0 0.0
  %1933 = vmatprep.subr.mxu0 0.0
  %1934 = vmatpush1.msra.mxu0 0.0
  %1935 = vmatprep.subr.mxu0 0.0
  %1936 = vmatpush1.msra.mxu0 0.0
  %1937 = vmatprep.subr.mxu0 0.0
  %1938 = vmatpush1.msra.mxu0 0.0
  %1939 = vmatprep.subr.mxu0 0.0
  %1940 = vmatpush1.msra.mxu0 0.0
  %1941 = vmatprep.subr.mxu0 0.0
  %1942 = vmatpush1.msra.mxu0 0.0
  %1943 = vmatprep.subr.mxu0 0.0
  %1944 = vmatpush1.msra.mxu0 0.0
  %1945 = vmatprep.subr.mxu0 0.0
  %1946 = vmatpush1.msra.mxu0 0.0
  %1947 = vmatprep.subr.mxu0 0.0
  %1948 = vmatpush1.msra.mxu0 0.0
  %1949 = vmatprep.subr.mxu0 0.0
  %1950 = vmatpush1.msra.mxu0 %v1919
  %1951 = vmatprep.subr.mxu0 0.0
  %1952 = vmatpush1.msra.mxu0 %v1915
  %1953 = vmatprep.subr.mxu0 0.0
  %1954 = vmatpush2.msra.mxu0 0.0
  %1955 = vmatprep.subr.mxu0 0.0
  %1956 = vmatpush2.msra.mxu0 0.0
  %1957 = vmatprep.subr.mxu0 0.0
  %1958 = vmatpush2.msra.mxu0 0.0
  %1959 = vmatprep.subr.mxu0 0.0
  %1960 = vmatpush2.msra.mxu0 0.0
  %1961 = vmatprep.subr.mxu0 0.0
  %1962 = vmatpush2.msra.mxu0 0.0
  %1963 = vmatprep.subr.mxu0 0.0
  %1964 = vmatpush2.msra.mxu0 0.0
  %1965 = vmatprep.subr.mxu0 0.0
  %1966 = vmatpush2.msra.mxu0 0.0
  %1967 = vmatprep.subr.mxu0 0.0
  %1968 = vmatpush2.msra.mxu0 0.0
  %1969 = vmatprep.subr.mxu0 0.0
  %1970 = vmatpush2.msra.mxu0 0.0
  %1971 = vmatprep.subr.mxu0 0.0
  %1972 = vmatpush2.msra.mxu0 0.0
  %1973 = vmatprep.subr.mxu0 0.0
  %1974 = vmatpush2.msra.mxu0 0.0
  %1975 = vmatprep.subr.mxu0 0.0
  %1976 = vmatpush2.msra.mxu0 0.0
  %1977 = vmatprep.subr.mxu0 0.0
  %1978 = vmatpush2.msra.mxu0 0.0
  %1979 = vmatprep.subr.mxu0 0.0
  %1980 = vmatpush2.msra.mxu0 0.0
  %1981 = vmatprep.subr.mxu0 0.0
  %1982 = vmatpush2.msra.mxu0 0.0
  %1983 = vmatprep.subr.mxu0 0.0
  %1984 = vmatpush2.msra.mxu0 0.0
  %1985 = vmatprep.mubr.f32.mxu0 0.0
  %1986 = vmatmul.mubr.f32.gmra.mxu0 %v530
  %v1987 = vpop.f32.mrf.mxu0
  %v1988 = vadd.f32 %v527, %v1987
  %v1989 = vpop.f32.mrf.mxu0
  %1990 = vdwg.mxu0
  %v1991 = vxor.u32 %v1988, 2147483648
  %v1992 = vmul.f32 %v1991, 1.442695
  %v1993 = vpow.pop %v1992
  %v1994 = vadd.f32 %v1993, 1.0
  %v1995 = vrcp.pop %v1994
  %v1996 = vmul.f32 1.0, %v1995
  %1997 = vst.msk [vmem:[%s8 + $0x4] sm:$0x1] %vm612, %v1996
  %1998 = vrot.lane.b32.xlu0 %v200, 118
  %v1999 = vpop.permute.xlu0 %1998
  %2000 = vrot.lane.b32.xlu0 %v205, 118
  %v2001 = vpop.permute.xlu0 %2000
  %2002 = vrot.lane.b32.xlu0 %v210, 118
  %v2003 = vpop.permute.xlu0 %2002
  %2004 = vrot.lane.b32.xlu0 %v215, 118
  %v2005 = vpop.permute.xlu0 %2004
  %2006 = vrot.lane.b32.xlu0 %v220, 118
  %v2007 = vpop.permute.xlu0 %2006
  %2008 = vrot.lane.b32.xlu0 %v225, 118
  %v2009 = vpop.permute.xlu0 %2008
  %2010 = vrot.lane.b32.xlu0 %v230, 118
  %v2011 = vpop.permute.xlu0 %2010
  %2012 = vrot.lane.b32.xlu0 %v235, 118
  %v2013 = vpop.permute.xlu0 %2012
  %2022 = vmatprep.subr.mxu0 0.0
  %2023 = vmatpush1.msra.mxu0 0.0
  %2024 = vmatprep.subr.mxu0 0.0
  %2025 = vmatpush1.msra.mxu0 0.0
  %2026 = vmatprep.subr.mxu0 0.0
  %2027 = vmatpush1.msra.mxu0 0.0
  %2028 = vmatprep.subr.mxu0 0.0
  %2029 = vmatpush1.msra.mxu0 0.0
  %2030 = vmatprep.subr.mxu0 0.0
  %2031 = vmatpush1.msra.mxu0 0.0
  %2032 = vmatprep.subr.mxu0 0.0
  %2033 = vmatpush1.msra.mxu0 0.0
  %2034 = vmatprep.subr.mxu0 0.0
  %2035 = vmatpush1.msra.mxu0 0.0
  %2036 = vmatprep.subr.mxu0 0.0
  %2037 = vmatpush1.msra.mxu0 0.0
  %2038 = vmatprep.subr.mxu0 0.0
  %2039 = vmatpush1.msra.mxu0 0.0
  %2040 = vmatprep.subr.mxu0 0.0
  %2041 = vmatpush1.msra.mxu0 0.0
  %2042 = vmatprep.subr.mxu0 0.0
  %2043 = vmatpush1.msra.mxu0 0.0
  %2044 = vmatprep.subr.mxu0 0.0
  %2045 = vmatpush1.msra.mxu0 0.0
  %2046 = vmatprep.subr.mxu0 0.0
  %2047 = vmatpush1.msra.mxu0 0.0
  %2048 = vmatprep.subr.mxu0 0.0
  %2049 = vmatpush1.msra.mxu0 0.0
  %2050 = vmatprep.subr.mxu0 0.0
  %2051 = vmatpush1.msra.mxu0 %v1830
  %2052 = vmatprep.subr.mxu0 0.0
  %2053 = vmatpush1.msra.mxu0 %v1829
  %2054 = vmatprep.subr.mxu0 0.0
  %2055 = vmatpush2.msra.mxu0 0.0
  %2056 = vmatprep.subr.mxu0 0.0
  %2057 = vmatpush2.msra.mxu0 0.0
  %2058 = vmatprep.subr.mxu0 0.0
  %2059 = vmatpush2.msra.mxu0 0.0
  %2060 = vmatprep.subr.mxu0 0.0
  %2061 = vmatpush2.msra.mxu0 0.0
  %2062 = vmatprep.subr.mxu0 0.0
  %2063 = vmatpush2.msra.mxu0 0.0
  %2064 = vmatprep.subr.mxu0 0.0
  %2065 = vmatpush2.msra.mxu0 0.0
  %2066 = vmatprep.subr.mxu0 0.0
  %2067 = vmatpush2.msra.mxu0 0.0
  %2068 = vmatprep.subr.mxu0 0.0
  %2069 = vmatpush2.msra.mxu0 0.0
  %2070 = vmatprep.subr.mxu0 0.0
  %2071 = vmatpush2.msra.mxu0 0.0
  %2072 = vmatprep.subr.mxu0 0.0
  %2073 = vmatpush2.msra.mxu0 0.0
  %2074 = vmatprep.subr.mxu0 0.0
  %2075 = vmatpush2.msra.mxu0 0.0
  %2076 = vmatprep.subr.mxu0 0.0
  %2077 = vmatpush2.msra.mxu0 0.0
  %2078 = vmatprep.subr.mxu0 0.0
  %2079 = vmatpush2.msra.mxu0 0.0
  %2080 = vmatprep.subr.mxu0 0.0
  %2081 = vmatpush2.msra.mxu0 0.0
  %2082 = vmatprep.subr.mxu0 0.0
  %2083 = vmatpush2.msra.mxu0 0.0
  %2084 = vmatprep.subr.mxu0 0.0
  %2085 = vmatpush2.msra.mxu0 0.0
  %2086 = vmatprep.mubr.f32.mxu0 0.0
  %2087 = vmatmul.mubr.f32.gmra.mxu0 %v240
  %v2088 = vpop.f32.mrf.mxu0
  %v2089 = vadd.f32 %v1999, %v2088
  %v2090 = vpop.f32.mrf.mxu0
  %2091 = vmatprep.mubr.f32.mxu0 0.0
  %2092 = vmatmul.mubr.f32.gmra.mxu0 %v243
  %v2093 = vpop.f32.mrf.mxu0
  %v2094 = vadd.f32 %v2001, %v2093
  %v2095 = vpop.f32.mrf.mxu0
  %2096 = vmatprep.mubr.f32.mxu0 0.0
  %2097 = vmatmul.mubr.f32.gmra.mxu0 %v246
  %v2098 = vpop.f32.mrf.mxu0
  %v2099 = vadd.f32 %v2003, %v2098
  %v2100 = vpop.f32.mrf.mxu0
  %2101 = vmatprep.mubr.f32.mxu0 0.0
  %2102 = vmatmul.mubr.f32.gmra.mxu0 %v249
  %v2103 = vpop.f32.mrf.mxu0
  %v2104 = vadd.f32 %v2005, %v2103
  %v2105 = vpop.f32.mrf.mxu0
  %2106 = vmatprep.mubr.f32.mxu0 0.0
  %2107 = vmatmul.mubr.f32.gmra.mxu0 %v252
  %v2108 = vpop.f32.mrf.mxu0
  %v2109 = vadd.f32 %v2007, %v2108
  %v2110 = vpop.f32.mrf.mxu0
  %2111 = vmatprep.mubr.f32.mxu0 0.0
  %2112 = vmatmul.mubr.f32.gmra.mxu0 %v255
  %v2113 = vpop.f32.mrf.mxu0
  %v2114 = vadd.f32 %v2009, %v2113
  %v2115 = vpop.f32.mrf.mxu0
  %2116 = vmatprep.mubr.f32.mxu0 0.0
  %2117 = vmatmul.mubr.f32.gmra.mxu0 %v258
  %v2118 = vpop.f32.mrf.mxu0
  %v2119 = vadd.f32 %v2011, %v2118
  %v2120 = vpop.f32.mrf.mxu0
  %2121 = vmatprep.mubr.f32.mxu0 0.0
  %2122 = vmatmul.mubr.f32.gmra.mxu0 %v261
  %v2123 = vpop.f32.mrf.mxu0
  %v2124 = vadd.f32 %v2013, %v2123
  %v2125 = vpop.f32.mrf.mxu0
  %2126 = vdwg.mxu0
  %v2127 = vxor.u32 %v2089, 2147483648
  %v2128 = vxor.u32 %v2094, 2147483648
  %v2129 = vmul.f32 %v2127, 1.442695
  %v2130 = vpow.pop %v2129
  %v2131 = vmul.f32 %v2128, 1.442695
  %v2132 = vpow.pop %v2131
  %v2133 = vadd.f32 %v2130, 1.0
  %v2134 = vadd.f32 %v2132, 1.0
  %v2135 = vrcp.pop %v2133
  %v2136 = vmul.f32 1.0, %v2135
  %v2137 = vrcp.pop %v2134
  %v2138 = vmul.f32 1.0, %v2137
  %v2139 = vxor.u32 %v2099, 2147483648
  %v2140 = vxor.u32 %v2104, 2147483648
  %v2141 = vmul.f32 %v2139, 1.442695
  %v2142 = vpow.pop %v2141
  %v2143 = vmul.f32 %v2140, 1.442695
  %v2144 = vpow.pop %v2143
  %v2145 = vadd.f32 %v2142, 1.0
  %v2146 = vadd.f32 %v2144, 1.0
  %v2147 = vrcp.pop %v2145
  %v2148 = vmul.f32 1.0, %v2147
  %v2149 = vrcp.pop %v2146
  %v2150 = vmul.f32 1.0, %v2149
  %v2151 = vtanh.pop %v2109
  %v2152 = vtanh.pop %v2114
  %v2153 = vxor.u32 %v2119, 2147483648
  %v2154 = vxor.u32 %v2124, 2147483648
  %v2155 = vmul.f32 %v2153, 1.442695
  %v2156 = vpow.pop %v2155
  %v2157 = vmul.f32 %v2154, 1.442695
  %v2158 = vpow.pop %v2157
  %v2159 = vadd.f32 %v2156, 1.0
  %v2160 = vadd.f32 %v2158, 1.0
  %v2161 = vrcp.pop %v2159
  %v2162 = vmul.f32 1.0, %v2161
  %v2163 = vrcp.pop %v2160
  %v2164 = vmul.f32 1.0, %v2163
  %v2165 = vmul.f32 %v2148, %v1825
  %v2166 = vmul.f32 %v2150, %v1826
  %v2167 = vmul.f32 %v2136, %v2151
  %v2168 = vmul.f32 %v2138, %v2152
  %v2169 = vadd.f32 %v2165, %v2167
  %v2170 = vadd.f32 %v2166, %v2168
  %v2171 = vtanh.pop %v2169
  %v2172 = vtanh.pop %v2170
  %v2173 = vmul.f32 %v2162, %v2171
  %v2174 = vmul.f32 %v2164, %v2172
  %2175 = vmatprep.subr.mxu0 0.0
  %2176 = vmatpush1.msra.mxu0 0.0
  %2177 = vmatprep.subr.mxu0 0.0
  %2178 = vmatpush1.msra.mxu0 0.0
  %2179 = vmatprep.subr.mxu0 0.0
  %2180 = vmatpush1.msra.mxu0 0.0
  %2181 = vmatprep.subr.mxu0 0.0
  %2182 = vmatpush1.msra.mxu0 0.0
  %2183 = vmatprep.subr.mxu0 0.0
  %2184 = vmatpush1.msra.mxu0 0.0
  %2185 = vmatprep.subr.mxu0 0.0
  %2186 = vmatpush1.msra.mxu0 0.0
  %2187 = vmatprep.subr.mxu0 0.0
  %2188 = vmatpush1.msra.mxu0 0.0
  %2189 = vmatprep.subr.mxu0 0.0
  %2190 = vmatpush1.msra.mxu0 0.0
  %2191 = vmatprep.subr.mxu0 0.0
  %2192 = vmatpush1.msra.mxu0 0.0
  %2193 = vmatprep.subr.mxu0 0.0
  %2194 = vmatpush1.msra.mxu0 0.0
  %2195 = vmatprep.subr.mxu0 0.0
  %2196 = vmatpush1.msra.mxu0 0.0
  %2197 = vmatprep.subr.mxu0 0.0
  %2198 = vmatpush1.msra.mxu0 0.0
  %2199 = vmatprep.subr.mxu0 0.0
  %2200 = vmatpush1.msra.mxu0 0.0
  %2201 = vmatprep.subr.mxu0 0.0
  %2202 = vmatpush1.msra.mxu0 0.0
  %2203 = vmatprep.subr.mxu0 0.0
  %2204 = vmatpush1.msra.mxu0 %v2174
  %2205 = vmatprep.subr.mxu0 0.0
  %2206 = vmatpush1.msra.mxu0 %v2173
  %2207 = vmatprep.subr.mxu0 0.0
  %2208 = vmatpush2.msra.mxu0 0.0
  %2209 = vmatprep.subr.mxu0 0.0
  %2210 = vmatpush2.msra.mxu0 0.0
  %2211 = vmatprep.subr.mxu0 0.0
  %2212 = vmatpush2.msra.mxu0 0.0
  %2213 = vmatprep.subr.mxu0 0.0
  %2214 = vmatpush2.msra.mxu0 0.0
  %2215 = vmatprep.subr.mxu0 0.0
  %2216 = vmatpush2.msra.mxu0 0.0
  %2217 = vmatprep.subr.mxu0 0.0
  %2218 = vmatpush2.msra.mxu0 0.0
  %2219 = vmatprep.subr.mxu0 0.0
  %2220 = vmatpush2.msra.mxu0 0.0
  %2221 = vmatprep.subr.mxu0 0.0
  %2222 = vmatpush2.msra.mxu0 0.0
  %2223 = vmatprep.subr.mxu0 0.0
  %2224 = vmatpush2.msra.mxu0 0.0
  %2225 = vmatprep.subr.mxu0 0.0
  %2226 = vmatpush2.msra.mxu0 0.0
  %2227 = vmatprep.subr.mxu0 0.0
  %2228 = vmatpush2.msra.mxu0 0.0
  %2229 = vmatprep.subr.mxu0 0.0
  %2230 = vmatpush2.msra.mxu0 0.0
  %2231 = vmatprep.subr.mxu0 0.0
  %2232 = vmatpush2.msra.mxu0 0.0
  %2233 = vmatprep.subr.mxu0 0.0
  %2234 = vmatpush2.msra.mxu0 0.0
  %2235 = vmatprep.subr.mxu0 0.0
  %2236 = vmatpush2.msra.mxu0 0.0
  %2237 = vmatprep.subr.mxu0 0.0
  %2238 = vmatpush2.msra.mxu0 0.0
  %2239 = vmatprep.mubr.f32.mxu0 0.0
  %2240 = vmatmul.mubr.f32.gmra.mxu0 %v427
  %v2241 = vpop.f32.mrf.mxu0
  %v2242 = vadd.f32 %v419, %v2241
  %v2243 = vpop.f32.mrf.mxu0
  %2244 = vmatprep.mubr.f32.mxu0 0.0
  %2245 = vmatmul.mubr.f32.gmra.mxu0 %v430
  %v2246 = vpop.f32.mrf.mxu0
  %v2247 = vadd.f32 %v424, %v2246
  %v2248 = vpop.f32.mrf.mxu0
  %2249 = vdwg.mxu0
  %v2250 = vxor.u32 %v2242, 2147483648
  %v2251 = vxor.u32 %v2247, 2147483648
  %v2252 = vmul.f32 %v2250, 1.442695
  %v2253 = vpow.pop %v2252
  %v2254 = vmul.f32 %v2251, 1.442695
  %v2255 = vpow.pop %v2254
  %v2256 = vadd.f32 %v2253, 1.0
  %v2257 = vadd.f32 %v2255, 1.0
  %v2258 = vrcp.pop %v2256
  %v2259 = vmul.f32 1.0, %v2258
  %v2260 = vrcp.pop %v2257
  %v2261 = vmul.f32 1.0, %v2260
  %v2263 = vsel %vm532, %v2261, 0
  %2265 = vmatprep.subr.mxu0 0.0
  %2266 = vmatpush1.msra.mxu0 0.0
  %2267 = vmatprep.subr.mxu0 0.0
  %2268 = vmatpush1.msra.mxu0 0.0
  %2269 = vmatprep.subr.mxu0 0.0
  %2270 = vmatpush1.msra.mxu0 0.0
  %2271 = vmatprep.subr.mxu0 0.0
  %2272 = vmatpush1.msra.mxu0 0.0
  %2273 = vmatprep.subr.mxu0 0.0
  %2274 = vmatpush1.msra.mxu0 0.0
  %2275 = vmatprep.subr.mxu0 0.0
  %2276 = vmatpush1.msra.mxu0 0.0
  %2277 = vmatprep.subr.mxu0 0.0
  %2278 = vmatpush1.msra.mxu0 0.0
  %2279 = vmatprep.subr.mxu0 0.0
  %2280 = vmatpush1.msra.mxu0 0.0
  %2281 = vmatprep.subr.mxu0 0.0
  %2282 = vmatpush1.msra.mxu0 0.0
  %2283 = vmatprep.subr.mxu0 0.0
  %2284 = vmatpush1.msra.mxu0 0.0
  %2285 = vmatprep.subr.mxu0 0.0
  %2286 = vmatpush1.msra.mxu0 0.0
  %2287 = vmatprep.subr.mxu0 0.0
  %2288 = vmatpush1.msra.mxu0 0.0
  %2289 = vmatprep.subr.mxu0 0.0
  %2290 = vmatpush1.msra.mxu0 0.0
  %2291 = vmatprep.subr.mxu0 0.0
  %2292 = vmatpush1.msra.mxu0 0.0
  %2293 = vmatprep.subr.mxu0 0.0
  %2294 = vmatpush1.msra.mxu0 %v2263
  %2295 = vmatprep.subr.mxu0 0.0
  %2296 = vmatpush1.msra.mxu0 %v2259
  %2297 = vmatprep.subr.mxu0 0.0
  %2298 = vmatpush2.msra.mxu0 0.0
  %2299 = vmatprep.subr.mxu0 0.0
  %2300 = vmatpush2.msra.mxu0 0.0
  %2301 = vmatprep.subr.mxu0 0.0
  %2302 = vmatpush2.msra.mxu0 0.0
  %2303 = vmatprep.subr.mxu0 0.0
  %2304 = vmatpush2.msra.mxu0 0.0
  %2305 = vmatprep.subr.mxu0 0.0
  %2306 = vmatpush2.msra.mxu0 0.0
  %2307 = vmatprep.subr.mxu0 0.0
  %2308 = vmatpush2.msra.mxu0 0.0
  %2309 = vmatprep.subr.mxu0 0.0
  %2310 = vmatpush2.msra.mxu0 0.0
  %2311 = vmatprep.subr.mxu0 0.0
  %2312 = vmatpush2.msra.mxu0 0.0
  %2313 = vmatprep.subr.mxu0 0.0
  %2314 = vmatpush2.msra.mxu0 0.0
  %2315 = vmatprep.subr.mxu0 0.0
  %2316 = vmatpush2.msra.mxu0 0.0
  %2317 = vmatprep.subr.mxu0 0.0
  %2318 = vmatpush2.msra.mxu0 0.0
  %2319 = vmatprep.subr.mxu0 0.0
  %2320 = vmatpush2.msra.mxu0 0.0
  %2321 = vmatprep.subr.mxu0 0.0
  %2322 = vmatpush2.msra.mxu0 0.0
  %2323 = vmatprep.subr.mxu0 0.0
  %2324 = vmatpush2.msra.mxu0 0.0
  %2325 = vmatprep.subr.mxu0 0.0
  %2326 = vmatpush2.msra.mxu0 0.0
  %2327 = vmatprep.subr.mxu0 0.0
  %2328 = vmatpush2.msra.mxu0 0.0
  %2329 = vmatprep.mubr.f32.mxu0 0.0
  %2330 = vmatmul.mubr.f32.gmra.mxu0 %v530
  %v2331 = vpop.f32.mrf.mxu0
  %v2332 = vadd.f32 %v527, %v2331
  %v2333 = vpop.f32.mrf.mxu0
  %2334 = vdwg.mxu0
  %v2335 = vxor.u32 %v2332, 2147483648
  %v2336 = vmul.f32 %v2335, 1.442695
  %v2337 = vpow.pop %v2336
  %v2338 = vadd.f32 %v2337, 1.0
  %v2339 = vrcp.pop %v2338
  %v2340 = vmul.f32 1.0, %v2339
  %2341 = vst.msk [vmem:[%s8 + $0x5] sm:$0x1] %vm612, %v2340
  %2342 = vrot.lane.b32.xlu0 %v200, 116
  %v2343 = vpop.permute.xlu0 %2342
  %2344 = vrot.lane.b32.xlu0 %v205, 116
  %v2345 = vpop.permute.xlu0 %2344
  %2346 = vrot.lane.b32.xlu0 %v210, 116
  %v2347 = vpop.permute.xlu0 %2346
  %2348 = vrot.lane.b32.xlu0 %v215, 116
  %v2349 = vpop.permute.xlu0 %2348
  %2350 = vrot.lane.b32.xlu0 %v220, 116
  %v2351 = vpop.permute.xlu0 %2350
  %2352 = vrot.lane.b32.xlu0 %v225, 116
  %v2353 = vpop.permute.xlu0 %2352
  %2354 = vrot.lane.b32.xlu0 %v230, 116
  %v2355 = vpop.permute.xlu0 %2354
  %2356 = vrot.lane.b32.xlu0 %v235, 116
  %v2357 = vpop.permute.xlu0 %2356
  %2366 = vmatprep.subr.mxu0 0.0
  %2367 = vmatpush1.msra.mxu0 0.0
  %2368 = vmatprep.subr.mxu0 0.0
  %2369 = vmatpush1.msra.mxu0 0.0
  %2370 = vmatprep.subr.mxu0 0.0
  %2371 = vmatpush1.msra.mxu0 0.0
  %2372 = vmatprep.subr.mxu0 0.0
  %2373 = vmatpush1.msra.mxu0 0.0
  %2374 = vmatprep.subr.mxu0 0.0
  %2375 = vmatpush1.msra.mxu0 0.0
  %2376 = vmatprep.subr.mxu0 0.0
  %2377 = vmatpush1.msra.mxu0 0.0
  %2378 = vmatprep.subr.mxu0 0.0
  %2379 = vmatpush1.msra.mxu0 0.0
  %2380 = vmatprep.subr.mxu0 0.0
  %2381 = vmatpush1.msra.mxu0 0.0
  %2382 = vmatprep.subr.mxu0 0.0
  %2383 = vmatpush1.msra.mxu0 0.0
  %2384 = vmatprep.subr.mxu0 0.0
  %2385 = vmatpush1.msra.mxu0 0.0
  %2386 = vmatprep.subr.mxu0 0.0
  %2387 = vmatpush1.msra.mxu0 0.0
  %2388 = vmatprep.subr.mxu0 0.0
  %2389 = vmatpush1.msra.mxu0 0.0
  %2390 = vmatprep.subr.mxu0 0.0
  %2391 = vmatpush1.msra.mxu0 0.0
  %2392 = vmatprep.subr.mxu0 0.0
  %2393 = vmatpush1.msra.mxu0 0.0
  %2394 = vmatprep.subr.mxu0 0.0
  %2395 = vmatpush1.msra.mxu0 %v2174
  %2396 = vmatprep.subr.mxu0 0.0
  %2397 = vmatpush1.msra.mxu0 %v2173
  %2398 = vmatprep.subr.mxu0 0.0
  %2399 = vmatpush2.msra.mxu0 0.0
  %2400 = vmatprep.subr.mxu0 0.0
  %2401 = vmatpush2.msra.mxu0 0.0
  %2402 = vmatprep.subr.mxu0 0.0
  %2403 = vmatpush2.msra.mxu0 0.0
  %2404 = vmatprep.subr.mxu0 0.0
  %2405 = vmatpush2.msra.mxu0 0.0
  %2406 = vmatprep.subr.mxu0 0.0
  %2407 = vmatpush2.msra.mxu0 0.0
  %2408 = vmatprep.subr.mxu0 0.0
  %2409 = vmatpush2.msra.mxu0 0.0
  %2410 = vmatprep.subr.mxu0 0.0
  %2411 = vmatpush2.msra.mxu0 0.0
  %2412 = vmatprep.subr.mxu0 0.0
  %2413 = vmatpush2.msra.mxu0 0.0
  %2414 = vmatprep.subr.mxu0 0.0
  %2415 = vmatpush2.msra.mxu0 0.0
  %2416 = vmatprep.subr.mxu0 0.0
  %2417 = vmatpush2.msra.mxu0 0.0
  %2418 = vmatprep.subr.mxu0 0.0
  %2419 = vmatpush2.msra.mxu0 0.0
  %2420 = vmatprep.subr.mxu0 0.0
  %2421 = vmatpush2.msra.mxu0 0.0
  %2422 = vmatprep.subr.mxu0 0.0
  %2423 = vmatpush2.msra.mxu0 0.0
  %2424 = vmatprep.subr.mxu0 0.0
  %2425 = vmatpush2.msra.mxu0 0.0
  %2426 = vmatprep.subr.mxu0 0.0
  %2427 = vmatpush2.msra.mxu0 0.0
  %2428 = vmatprep.subr.mxu0 0.0
  %2429 = vmatpush2.msra.mxu0 0.0
  %2430 = vmatprep.mubr.f32.mxu0 0.0
  %2431 = vmatmul.mubr.f32.gmra.mxu0 %v240
  %v2432 = vpop.f32.mrf.mxu0
  %v2433 = vadd.f32 %v2343, %v2432
  %v2434 = vpop.f32.mrf.mxu0
  %2435 = vmatprep.mubr.f32.mxu0 0.0
  %2436 = vmatmul.mubr.f32.gmra.mxu0 %v243
  %v2437 = vpop.f32.mrf.mxu0
  %v2438 = vadd.f32 %v2345, %v2437
  %v2439 = vpop.f32.mrf.mxu0
  %2440 = vmatprep.mubr.f32.mxu0 0.0
  %2441 = vmatmul.mubr.f32.gmra.mxu0 %v246
  %v2442 = vpop.f32.mrf.mxu0
  %v2443 = vadd.f32 %v2347, %v2442
  %v2444 = vpop.f32.mrf.mxu0
  %2445 = vmatprep.mubr.f32.mxu0 0.0
  %2446 = vmatmul.mubr.f32.gmra.mxu0 %v249
  %v2447 = vpop.f32.mrf.mxu0
  %v2448 = vadd.f32 %v2349, %v2447
  %v2449 = vpop.f32.mrf.mxu0
  %2450 = vmatprep.mubr.f32.mxu0 0.0
  %2451 = vmatmul.mubr.f32.gmra.mxu0 %v252
  %v2452 = vpop.f32.mrf.mxu0
  %v2453 = vadd.f32 %v2351, %v2452
  %v2454 = vpop.f32.mrf.mxu0
  %2455 = vmatprep.mubr.f32.mxu0 0.0
  %2456 = vmatmul.mubr.f32.gmra.mxu0 %v255
  %v2457 = vpop.f32.mrf.mxu0
  %v2458 = vadd.f32 %v2353, %v2457
  %v2459 = vpop.f32.mrf.mxu0
  %2460 = vmatprep.mubr.f32.mxu0 0.0
  %2461 = vmatmul.mubr.f32.gmra.mxu0 %v258
  %v2462 = vpop.f32.mrf.mxu0
  %v2463 = vadd.f32 %v2355, %v2462
  %v2464 = vpop.f32.mrf.mxu0
  %2465 = vmatprep.mubr.f32.mxu0 0.0
  %2466 = vmatmul.mubr.f32.gmra.mxu0 %v261
  %v2467 = vpop.f32.mrf.mxu0
  %v2468 = vadd.f32 %v2357, %v2467
  %v2469 = vpop.f32.mrf.mxu0
  %2470 = vdwg.mxu0
  %v2471 = vxor.u32 %v2433, 2147483648
  %v2472 = vxor.u32 %v2438, 2147483648
  %v2473 = vmul.f32 %v2471, 1.442695
  %v2474 = vpow.pop %v2473
  %v2475 = vmul.f32 %v2472, 1.442695
  %v2476 = vpow.pop %v2475
  %v2477 = vadd.f32 %v2474, 1.0
  %v2478 = vadd.f32 %v2476, 1.0
  %v2479 = vrcp.pop %v2477
  %v2480 = vmul.f32 1.0, %v2479
  %v2481 = vrcp.pop %v2478
  %v2482 = vmul.f32 1.0, %v2481
  %v2483 = vxor.u32 %v2443, 2147483648
  %v2484 = vxor.u32 %v2448, 2147483648
  %v2485 = vmul.f32 %v2483, 1.442695
  %v2486 = vpow.pop %v2485
  %v2487 = vmul.f32 %v2484, 1.442695
  %v2488 = vpow.pop %v2487
  %v2489 = vadd.f32 %v2486, 1.0
  %v2490 = vadd.f32 %v2488, 1.0
  %v2491 = vrcp.pop %v2489
  %v2492 = vmul.f32 1.0, %v2491
  %v2493 = vrcp.pop %v2490
  %v2494 = vmul.f32 1.0, %v2493
  %v2495 = vtanh.pop %v2453
  %v2496 = vtanh.pop %v2458
  %v2497 = vxor.u32 %v2463, 2147483648
  %v2498 = vxor.u32 %v2468, 2147483648
  %v2499 = vmul.f32 %v2497, 1.442695
  %v2500 = vpow.pop %v2499
  %v2501 = vmul.f32 %v2498, 1.442695
  %v2502 = vpow.pop %v2501
  %v2503 = vadd.f32 %v2500, 1.0
  %v2504 = vadd.f32 %v2502, 1.0
  %v2505 = vrcp.pop %v2503
  %v2506 = vmul.f32 1.0, %v2505
  %v2507 = vrcp.pop %v2504
  %v2508 = vmul.f32 1.0, %v2507
  %v2509 = vmul.f32 %v2492, %v2169
  %v2510 = vmul.f32 %v2494, %v2170
  %v2511 = vmul.f32 %v2480, %v2495
  %v2512 = vmul.f32 %v2482, %v2496
  %v2513 = vadd.f32 %v2509, %v2511
  %v2514 = vadd.f32 %v2510, %v2512
  %v2515 = vtanh.pop %v2513
  %v2516 = vtanh.pop %v2514
  %v2517 = vmul.f32 %v2506, %v2515
  %v2518 = vmul.f32 %v2508, %v2516
  %2519 = vmatprep.subr.mxu0 0.0
  %2520 = vmatpush1.msra.mxu0 0.0
  %2521 = vmatprep.subr.mxu0 0.0
  %2522 = vmatpush1.msra.mxu0 0.0
  %2523 = vmatprep.subr.mxu0 0.0
  %2524 = vmatpush1.msra.mxu0 0.0
  %2525 = vmatprep.subr.mxu0 0.0
  %2526 = vmatpush1.msra.mxu0 0.0
  %2527 = vmatprep.subr.mxu0 0.0
  %2528 = vmatpush1.msra.mxu0 0.0
  %2529 = vmatprep.subr.mxu0 0.0
  %2530 = vmatpush1.msra.mxu0 0.0
  %2531 = vmatprep.subr.mxu0 0.0
  %2532 = vmatpush1.msra.mxu0 0.0
  %2533 = vmatprep.subr.mxu0 0.0
  %2534 = vmatpush1.msra.mxu0 0.0
  %2535 = vmatprep.subr.mxu0 0.0
  %2536 = vmatpush1.msra.mxu0 0.0
  %2537 = vmatprep.subr.mxu0 0.0
  %2538 = vmatpush1.msra.mxu0 0.0
  %2539 = vmatprep.subr.mxu0 0.0
  %2540 = vmatpush1.msra.mxu0 0.0
  %2541 = vmatprep.subr.mxu0 0.0
  %2542 = vmatpush1.msra.mxu0 0.0
  %2543 = vmatprep.subr.mxu0 0.0
  %2544 = vmatpush1.msra.mxu0 0.0
  %2545 = vmatprep.subr.mxu0 0.0
  %2546 = vmatpush1.msra.mxu0 0.0
  %2547 = vmatprep.subr.mxu0 0.0
  %2548 = vmatpush1.msra.mxu0 %v2518
  %2549 = vmatprep.subr.mxu0 0.0
  %2550 = vmatpush1.msra.mxu0 %v2517
  %2551 = vmatprep.subr.mxu0 0.0
  %2552 = vmatpush2.msra.mxu0 0.0
  %2553 = vmatprep.subr.mxu0 0.0
  %2554 = vmatpush2.msra.mxu0 0.0
  %2555 = vmatprep.subr.mxu0 0.0
  %2556 = vmatpush2.msra.mxu0 0.0
  %2557 = vmatprep.subr.mxu0 0.0
  %2558 = vmatpush2.msra.mxu0 0.0
  %2559 = vmatprep.subr.mxu0 0.0
  %2560 = vmatpush2.msra.mxu0 0.0
  %2561 = vmatprep.subr.mxu0 0.0
  %2562 = vmatpush2.msra.mxu0 0.0
  %2563 = vmatprep.subr.mxu0 0.0
  %2564 = vmatpush2.msra.mxu0 0.0
  %2565 = vmatprep.subr.mxu0 0.0
  %2566 = vmatpush2.msra.mxu0 0.0
  %2567 = vmatprep.subr.mxu0 0.0
  %2568 = vmatpush2.msra.mxu0 0.0
  %2569 = vmatprep.subr.mxu0 0.0
  %2570 = vmatpush2.msra.mxu0 0.0
  %2571 = vmatprep.subr.mxu0 0.0
  %2572 = vmatpush2.msra.mxu0 0.0
  %2573 = vmatprep.subr.mxu0 0.0
  %2574 = vmatpush2.msra.mxu0 0.0
  %2575 = vmatprep.subr.mxu0 0.0
  %2576 = vmatpush2.msra.mxu0 0.0
  %2577 = vmatprep.subr.mxu0 0.0
  %2578 = vmatpush2.msra.mxu0 0.0
  %2579 = vmatprep.subr.mxu0 0.0
  %2580 = vmatpush2.msra.mxu0 0.0
  %2581 = vmatprep.subr.mxu0 0.0
  %2582 = vmatpush2.msra.mxu0 0.0
  %2583 = vmatprep.mubr.f32.mxu0 0.0
  %2584 = vmatmul.mubr.f32.gmra.mxu0 %v427
  %v2585 = vpop.f32.mrf.mxu0
  %v2586 = vadd.f32 %v419, %v2585
  %v2587 = vpop.f32.mrf.mxu0
  %2588 = vmatprep.mubr.f32.mxu0 0.0
  %2589 = vmatmul.mubr.f32.gmra.mxu0 %v430
  %v2590 = vpop.f32.mrf.mxu0
  %v2591 = vadd.f32 %v424, %v2590
  %v2592 = vpop.f32.mrf.mxu0
  %2593 = vdwg.mxu0
  %v2594 = vxor.u32 %v2586, 2147483648
  %v2595 = vxor.u32 %v2591, 2147483648
  %v2596 = vmul.f32 %v2594, 1.442695
  %v2597 = vpow.pop %v2596
  %v2598 = vmul.f32 %v2595, 1.442695
  %v2599 = vpow.pop %v2598
  %v2600 = vadd.f32 %v2597, 1.0
  %v2601 = vadd.f32 %v2599, 1.0
  %v2602 = vrcp.pop %v2600
  %v2603 = vmul.f32 1.0, %v2602
  %v2604 = vrcp.pop %v2601
  %v2605 = vmul.f32 1.0, %v2604
  %v2607 = vsel %vm532, %v2605, 0
  %2609 = vmatprep.subr.mxu0 0.0
  %2610 = vmatpush1.msra.mxu0 0.0
  %2611 = vmatprep.subr.mxu0 0.0
  %2612 = vmatpush1.msra.mxu0 0.0
  %2613 = vmatprep.subr.mxu0 0.0
  %2614 = vmatpush1.msra.mxu0 0.0
  %2615 = vmatprep.subr.mxu0 0.0
  %2616 = vmatpush1.msra.mxu0 0.0
  %2617 = vmatprep.subr.mxu0 0.0
  %2618 = vmatpush1.msra.mxu0 0.0
  %2619 = vmatprep.subr.mxu0 0.0
  %2620 = vmatpush1.msra.mxu0 0.0
  %2621 = vmatprep.subr.mxu0 0.0
  %2622 = vmatpush1.msra.mxu0 0.0
  %2623 = vmatprep.subr.mxu0 0.0
  %2624 = vmatpush1.msra.mxu0 0.0
  %2625 = vmatprep.subr.mxu0 0.0
  %2626 = vmatpush1.msra.mxu0 0.0
  %2627 = vmatprep.subr.mxu0 0.0
  %2628 = vmatpush1.msra.mxu0 0.0
  %2629 = vmatprep.subr.mxu0 0.0
  %2630 = vmatpush1.msra.mxu0 0.0
  %2631 = vmatprep.subr.mxu0 0.0
  %2632 = vmatpush1.msra.mxu0 0.0
  %2633 = vmatprep.subr.mxu0 0.0
  %2634 = vmatpush1.msra.mxu0 0.0
  %2635 = vmatprep.subr.mxu0 0.0
  %2636 = vmatpush1.msra.mxu0 0.0
  %2637 = vmatprep.subr.mxu0 0.0
  %2638 = vmatpush1.msra.mxu0 %v2607
  %2639 = vmatprep.subr.mxu0 0.0
  %2640 = vmatpush1.msra.mxu0 %v2603
  %2641 = vmatprep.subr.mxu0 0.0
  %2642 = vmatpush2.msra.mxu0 0.0
  %2643 = vmatprep.subr.mxu0 0.0
  %2644 = vmatpush2.msra.mxu0 0.0
  %2645 = vmatprep.subr.mxu0 0.0
  %2646 = vmatpush2.msra.mxu0 0.0
  %2647 = vmatprep.subr.mxu0 0.0
  %2648 = vmatpush2.msra.mxu0 0.0
  %2649 = vmatprep.subr.mxu0 0.0
  %2650 = vmatpush2.msra.mxu0 0.0
  %2651 = vmatprep.subr.mxu0 0.0
  %2652 = vmatpush2.msra.mxu0 0.0
  %2653 = vmatprep.subr.mxu0 0.0
  %2654 = vmatpush2.msra.mxu0 0.0
  %2655 = vmatprep.subr.mxu0 0.0
  %2656 = vmatpush2.msra.mxu0 0.0
  %2657 = vmatprep.subr.mxu0 0.0
  %2658 = vmatpush2.msra.mxu0 0.0
  %2659 = vmatprep.subr.mxu0 0.0
  %2660 = vmatpush2.msra.mxu0 0.0
  %2661 = vmatprep.subr.mxu0 0.0
  %2662 = vmatpush2.msra.mxu0 0.0
  %2663 = vmatprep.subr.mxu0 0.0
  %2664 = vmatpush2.msra.mxu0 0.0
  %2665 = vmatprep.subr.mxu0 0.0
  %2666 = vmatpush2.msra.mxu0 0.0
  %2667 = vmatprep.subr.mxu0 0.0
  %2668 = vmatpush2.msra.mxu0 0.0
  %2669 = vmatprep.subr.mxu0 0.0
  %2670 = vmatpush2.msra.mxu0 0.0
  %2671 = vmatprep.subr.mxu0 0.0
  %2672 = vmatpush2.msra.mxu0 0.0
  %2673 = vmatprep.mubr.f32.mxu0 0.0
  %2674 = vmatmul.mubr.f32.gmra.mxu0 %v530
  %v2675 = vpop.f32.mrf.mxu0
  %v2676 = vadd.f32 %v527, %v2675
  %v2677 = vpop.f32.mrf.mxu0
  %2678 = vdwg.mxu0
  %v2679 = vxor.u32 %v2676, 2147483648
  %v2680 = vmul.f32 %v2679, 1.442695
  %v2681 = vpow.pop %v2680
  %v2682 = vadd.f32 %v2681, 1.0
  %v2683 = vrcp.pop %v2682
  %v2684 = vmul.f32 1.0, %v2683
  %2685 = vst.msk [vmem:[%s8 + $0x6] sm:$0x1] %vm612, %v2684
  %2686 = vrot.lane.b32.xlu0 %v200, 114
  %v2687 = vpop.permute.xlu0 %2686
  %2688 = vrot.lane.b32.xlu0 %v205, 114
  %v2689 = vpop.permute.xlu0 %2688
  %2690 = vrot.lane.b32.xlu0 %v210, 114
  %v2691 = vpop.permute.xlu0 %2690
  %2692 = vrot.lane.b32.xlu0 %v215, 114
  %v2693 = vpop.permute.xlu0 %2692
  %2694 = vrot.lane.b32.xlu0 %v220, 114
  %v2695 = vpop.permute.xlu0 %2694
  %2696 = vrot.lane.b32.xlu0 %v225, 114
  %v2697 = vpop.permute.xlu0 %2696
  %2698 = vrot.lane.b32.xlu0 %v230, 114
  %v2699 = vpop.permute.xlu0 %2698
  %2700 = vrot.lane.b32.xlu0 %v235, 114
  %v2701 = vpop.permute.xlu0 %2700
  %2710 = vmatprep.subr.mxu0 0.0
  %2711 = vmatpush1.msra.mxu0 0.0
  %2712 = vmatprep.subr.mxu0 0.0
  %2713 = vmatpush1.msra.mxu0 0.0
  %2714 = vmatprep.subr.mxu0 0.0
  %2715 = vmatpush1.msra.mxu0 0.0
  %2716 = vmatprep.subr.mxu0 0.0
  %2717 = vmatpush1.msra.mxu0 0.0
  %2718 = vmatprep.subr.mxu0 0.0
  %2719 = vmatpush1.msra.mxu0 0.0
  %2720 = vmatprep.subr.mxu0 0.0
  %2721 = vmatpush1.msra.mxu0 0.0
  %2722 = vmatprep.subr.mxu0 0.0
  %2723 = vmatpush1.msra.mxu0 0.0
  %2724 = vmatprep.subr.mxu0 0.0
  %2725 = vmatpush1.msra.mxu0 0.0
  %2726 = vmatprep.subr.mxu0 0.0
  %2727 = vmatpush1.msra.mxu0 0.0
  %2728 = vmatprep.subr.mxu0 0.0
  %2729 = vmatpush1.msra.mxu0 0.0
  %2730 = vmatprep.subr.mxu0 0.0
  %2731 = vmatpush1.msra.mxu0 0.0
  %2732 = vmatprep.subr.mxu0 0.0
  %2733 = vmatpush1.msra.mxu0 0.0
  %2734 = vmatprep.subr.mxu0 0.0
  %2735 = vmatpush1.msra.mxu0 0.0
  %2736 = vmatprep.subr.mxu0 0.0
  %2737 = vmatpush1.msra.mxu0 0.0
  %2738 = vmatprep.subr.mxu0 0.0
  %2739 = vmatpush1.msra.mxu0 %v2518
  %2740 = vmatprep.subr.mxu0 0.0
  %2741 = vmatpush1.msra.mxu0 %v2517
  %2742 = vmatprep.subr.mxu0 0.0
  %2743 = vmatpush2.msra.mxu0 0.0
  %2744 = vmatprep.subr.mxu0 0.0
  %2745 = vmatpush2.msra.mxu0 0.0
  %2746 = vmatprep.subr.mxu0 0.0
  %2747 = vmatpush2.msra.mxu0 0.0
  %2748 = vmatprep.subr.mxu0 0.0
  %2749 = vmatpush2.msra.mxu0 0.0
  %2750 = vmatprep.subr.mxu0 0.0
  %2751 = vmatpush2.msra.mxu0 0.0
  %2752 = vmatprep.subr.mxu0 0.0
  %2753 = vmatpush2.msra.mxu0 0.0
  %2754 = vmatprep.subr.mxu0 0.0
  %2755 = vmatpush2.msra.mxu0 0.0
  %2756 = vmatprep.subr.mxu0 0.0
  %2757 = vmatpush2.msra.mxu0 0.0
  %2758 = vmatprep.subr.mxu0 0.0
  %2759 = vmatpush2.msra.mxu0 0.0
  %2760 = vmatprep.subr.mxu0 0.0
  %2761 = vmatpush2.msra.mxu0 0.0
  %2762 = vmatprep.subr.mxu0 0.0
  %2763 = vmatpush2.msra.mxu0 0.0
  %2764 = vmatprep.subr.mxu0 0.0
  %2765 = vmatpush2.msra.mxu0 0.0
  %2766 = vmatprep.subr.mxu0 0.0
  %2767 = vmatpush2.msra.mxu0 0.0
  %2768 = vmatprep.subr.mxu0 0.0
  %2769 = vmatpush2.msra.mxu0 0.0
  %2770 = vmatprep.subr.mxu0 0.0
  %2771 = vmatpush2.msra.mxu0 0.0
  %2772 = vmatprep.subr.mxu0 0.0
  %2773 = vmatpush2.msra.mxu0 0.0
  %2774 = vmatprep.mubr.f32.mxu0 0.0
  %2775 = vmatmul.mubr.f32.gmra.mxu0 %v240
  %v2776 = vpop.f32.mrf.mxu0
  %v2777 = vadd.f32 %v2687, %v2776
  %v2778 = vpop.f32.mrf.mxu0
  %2779 = vmatprep.mubr.f32.mxu0 0.0
  %2780 = vmatmul.mubr.f32.gmra.mxu0 %v243
  %v2781 = vpop.f32.mrf.mxu0
  %v2782 = vadd.f32 %v2689, %v2781
  %v2783 = vpop.f32.mrf.mxu0
  %2784 = vmatprep.mubr.f32.mxu0 0.0
  %2785 = vmatmul.mubr.f32.gmra.mxu0 %v246
  %v2786 = vpop.f32.mrf.mxu0
  %v2787 = vadd.f32 %v2691, %v2786
  %v2788 = vpop.f32.mrf.mxu0
  %2789 = vmatprep.mubr.f32.mxu0 0.0
  %2790 = vmatmul.mubr.f32.gmra.mxu0 %v249
  %v2791 = vpop.f32.mrf.mxu0
  %v2792 = vadd.f32 %v2693, %v2791
  %v2793 = vpop.f32.mrf.mxu0
  %2794 = vmatprep.mubr.f32.mxu0 0.0
  %2795 = vmatmul.mubr.f32.gmra.mxu0 %v252
  %v2796 = vpop.f32.mrf.mxu0
  %v2797 = vadd.f32 %v2695, %v2796
  %v2798 = vpop.f32.mrf.mxu0
  %2799 = vmatprep.mubr.f32.mxu0 0.0
  %2800 = vmatmul.mubr.f32.gmra.mxu0 %v255
  %v2801 = vpop.f32.mrf.mxu0
  %v2802 = vadd.f32 %v2697, %v2801
  %v2803 = vpop.f32.mrf.mxu0
  %2804 = vmatprep.mubr.f32.mxu0 0.0
  %2805 = vmatmul.mubr.f32.gmra.mxu0 %v258
  %v2806 = vpop.f32.mrf.mxu0
  %v2807 = vadd.f32 %v2699, %v2806
  %v2808 = vpop.f32.mrf.mxu0
  %2809 = vmatprep.mubr.f32.mxu0 0.0
  %2810 = vmatmul.mubr.f32.gmra.mxu0 %v261
  %v2811 = vpop.f32.mrf.mxu0
  %v2812 = vadd.f32 %v2701, %v2811
  %v2813 = vpop.f32.mrf.mxu0
  %2814 = vdwg.mxu0
  %v2815 = vxor.u32 %v2777, 2147483648
  %v2816 = vxor.u32 %v2782, 2147483648
  %v2817 = vmul.f32 %v2815, 1.442695
  %v2818 = vpow.pop %v2817
  %v2819 = vmul.f32 %v2816, 1.442695
  %v2820 = vpow.pop %v2819
  %v2821 = vadd.f32 %v2818, 1.0
  %v2822 = vadd.f32 %v2820, 1.0
  %v2823 = vrcp.pop %v2821
  %v2824 = vmul.f32 1.0, %v2823
  %v2825 = vrcp.pop %v2822
  %v2826 = vmul.f32 1.0, %v2825
  %v2827 = vxor.u32 %v2787, 2147483648
  %v2828 = vxor.u32 %v2792, 2147483648
  %v2829 = vmul.f32 %v2827, 1.442695
  %v2830 = vpow.pop %v2829
  %v2831 = vmul.f32 %v2828, 1.442695
  %v2832 = vpow.pop %v2831
  %v2833 = vadd.f32 %v2830, 1.0
  %v2834 = vadd.f32 %v2832, 1.0
  %v2835 = vrcp.pop %v2833
  %v2836 = vmul.f32 1.0, %v2835
  %v2837 = vrcp.pop %v2834
  %v2838 = vmul.f32 1.0, %v2837
  %v2839 = vtanh.pop %v2797
  %v2840 = vtanh.pop %v2802
  %v2841 = vxor.u32 %v2807, 2147483648
  %v2842 = vxor.u32 %v2812, 2147483648
  %v2843 = vmul.f32 %v2841, 1.442695
  %v2844 = vpow.pop %v2843
  %v2845 = vmul.f32 %v2842, 1.442695
  %v2846 = vpow.pop %v2845
  %v2847 = vadd.f32 %v2844, 1.0
  %v2848 = vadd.f32 %v2846, 1.0
  %v2849 = vrcp.pop %v2847
  %v2850 = vmul.f32 1.0, %v2849
  %v2851 = vrcp.pop %v2848
  %v2852 = vmul.f32 1.0, %v2851
  %v2853 = vmul.f32 %v2836, %v2513
  %v2854 = vmul.f32 %v2838, %v2514
  %v2855 = vmul.f32 %v2824, %v2839
  %v2856 = vmul.f32 %v2826, %v2840
  %v2857 = vadd.f32 %v2853, %v2855
  %v2858 = vadd.f32 %v2854, %v2856
  %v2859 = vtanh.pop %v2857
  %v2860 = vtanh.pop %v2858
  %v2861 = vmul.f32 %v2850, %v2859
  %v2862 = vmul.f32 %v2852, %v2860
  %2863 = vmatprep.subr.mxu0 0.0
  %2864 = vmatpush1.msra.mxu0 0.0
  %2865 = vmatprep.subr.mxu0 0.0
  %2866 = vmatpush1.msra.mxu0 0.0
  %2867 = vmatprep.subr.mxu0 0.0
  %2868 = vmatpush1.msra.mxu0 0.0
  %2869 = vmatprep.subr.mxu0 0.0
  %2870 = vmatpush1.msra.mxu0 0.0
  %2871 = vmatprep.subr.mxu0 0.0
  %2872 = vmatpush1.msra.mxu0 0.0
  %2873 = vmatprep.subr.mxu0 0.0
  %2874 = vmatpush1.msra.mxu0 0.0
  %2875 = vmatprep.subr.mxu0 0.0
  %2876 = vmatpush1.msra.mxu0 0.0
  %2877 = vmatprep.subr.mxu0 0.0
  %2878 = vmatpush1.msra.mxu0 0.0
  %2879 = vmatprep.subr.mxu0 0.0
  %2880 = vmatpush1.msra.mxu0 0.0
  %2881 = vmatprep.subr.mxu0 0.0
  %2882 = vmatpush1.msra.mxu0 0.0
  %2883 = vmatprep.subr.mxu0 0.0
  %2884 = vmatpush1.msra.mxu0 0.0
  %2885 = vmatprep.subr.mxu0 0.0
  %2886 = vmatpush1.msra.mxu0 0.0
  %2887 = vmatprep.subr.mxu0 0.0
  %2888 = vmatpush1.msra.mxu0 0.0
  %2889 = vmatprep.subr.mxu0 0.0
  %2890 = vmatpush1.msra.mxu0 0.0
  %2891 = vmatprep.subr.mxu0 0.0
  %2892 = vmatpush1.msra.mxu0 %v2862
  %2893 = vmatprep.subr.mxu0 0.0
  %2894 = vmatpush1.msra.mxu0 %v2861
  %2895 = vmatprep.subr.mxu0 0.0
  %2896 = vmatpush2.msra.mxu0 0.0
  %2897 = vmatprep.subr.mxu0 0.0
  %2898 = vmatpush2.msra.mxu0 0.0
  %2899 = vmatprep.subr.mxu0 0.0
  %2900 = vmatpush2.msra.mxu0 0.0
  %2901 = vmatprep.subr.mxu0 0.0
  %2902 = vmatpush2.msra.mxu0 0.0
  %2903 = vmatprep.subr.mxu0 0.0
  %2904 = vmatpush2.msra.mxu0 0.0
  %2905 = vmatprep.subr.mxu0 0.0
  %2906 = vmatpush2.msra.mxu0 0.0
  %2907 = vmatprep.subr.mxu0 0.0
  %2908 = vmatpush2.msra.mxu0 0.0
  %2909 = vmatprep.subr.mxu0 0.0
  %2910 = vmatpush2.msra.mxu0 0.0
  %2911 = vmatprep.subr.mxu0 0.0
  %2912 = vmatpush2.msra.mxu0 0.0
  %2913 = vmatprep.subr.mxu0 0.0
  %2914 = vmatpush2.msra.mxu0 0.0
  %2915 = vmatprep.subr.mxu0 0.0
  %2916 = vmatpush2.msra.mxu0 0.0
  %2917 = vmatprep.subr.mxu0 0.0
  %2918 = vmatpush2.msra.mxu0 0.0
  %2919 = vmatprep.subr.mxu0 0.0
  %2920 = vmatpush2.msra.mxu0 0.0
  %2921 = vmatprep.subr.mxu0 0.0
  %2922 = vmatpush2.msra.mxu0 0.0
  %2923 = vmatprep.subr.mxu0 0.0
  %2924 = vmatpush2.msra.mxu0 0.0
  %2925 = vmatprep.subr.mxu0 0.0
  %2926 = vmatpush2.msra.mxu0 0.0
  %2927 = vmatprep.mubr.f32.mxu0 0.0
  %2928 = vmatmul.mubr.f32.gmra.mxu0 %v427
  %v2929 = vpop.f32.mrf.mxu0
  %v2930 = vadd.f32 %v419, %v2929
  %v2931 = vpop.f32.mrf.mxu0
  %2932 = vmatprep.mubr.f32.mxu0 0.0
  %2933 = vmatmul.mubr.f32.gmra.mxu0 %v430
  %v2934 = vpop.f32.mrf.mxu0
  %v2935 = vadd.f32 %v424, %v2934
  %v2936 = vpop.f32.mrf.mxu0
  %2937 = vdwg.mxu0
  %v2938 = vxor.u32 %v2930, 2147483648
  %v2939 = vxor.u32 %v2935, 2147483648
  %v2940 = vmul.f32 %v2938, 1.442695
  %v2941 = vpow.pop %v2940
  %v2942 = vmul.f32 %v2939, 1.442695
  %v2943 = vpow.pop %v2942
  %v2944 = vadd.f32 %v2941, 1.0
  %v2945 = vadd.f32 %v2943, 1.0
  %v2946 = vrcp.pop %v2944
  %v2947 = vmul.f32 1.0, %v2946
  %v2948 = vrcp.pop %v2945
  %v2949 = vmul.f32 1.0, %v2948
  %v2951 = vsel %vm532, %v2949, 0
  %2953 = vmatprep.subr.mxu0 0.0
  %2954 = vmatpush1.msra.mxu0 0.0
  %2955 = vmatprep.subr.mxu0 0.0
  %2956 = vmatpush1.msra.mxu0 0.0
  %2957 = vmatprep.subr.mxu0 0.0
  %2958 = vmatpush1.msra.mxu0 0.0
  %2959 = vmatprep.subr.mxu0 0.0
  %2960 = vmatpush1.msra.mxu0 0.0
  %2961 = vmatprep.subr.mxu0 0.0
  %2962 = vmatpush1.msra.mxu0 0.0
  %2963 = vmatprep.subr.mxu0 0.0
  %2964 = vmatpush1.msra.mxu0 0.0
  %2965 = vmatprep.subr.mxu0 0.0
  %2966 = vmatpush1.msra.mxu0 0.0
  %2967 = vmatprep.subr.mxu0 0.0
  %2968 = vmatpush1.msra.mxu0 0.0
  %2969 = vmatprep.subr.mxu0 0.0
  %2970 = vmatpush1.msra.mxu0 0.0
  %2971 = vmatprep.subr.mxu0 0.0
  %2972 = vmatpush1.msra.mxu0 0.0
  %2973 = vmatprep.subr.mxu0 0.0
  %2974 = vmatpush1.msra.mxu0 0.0
  %2975 = vmatprep.subr.mxu0 0.0
  %2976 = vmatpush1.msra.mxu0 0.0
  %2977 = vmatprep.subr.mxu0 0.0
  %2978 = vmatpush1.msra.mxu0 0.0
  %2979 = vmatprep.subr.mxu0 0.0
  %2980 = vmatpush1.msra.mxu0 0.0
  %2981 = vmatprep.subr.mxu0 0.0
  %2982 = vmatpush1.msra.mxu0 %v2951
  %2983 = vmatprep.subr.mxu0 0.0
  %2984 = vmatpush1.msra.mxu0 %v2947
  %2985 = vmatprep.subr.mxu0 0.0
  %2986 = vmatpush2.msra.mxu0 0.0
  %2987 = vmatprep.subr.mxu0 0.0
  %2988 = vmatpush2.msra.mxu0 0.0
  %2989 = vmatprep.subr.mxu0 0.0
  %2990 = vmatpush2.msra.mxu0 0.0
  %2991 = vmatprep.subr.mxu0 0.0
  %2992 = vmatpush2.msra.mxu0 0.0
  %2993 = vmatprep.subr.mxu0 0.0
  %2994 = vmatpush2.msra.mxu0 0.0
  %2995 = vmatprep.subr.mxu0 0.0
  %2996 = vmatpush2.msra.mxu0 0.0
  %2997 = vmatprep.subr.mxu0 0.0
  %2998 = vmatpush2.msra.mxu0 0.0
  %2999 = vmatprep.subr.mxu0 0.0
  %3000 = vmatpush2.msra.mxu0 0.0
  %3001 = vmatprep.subr.mxu0 0.0
  %3002 = vmatpush2.msra.mxu0 0.0
  %3003 = vmatprep.subr.mxu0 0.0
  %3004 = vmatpush2.msra.mxu0 0.0
  %3005 = vmatprep.subr.mxu0 0.0
  %3006 = vmatpush2.msra.mxu0 0.0
  %3007 = vmatprep.subr.mxu0 0.0
  %3008 = vmatpush2.msra.mxu0 0.0
  %3009 = vmatprep.subr.mxu0 0.0
  %3010 = vmatpush2.msra.mxu0 0.0
  %3011 = vmatprep.subr.mxu0 0.0
  %3012 = vmatpush2.msra.mxu0 0.0
  %3013 = vmatprep.subr.mxu0 0.0
  %3014 = vmatpush2.msra.mxu0 0.0
  %3015 = vmatprep.subr.mxu0 0.0
  %3016 = vmatpush2.msra.mxu0 0.0
  %3017 = vmatprep.mubr.f32.mxu0 0.0
  %3018 = vmatmul.mubr.f32.gmra.mxu0 %v530
  %v3019 = vpop.f32.mrf.mxu0
  %v3020 = vadd.f32 %v527, %v3019
  %v3021 = vpop.f32.mrf.mxu0
  %3022 = vdwg.mxu0
  %v3023 = vxor.u32 %v3020, 2147483648
  %v3024 = vmul.f32 %v3023, 1.442695
  %v3025 = vpow.pop %v3024
  %v3026 = vadd.f32 %v3025, 1.0
  %v3027 = vrcp.pop %v3026
  %v3028 = vmul.f32 1.0, %v3027
  %3029 = vst.msk [vmem:[%s8 + $0x7] sm:$0x1] %vm612, %v3028
  // Predicated region
  $region34: #{tpu_custom_call.1} parent=0 // pred_check
    _
  $region35: #{tpu_custom_call.1} parent=0 // pred_check_branch
    %3031 = sbr.rel (0) target = $region37
  $region36: #{tpu_custom_call.1} parent=0 // pred_region
    _
  $region37: #{tpu_custom_call.1} parent=0 // pred_fallthru
    _
  // Predicated region
  $region38: #{tpu_custom_call.1} parent=0 // pred_check
    _
  $region39: #{tpu_custom_call.1} parent=0 // pred_check_branch
    %3033 = sbr.rel (0) target = $region41
  $region40: #{tpu_custom_call.1} parent=0 // pred_region
    _
  $region41: #{tpu_custom_call.1} parent=0 // pred_fallthru
    _

</llo_original>
